<compile_context>
chip_gen: v7x
topology: tpu7x:2x2x1
jax: 0.10.0
libtpu: 0.0.40
codegen_flags: <defaults>
</compile_context>

<pallas_src>
import functools

import jax
import jax.numpy as jnp
from jax.experimental import pallas as pl
from jax.experimental.pallas import tpu as pltpu


# ----------------------------------------------------------------------------
# Pallas kernels: fused (patches @ W) + bias, then activation
# BN scale is folded into W at init time, so the epilogue is bias + act only.
# ----------------------------------------------------------------------------
def _epilogue(acc, bias, act):
    y = acc + bias
    if act == "silu":
        y = y * jax.nn.sigmoid(y)          # logistic -> EUP, keeps VALU free
    elif act == "relu":
        y = jnp.maximum(y, 0.0)
    return y


def _mm_bias_act_kernel(a_ref, w_ref, b_ref, o_ref, *, act):
    """Single K block: one MXU dot + epilogue."""
    acc = jnp.dot(a_ref[...], w_ref[...], preferred_element_type=jnp.float32)
    o_ref[...] = _epilogue(acc, b_ref[...], act).astype(o_ref.dtype)


def _mm_bias_act_ktiled_kernel(a_ref, w_ref, b_ref, o_ref, acc_ref, *, act):
    """K-tiled: f32 VMEM accumulator, init at k==0, epilogue at k==last."""
    @pl.when(pl.program_id(1) == 0)
    def _():
        acc_ref[...] = jnp.zeros_like(acc_ref)

    acc_ref[...] += jnp.dot(a_ref[...], w_ref[...],
                            preferred_element_type=jnp.float32)

    @pl.when(pl.program_id(1) == pl.num_programs(1) - 1)
    def _():
        o_ref[...] = _epilogue(acc_ref[...], b_ref[...], act).astype(o_ref.dtype)


def _mm2_bias_act_kernel(a1_ref, a2_ref, w1_ref, w2_ref, b_ref, o_ref, *, act):
    """conv3 on [x1, x2] without materializing the concat: two dots, one acc."""
    acc = jnp.dot(a1_ref[...], w1_ref[...], preferred_element_type=jnp.float32)
    acc = acc + jnp.dot(a2_ref[...], w2_ref[...],
                        preferred_element_type=jnp.float32)
    o_ref[...] = _epilogue(acc, b_ref[...], act).astype(o_ref.dtype)


# ----------------------------------------------------------------------------
# Pallas wrappers
# ----------------------------------------------------------------------------
_VMEM_LIMIT = 64 * 1024 * 1024
_KMAX_SINGLE = 2048      # use a single K block up to this reduction size
_TK = 512                # K tile when K-tiling (multiple of 128)


def _round_up(a, b):
    return (a + b - 1) // b * b


def _choose_tm(M):
    """Pick a tile M that divides M (no pad/slice round-trip); None -> pad."""
    for tm in (512, 256, 128, 64, 32, 16, 8):
        if M % tm == 0:
            return tm
    return None


def matmul_bias_act(a, w, bias, act="silu"):
    """a: (M, K) bf16 patches, w: (K, N) bf16 (BN-scaled), bias: (1, N) f32."""
    M, K = a.shape
    Kw, N = w.shape
    assert K == Kw

    # --- M tiling (avoid pad + slice round-trip when possible) ---
    TM = _choose_tm(M)
    if TM is None:
        TM = 256
        Mp = _round_up(M, TM)
        a = jnp.pad(a, ((0, Mp - M), (0, 0)))
    else:
        Mp = M

    # --- K tiling (bounds VMEM for large reductions, e.g. 3x3 at real widths)
    if K <= _KMAX_SINGLE:
        TK, Kp = K, K
    else:
        TK = _TK
        Kp = _round_up(K, TK)
        if Kp != K:
            a = jnp.pad(a, ((0, 0), (0, Kp - K)))
            w = jnp.pad(w, ((0, Kp - K), (0, 0)))
    nk = Kp // TK

    cost = pl.CostEstimate(
        flops=2 * Mp * Kp * N,
        transcendentals=Mp * N if act == "silu" else 0,
        bytes_accessed=Mp * Kp * 2 + Kp * N * 2 + Mp * N * 4)

    if nk == 1:
        out = pl.pallas_call(
            functools.partial(_mm_bias_act_kernel, act=act),
            out_shape=jax.ShapeDtypeStruct((Mp, N), jnp.float32),
            grid=(Mp // TM,),
            in_specs=[
                pl.BlockSpec((TM, K), lambda i: (i, 0)),
                pl.BlockSpec((K, N), lambda i: (0, 0)),
                pl.BlockSpec((1, N), lambda i: (0, 0)),
            ],
            out_specs=pl.BlockSpec((TM, N), lambda i: (i, 0)),
            compiler_params=pltpu.CompilerParams(
                dimension_semantics=("parallel",),
                vmem_limit_bytes=_VMEM_LIMIT),
            cost_estimate=cost,
        )(a, w, bias)
    else:
        out = pl.pallas_call(
            functools.partial(_mm_bias_act_ktiled_kernel, act=act),
            out_shape=jax.ShapeDtypeStruct((Mp, N), jnp.float32),
            grid=(Mp // TM, nk),
            in_specs=[
                pl.BlockSpec((TM, TK), lambda i, k: (i, k)),
                pl.BlockSpec((TK, N), lambda i, k: (k, 0)),
                pl.BlockSpec((1, N), lambda i, k: (0, 0)),
            ],
            out_specs=pl.BlockSpec((TM, N), lambda i, k: (i, 0)),
            scratch_shapes=[pltpu.VMEM((TM, N), jnp.float32)],
            compiler_params=pltpu.CompilerParams(
                dimension_semantics=("parallel", "arbitrary"),
                vmem_limit_bytes=_VMEM_LIMIT),
            cost_estimate=cost,
        )(a, w, bias)

    if Mp != M:
        out = out[:M]
    return out


def matmul2_bias_act(a1, a2, w1, w2, bias, act="silu"):
    """out = act(a1 @ w1 + a2 @ w2 + bias) — conv3 without the channel concat."""
    M, K1 = a1.shape
    _, K2 = a2.shape
    N = w1.shape[1]
    TM = _choose_tm(M)
    if TM is None:
        TM = 256
        Mp = _round_up(M, TM)
        a1 = jnp.pad(a1, ((0, Mp - M), (0, 0)))
        a2 = jnp.pad(a2, ((0, Mp - M), (0, 0)))
    else:
        Mp = M

    cost = pl.CostEstimate(
        flops=2 * Mp * (K1 + K2) * N,
        transcendentals=Mp * N if act == "silu" else 0,
        bytes_accessed=Mp * (K1 + K2) * 2 + (K1 + K2) * N * 2 + Mp * N * 4)

    out = pl.pallas_call(
        functools.partial(_mm2_bias_act_kernel, act=act),
        out_shape=jax.ShapeDtypeStruct((Mp, N), jnp.float32),
        grid=(Mp // TM,),
        in_specs=[
            pl.BlockSpec((TM, K1), lambda i: (i, 0)),
            pl.BlockSpec((TM, K2), lambda i: (i, 0)),
            pl.BlockSpec((K1, N), lambda i: (0, 0)),
            pl.BlockSpec((K2, N), lambda i: (0, 0)),
            pl.BlockSpec((1, N), lambda i: (0, 0)),
        ],
        out_specs=pl.BlockSpec((TM, N), lambda i: (i, 0)),
        compiler_params=pltpu.CompilerParams(
            dimension_semantics=("parallel",),
            vmem_limit_bytes=_VMEM_LIMIT),
        cost_estimate=cost,
    )(a1, a2, w1, w2, bias)

    if Mp != M:
        out = out[:M]
    return out


# ----------------------------------------------------------------------------
# Conv / block building blocks (im2col glue in plain JAX, matmul in Pallas)
# ----------------------------------------------------------------------------
# TODO(synk): move 3x3 patch extraction (halo) into the kernel via spatial
# BlockSpec tiling so the 9x-expanded patch matrix never round-trips HBM.
def _im2col(x, k, stride, pad):
    """x: (N,H,W,C) -> patches (N*Ho*Wo, k*k*C), patch order (kh, kw, C)."""
    N, H, W, C = x.shape
    if pad:
        x = jnp.pad(x, ((0, 0), (pad, pad), (pad, pad), (0, 0)))
    Ho = (H + 2 * pad - k) // stride + 1
    Wo = (W + 2 * pad - k) // stride + 1
    cols = []
    for i in range(k):
        for j in range(k):
            cols.append(
                x[:, i:i + stride * (Ho - 1) + 1:stride,
                     j:j + stride * (Wo - 1) + 1:stride, :])
    p = jnp.concatenate(cols, axis=-1)
    return p.reshape(N * Ho * Wo, k * k * C), (N, Ho, Wo)


def base_conv_fwd(x, p, stride=1, act="silu"):
    """BaseConv: Conv2d(bias=False) + BatchNorm2d(eval, folded) + SiLU."""
    k = p["ksize"]
    if k == 1 and stride == 1:
        N, H, W, C = x.shape
        a = x.reshape(N * H * W, C).astype(jnp.bfloat16)
        y = matmul_bias_act(a, p["w_mat"], p["bias"], act)
        return y.reshape(N, H, W, -1)
    pad = (k - 1) // 2
    patches, (N, Ho, Wo) = _im2col(x.astype(jnp.bfloat16), k, stride, pad)
    y = matmul_bias_act(patches, p["w_mat"], p["bias"], act)
    return y.reshape(N, Ho, Wo, -1)


def se_fwd(x, p):
    """Squeeze-Excite. Handles the degenerate c1 // 16 == 0 case like PyTorch."""
    y = jnp.mean(x, axis=(1, 2))                          # (N, C)
    if p["w1"] is None:
        s = jnp.full_like(y, 0.5)                         # sigmoid(0) = 0.5
    else:
        h = jnp.maximum(y @ p["w1"].T, 0.0)
        s = jax.nn.sigmoid(h @ p["w2"].T)
    return x * s[:, None, None, :]


def bottleneck_fwd(x, p, use_add):
    y = base_conv_fwd(x, p["conv1"], stride=1)            # 1x1
    y = se_fwd(y, p["se"])
    y = base_conv_fwd(y, p["conv2"], stride=1)            # 3x3
    if use_add:
        y = y + x
    return y


def csp_layer_fwd(params, x_nchw):
    x = jnp.transpose(x_nchw, (0, 2, 3, 1))               # NCHW -> NHWC
    h = params["hidden"]
    # conv1 + conv2 fused along N (both 1x1 convs of the same input)
    y12 = base_conv_fwd(x, params["conv12"], stride=1)    # (B,H,W,2h)
    x1 = y12[..., :h]
    x2 = y12[..., h:]
    for bp in params["m"]:
        x1 = bottleneck_fwd(x1, bp, use_add=params["shortcut"])
    # conv3 on cat([x1, x2]) without materializing the concat
    B, H, W, _ = x1.shape
    a1 = x1.reshape(B * H * W, h).astype(jnp.bfloat16)
    a2 = x2.reshape(B * H * W, h).astype(jnp.bfloat16)
    y = matmul2_bias_act(a1, a2, params["conv3"]["w_a"], params["conv3"]["w_b"],
                         params["conv3"]["bias"], act="silu")
    y = y.reshape(B, H, W, -1)
    return jnp.transpose(y, (0, 3, 1, 2))                 # back to NCHW


# ----------------------------------------------------------------------------
# Deterministic parameter init (mirrors PyTorch module shapes, BN in eval mode)
# ----------------------------------------------------------------------------
class KeyGen:
    def __init__(self, seed):
        self.key = jax.random.PRNGKey(seed)

    def __call__(self):
        self.key, k = jax.random.split(self.key)
        return k


def init_base_conv(kg, cin, cout, ksize):
    fan_in = cin * ksize * ksize
    w = jax.random.normal(kg(), (cout, cin, ksize, ksize), jnp.float32)
    w = w * (2.0 / fan_in) ** 0.5
    gamma = 1.0 + 0.1 * jax.random.normal(kg(), (cout,), jnp.float32)
    beta = 0.05 * jax.random.normal(kg(), (cout,), jnp.float32)
    r_mean = 0.05 * jax.random.normal(kg(), (cout,), jnp.float32)
    r_var = jnp.ones((cout,), jnp.float32)
    eps = 1e-3
    scale = gamma / jnp.sqrt(r_var + eps)
    bias = beta - r_mean * scale
    # (Cout,Cin,kh,kw) -> (kh,kw,Cin,Cout) -> (kh*kw*Cin, Cout), matches im2col
    w_mat = jnp.transpose(w, (2, 3, 1, 0)).reshape(ksize * ksize * cin, cout)
    w_mat = (w_mat * scale[None, :]).astype(jnp.bfloat16)   # fold BN scale
    return {"w_mat": w_mat,
            "bias": bias.reshape(1, cout).astype(jnp.float32),
            "ksize": ksize}


def init_se(kg, c1, r=16):
    mid = c1 // r
    if mid == 0:
        return {"w1": None, "w2": None}
    w1 = jax.random.normal(kg(), (mid, c1), jnp.float32) * (1.0 / c1) ** 0.5
    w2 = jax.random.normal(kg(), (c1, mid), jnp.float32) * (1.0 / mid) ** 0.5
    return {"w1": w1, "w2": w2}


def init_bottleneck(kg, cin, cout, expansion=1.0):
    hidden = int(cout * expansion)
    return {"conv1": init_base_conv(kg, cin, hidden, 1),
            "se": init_se(kg, hidden),
            "conv2": init_base_conv(kg, hidden, cout, 3)}


def init_csp_layer(kg, cin, cout, n=1, shortcut=True, expansion=0.5):
    hidden = int(cout * expansion)
    c1 = init_base_conv(kg, cin, hidden, 1)
    c2 = init_base_conv(kg, cin, hidden, 1)
    # fuse conv1/conv2 weights along N -> one lane-dense 1x1 matmul
    conv12 = {"w_mat": jnp.concatenate([c1["w_mat"], c2["w_mat"]], axis=1),
              "bias": jnp.concatenate([c1["bias"], c2["bias"]], axis=1),
              "ksize": 1}
    c3 = init_base_conv(kg, 2 * hidden, cout, 1)
    conv3 = {"w_a": c3["w_mat"][:hidden],     # rows matching x1 channels
             "w_b": c3["w_mat"][hidden:],     # rows matching x2 channels
             "bias": c3["bias"]}
    m = [init_bottleneck(kg, hidden, hidden, 1.0) for _ in range(n)]
    return {"hidden": hidden, "shortcut": shortcut,
            "conv12": conv12, "conv3": conv3, "m": m}


# ----------------------------------------------------------------------------
if __name__ == "__main__":
    # CSPLayer(64, 64, n=2, shortcut=True) on a small input.
    in_channels, out_channels, n_blocks = 64, 64, 2
    B, H, W = 2, 16, 16

    params = init_csp_layer(KeyGen(42), in_channels, out_channels,
                            n=n_blocks, shortcut=True)
    x = jax.random.normal(jax.random.PRNGKey(0),
                          (B, in_channels, H, W), jnp.float32)   # NCHW

    fwd = jax.jit(functools.partial(csp_layer_fwd, params))
    out = jax.block_until_ready(fwd(x))

    assert out.shape == (B, out_channels, H, W), out.shape
    assert bool(jnp.all(jnp.isfinite(out)))
    print("KERNEL_OK")
</pallas_src>

<mosaic_0001>
module attributes {stable_mosaic.version = 11 : i64} {
  func.func @_mm_bias_act_kernel(%arg0: i32, %arg1: memref<512x64xbf16, #tpu.memory_space<vmem>>, %arg2: memref<64x64xbf16, #tpu.memory_space<vmem>>, %arg3: memref<1x64xf32, #tpu.memory_space<vmem>>, %arg4: memref<512x64xf32, #tpu.memory_space<vmem>>) attributes {dimension_semantics = [#tpu.dimension_semantics<parallel>], iteration_bounds = array<i64: 1>, scalar_prefetch = 0 : i64, scratch_operands = 0 : i64, tpu.core_type = #tpu.core_type<tc>, window_params = [{transform_indices = @transform_0, window_bounds = array<i64: 512, 64>}, {pipeline_mode = #tpu.pipeline_mode<synchronous>, transform_indices = @transform_1, window_bounds = array<i64: 64, 64>}, {pipeline_mode = #tpu.pipeline_mode<synchronous>, transform_indices = @transform_2, window_bounds = array<i64: 1, 64>}, {transform_indices = @transform_3, window_bounds = array<i64: 512, 64>}]} {
    %c0 = arith.constant 0 : index
    %c0_0 = arith.constant 0 : index
    %0 = vector.load %arg1[%c0, %c0_0] : memref<512x64xbf16, #tpu.memory_space<vmem>>, vector<512x64xbf16>
    %c0_1 = arith.constant 0 : index
    %c0_2 = arith.constant 0 : index
    %1 = vector.load %arg2[%c0_1, %c0_2] : memref<64x64xbf16, #tpu.memory_space<vmem>>, vector<64x64xbf16>
    %cst = arith.constant dense<0.000000e+00> : vector<512x64xf32>
    %2 = tpu.matmul %0, %1, %cst {dimension_numbers = #tpu.dot_dimension_numbers<[1], [0], [0], [1], [0, 0, 1, 1], [], []>} : vector<512x64xbf16>, vector<64x64xbf16>, vector<512x64xf32> -> vector<512x64xf32>
    %c0_3 = arith.constant 0 : index
    %c0_4 = arith.constant 0 : index
    %3 = vector.load %arg3[%c0_3, %c0_4] : memref<1x64xf32, #tpu.memory_space<vmem>>, vector<1x64xf32>
    %4 = vector.broadcast %3 : vector<1x64xf32> to vector<512x64xf32>
    %5 = arith.addf %2, %4 : vector<512x64xf32>
    %6 = arith.negf %5 : vector<512x64xf32>
    %7 = math.exp %6 : vector<512x64xf32>
    %cst_5 = arith.constant 1.000000e+00 : f32
    %8 = vector.broadcast %cst_5 : f32 to vector<512x64xf32>
    %9 = arith.addf %8, %7 : vector<512x64xf32>
    %10 = arith.divf %8, %9 : vector<512x64xf32>
    %11 = arith.mulf %5, %10 : vector<512x64xf32>
    %c0_6 = arith.constant 0 : index
    %c0_7 = arith.constant 0 : index
    %12 = vector.load %arg4[%c0_6, %c0_7] : memref<512x64xf32, #tpu.memory_space<vmem>>, vector<512x64xf32>
    tpu.vector_store %arg4[%c0_6, %c0_7], %11 {strides = array<i32>} : memref<512x64xf32, #tpu.memory_space<vmem>>, vector<512x64xf32>,
    return
  }
  func.func @transform_0(%arg0: i32) -> (i32, i32) {
    %c0_i32 = arith.constant 0 : i32
    %c0_i32_0 = arith.constant 0 : i32
    return %arg0, %c0_i32 : i32, i32
  }
  func.func @transform_1(%arg0: i32) -> (i32, i32) {
    %c0_i32 = arith.constant 0 : i32
    %c0_i32_0 = arith.constant 0 : i32
    %c0_i32_1 = arith.constant 0 : i32
    return %c0_i32, %c0_i32_0 : i32, i32
  }
  func.func @transform_2(%arg0: i32) -> (i32, i32) {
    %c0_i32 = arith.constant 0 : i32
    %c0_i32_0 = arith.constant 0 : i32
    %c0_i32_1 = arith.constant 0 : i32
    return %c0_i32, %c0_i32_0 : i32, i32
  }
  func.func @transform_3(%arg0: i32) -> (i32, i32) {
    %c0_i32 = arith.constant 0 : i32
    %c0_i32_0 = arith.constant 0 : i32
    return %arg0, %c0_i32 : i32, i32
  }
}

module attributes {stable_mosaic.version = 11 : i64} {
  func.func @_mm_bias_act_kernel(%arg0: i32, %arg1: memref<512x32xbf16, #tpu.memory_space<vmem>>, %arg2: memref<32x32xbf16, #tpu.memory_space<vmem>>, %arg3: memref<1x32xf32, #tpu.memory_space<vmem>>, %arg4: memref<512x32xf32, #tpu.memory_space<vmem>>) attributes {dimension_semantics = [#tpu.dimension_semantics<parallel>], iteration_bounds = array<i64: 1>, scalar_prefetch = 0 : i64, scratch_operands = 0 : i64, tpu.core_type = #tpu.core_type<tc>, window_params = [{transform_indices = @transform_0, window_bounds = array<i64: 512, 32>}, {pipeline_mode = #tpu.pipeline_mode<synchronous>, transform_indices = @transform_1, window_bounds = array<i64: 32, 32>}, {pipeline_mode = #tpu.pipeline_mode<synchronous>, transform_indices = @transform_2, window_bounds = array<i64: 1, 32>}, {transform_indices = @transform_3, window_bounds = array<i64: 512, 32>}]} {
    %c0 = arith.constant 0 : index
    %c0_0 = arith.constant 0 : index
    %0 = vector.load %arg1[%c0, %c0_0] : memref<512x32xbf16, #tpu.memory_space<vmem>>, vector<512x32xbf16>
    %c0_1 = arith.constant 0 : index
    %c0_2 = arith.constant 0 : index
    %1 = vector.load %arg2[%c0_1, %c0_2] : memref<32x32xbf16, #tpu.memory_space<vmem>>, vector<32x32xbf16>
    %cst = arith.constant dense<0.000000e+00> : vector<512x32xf32>
    %2 = tpu.matmul %0, %1, %cst {dimension_numbers = #tpu.dot_dimension_numbers<[1], [0], [0], [1], [0, 0, 1, 1], [], []>} : vector<512x32xbf16>, vector<32x32xbf16>, vector<512x32xf32> -> vector<512x32xf32>
    %c0_3 = arith.constant 0 : index
    %c0_4 = arith.constant 0 : index
    %3 = vector.load %arg3[%c0_3, %c0_4] : memref<1x32xf32, #tpu.memory_space<vmem>>, vector<1x32xf32>
    %4 = vector.broadcast %3 : vector<1x32xf32> to vector<512x32xf32>
    %5 = arith.addf %2, %4 : vector<512x32xf32>
    %6 = arith.negf %5 : vector<512x32xf32>
    %7 = math.exp %6 : vector<512x32xf32>
    %cst_5 = arith.constant 1.000000e+00 : f32
    %8 = vector.broadcast %cst_5 : f32 to vector<512x32xf32>
    %9 = arith.addf %8, %7 : vector<512x32xf32>
    %10 = arith.divf %8, %9 : vector<512x32xf32>
    %11 = arith.mulf %5, %10 : vector<512x32xf32>
    %c0_6 = arith.constant 0 : index
    %c0_7 = arith.constant 0 : index
    %12 = vector.load %arg4[%c0_6, %c0_7] : memref<512x32xf32, #tpu.memory_space<vmem>>, vector<512x32xf32>
    tpu.vector_store %arg4[%c0_6, %c0_7], %11 {strides = array<i32>} : memref<512x32xf32, #tpu.memory_space<vmem>>, vector<512x32xf32>,
    return
  }
  func.func @transform_0(%arg0: i32) -> (i32, i32) {
    %c0_i32 = arith.constant 0 : i32
    %c0_i32_0 = arith.constant 0 : i32
    return %arg0, %c0_i32 : i32, i32
  }
  func.func @transform_1(%arg0: i32) -> (i32, i32) {
    %c0_i32 = arith.constant 0 : i32
    %c0_i32_0 = arith.constant 0 : i32
    %c0_i32_1 = arith.constant 0 : i32
    return %c0_i32, %c0_i32_0 : i32, i32
  }
  func.func @transform_2(%arg0: i32) -> (i32, i32) {
    %c0_i32 = arith.constant 0 : i32
    %c0_i32_0 = arith.constant 0 : i32
    %c0_i32_1 = arith.constant 0 : i32
    return %c0_i32, %c0_i32_0 : i32, i32
  }
  func.func @transform_3(%arg0: i32) -> (i32, i32) {
    %c0_i32 = arith.constant 0 : i32
    %c0_i32_0 = arith.constant 0 : i32
    return %arg0, %c0_i32 : i32, i32
  }
}

module attributes {stable_mosaic.version = 11 : i64} {
  func.func @_mm_bias_act_kernel(%arg0: i32, %arg1: memref<512x288xbf16, #tpu.memory_space<vmem>>, %arg2: memref<288x32xbf16, #tpu.memory_space<vmem>>, %arg3: memref<1x32xf32, #tpu.memory_space<vmem>>, %arg4: memref<512x32xf32, #tpu.memory_space<vmem>>) attributes {dimension_semantics = [#tpu.dimension_semantics<parallel>], iteration_bounds = array<i64: 1>, scalar_prefetch = 0 : i64, scratch_operands = 0 : i64, tpu.core_type = #tpu.core_type<tc>, window_params = [{transform_indices = @transform_0, window_bounds = array<i64: 512, 288>}, {pipeline_mode = #tpu.pipeline_mode<synchronous>, transform_indices = @transform_1, window_bounds = array<i64: 288, 32>}, {pipeline_mode = #tpu.pipeline_mode<synchronous>, transform_indices = @transform_2, window_bounds = array<i64: 1, 32>}, {transform_indices = @transform_3, window_bounds = array<i64: 512, 32>}]} {
    %c0 = arith.constant 0 : index
    %c0_0 = arith.constant 0 : index
    %0 = vector.load %arg1[%c0, %c0_0] : memref<512x288xbf16, #tpu.memory_space<vmem>>, vector<512x288xbf16>
    %c0_1 = arith.constant 0 : index
    %c0_2 = arith.constant 0 : index
    %1 = vector.load %arg2[%c0_1, %c0_2] : memref<288x32xbf16, #tpu.memory_space<vmem>>, vector<288x32xbf16>
    %cst = arith.constant dense<0.000000e+00> : vector<512x32xf32>
    %2 = tpu.matmul %0, %1, %cst {dimension_numbers = #tpu.dot_dimension_numbers<[1], [0], [0], [1], [0, 0, 1, 1], [], []>} : vector<512x288xbf16>, vector<288x32xbf16>, vector<512x32xf32> -> vector<512x32xf32>
    %c0_3 = arith.constant 0 : index
    %c0_4 = arith.constant 0 : index
    %3 = vector.load %arg3[%c0_3, %c0_4] : memref<1x32xf32, #tpu.memory_space<vmem>>, vector<1x32xf32>
    %4 = vector.broadcast %3 : vector<1x32xf32> to vector<512x32xf32>
    %5 = arith.addf %2, %4 : vector<512x32xf32>
    %6 = arith.negf %5 : vector<512x32xf32>
    %7 = math.exp %6 : vector<512x32xf32>
    %cst_5 = arith.constant 1.000000e+00 : f32
    %8 = vector.broadcast %cst_5 : f32 to vector<512x32xf32>
    %9 = arith.addf %8, %7 : vector<512x32xf32>
    %10 = arith.divf %8, %9 : vector<512x32xf32>
    %11 = arith.mulf %5, %10 : vector<512x32xf32>
    %c0_6 = arith.constant 0 : index
    %c0_7 = arith.constant 0 : index
    %12 = vector.load %arg4[%c0_6, %c0_7] : memref<512x32xf32, #tpu.memory_space<vmem>>, vector<512x32xf32>
    tpu.vector_store %arg4[%c0_6, %c0_7], %11 {strides = array<i32>} : memref<512x32xf32, #tpu.memory_space<vmem>>, vector<512x32xf32>,
    return
  }
  func.func @transform_0(%arg0: i32) -> (i32, i32) {
    %c0_i32 = arith.constant 0 : i32
    %c0_i32_0 = arith.constant 0 : i32
    return %arg0, %c0_i32 : i32, i32
  }
  func.func @transform_1(%arg0: i32) -> (i32, i32) {
    %c0_i32 = arith.constant 0 : i32
    %c0_i32_0 = arith.constant 0 : i32
    %c0_i32_1 = arith.constant 0 : i32
    return %c0_i32, %c0_i32_0 : i32, i32
  }
  func.func @transform_2(%arg0: i32) -> (i32, i32) {
    %c0_i32 = arith.constant 0 : i32
    %c0_i32_0 = arith.constant 0 : i32
    %c0_i32_1 = arith.constant 0 : i32
    return %c0_i32, %c0_i32_0 : i32, i32
  }
  func.func @transform_3(%arg0: i32) -> (i32, i32) {
    %c0_i32 = arith.constant 0 : i32
    %c0_i32_0 = arith.constant 0 : i32
    return %arg0, %c0_i32 : i32, i32
  }
}

module attributes {stable_mosaic.version = 11 : i64} {
  func.func @_mm2_bias_act_kernel(%arg0: i32, %arg1: memref<512x32xbf16, #tpu.memory_space<vmem>>, %arg2: memref<512x32xbf16, #tpu.memory_space<vmem>>, %arg3: memref<32x64xbf16, #tpu.memory_space<vmem>>, %arg4: memref<32x64xbf16, #tpu.memory_space<vmem>>, %arg5: memref<1x64xf32, #tpu.memory_space<vmem>>, %arg6: memref<512x64xf32, #tpu.memory_space<vmem>>) attributes {dimension_semantics = [#tpu.dimension_semantics<parallel>], iteration_bounds = array<i64: 1>, scalar_prefetch = 0 : i64, scratch_operands = 0 : i64, tpu.core_type = #tpu.core_type<tc>, window_params = [{transform_indices = @transform_0, window_bounds = array<i64: 512, 32>}, {transform_indices = @transform_1, window_bounds = array<i64: 512, 32>}, {pipeline_mode = #tpu.pipeline_mode<synchronous>, transform_indices = @transform_2, window_bounds = array<i64: 32, 64>}, {pipeline_mode = #tpu.pipeline_mode<synchronous>, transform_indices = @transform_3, window_bounds = array<i64: 32, 64>}, {pipeline_mode = #tpu.pipeline_mode<synchronous>, transform_indices = @transform_4, window_bounds = array<i64: 1, 64>}, {transform_indices = @transform_5, window_bounds = array<i64: 512, 64>}]} {
    %c0 = arith.constant 0 : index
    %c0_0 = arith.constant 0 : index
    %0 = vector.load %arg1[%c0, %c0_0] : memref<512x32xbf16, #tpu.memory_space<vmem>>, vector<512x32xbf16>
    %c0_1 = arith.constant 0 : index
    %c0_2 = arith.constant 0 : index
    %1 = vector.load %arg3[%c0_1, %c0_2] : memref<32x64xbf16, #tpu.memory_space<vmem>>, vector<32x64xbf16>
    %cst = arith.constant dense<0.000000e+00> : vector<512x64xf32>
    %2 = tpu.matmul %0, %1, %cst {dimension_numbers = #tpu.dot_dimension_numbers<[1], [0], [0], [1], [0, 0, 1, 1], [], []>} : vector<512x32xbf16>, vector<32x64xbf16>, vector<512x64xf32> -> vector<512x64xf32>
    %c0_3 = arith.constant 0 : index
    %c0_4 = arith.constant 0 : index
    %3 = vector.load %arg2[%c0_3, %c0_4] : memref<512x32xbf16, #tpu.memory_space<vmem>>, vector<512x32xbf16>
    %c0_5 = arith.constant 0 : index
    %c0_6 = arith.constant 0 : index
    %4 = vector.load %arg4[%c0_5, %c0_6] : memref<32x64xbf16, #tpu.memory_space<vmem>>, vector<32x64xbf16>
    %cst_7 = arith.constant dense<0.000000e+00> : vector<512x64xf32>
    %5 = tpu.matmul %3, %4, %cst_7 {dimension_numbers = #tpu.dot_dimension_numbers<[1], [0], [0], [1], [0, 0, 1, 1], [], []>} : vector<512x32xbf16>, vector<32x64xbf16>, vector<512x64xf32> -> vector<512x64xf32>
    %6 = arith.addf %2, %5 : vector<512x64xf32>
    %c0_8 = arith.constant 0 : index
    %c0_9 = arith.constant 0 : index
    %7 = vector.load %arg5[%c0_8, %c0_9] : memref<1x64xf32, #tpu.memory_space<vmem>>, vector<1x64xf32>
    %8 = vector.broadcast %7 : vector<1x64xf32> to vector<512x64xf32>
    %9 = arith.addf %6, %8 : vector<512x64xf32>
    %10 = arith.negf %9 : vector<512x64xf32>
    %11 = math.exp %10 : vector<512x64xf32>
    %cst_10 = arith.constant 1.000000e+00 : f32
    %12 = vector.broadcast %cst_10 : f32 to vector<512x64xf32>
    %13 = arith.addf %12, %11 : vector<512x64xf32>
    %14 = arith.divf %12, %13 : vector<512x64xf32>
    %15 = arith.mulf %9, %14 : vector<512x64xf32>
    %c0_11 = arith.constant 0 : index
    %c0_12 = arith.constant 0 : index
    %16 = vector.load %arg6[%c0_11, %c0_12] : memref<512x64xf32, #tpu.memory_space<vmem>>, vector<512x64xf32>
    tpu.vector_store %arg6[%c0_11, %c0_12], %15 {strides = array<i32>} : memref<512x64xf32, #tpu.memory_space<vmem>>, vector<512x64xf32>,
    return
  }
  func.func @transform_0(%arg0: i32) -> (i32, i32) {
    %c0_i32 = arith.constant 0 : i32
    %c0_i32_0 = arith.constant 0 : i32
    return %arg0, %c0_i32 : i32, i32
  }
  func.func @transform_1(%arg0: i32) -> (i32, i32) {
    %c0_i32 = arith.constant 0 : i32
    %c0_i32_0 = arith.constant 0 : i32
    return %arg0, %c0_i32 : i32, i32
  }
  func.func @transform_2(%arg0: i32) -> (i32, i32) {
    %c0_i32 = arith.constant 0 : i32
    %c0_i32_0 = arith.constant 0 : i32
    %c0_i32_1 = arith.constant 0 : i32
    return %c0_i32, %c0_i32_0 : i32, i32
  }
  func.func @transform_3(%arg0: i32) -> (i32, i32) {
    %c0_i32 = arith.constant 0 : i32
    %c0_i32_0 = arith.constant 0 : i32
    %c0_i32_1 = arith.constant 0 : i32
    return %c0_i32, %c0_i32_0 : i32, i32
  }
  func.func @transform_4(%arg0: i32) -> (i32, i32) {
    %c0_i32 = arith.constant 0 : i32
    %c0_i32_0 = arith.constant 0 : i32
    %c0_i32_1 = arith.constant 0 : i32
    return %c0_i32, %c0_i32_0 : i32, i32
  }
  func.func @transform_5(%arg0: i32) -> (i32, i32) {
    %c0_i32 = arith.constant 0 : i32
    %c0_i32_0 = arith.constant 0 : i32
    return %arg0, %c0_i32 : i32, i32
  }
}

</mosaic_0001>

<llo_original>
// kernel: csp_layer_fwd.6
$region0: #{csp_layer_fwd.6}
  #allocation0 [shape = 'u32[]', space=smem, size = 0x4, offset = 0x4, fixed_abs, tag = 'smem constant byte address 0x4 - core index']
  #allocation1 [shape = 'u32[144,128]{1,0:T(1,128)}', space=vmem, size = 0x12000, scoped, tag = 'internal scratch']
  %s0 = inlined_call_operand.hbm [shape: bf16[512,64], index: 0, kind: input, shape index: {}]
  %s1 = inlined_call_operand.hbm [shape: bf16[64,64], index: 1, kind: input, shape index: {}]
  %s2 = inlined_call_operand.hbm [shape: f32[1,64], index: 2, kind: input, shape index: {}]
  %s3 = inlined_call_operand.hbm [shape: f32[512,64], index: 3, kind: output, shape index: {}]
  %s4 = sld [smem:[#allocation0]]
  $region34: #{csp_layer_fwd.6} parent=0
    _
  %s6 = ssub.s32 1, %s4
  %s7 = scalar_select 0, %s6, %s4
  $region1: #{csp_layer_fwd.6} parent=0
    #allocation2 [shape = 'u8[131072]{0}', space=vmem, size = 0x20000, scoped, tag = 'input window, operand 0, single buffered']
    #allocation3 [shape = 's32[1]{0}', space=sflag, size = 0x4, scoped, tag = 'scoped memory for csp_layer_fwd.6']
    #allocation4 [shape = 's32[1]{0}', space=sflag, size = 0x4, scoped, tag = 'scoped memory for csp_layer_fwd.6']
    #allocation5 [shape = 'u8[16384]{0}', space=vmem, size = 0x4000, scoped, tag = 'input window, operand 1, single buffered']
    #allocation6 [shape = 's32[1]{0}', space=sflag, size = 0x4, scoped, tag = 'scoped memory for csp_layer_fwd.6']
    #allocation7 [shape = 'u8[512]{0}', space=vmem, size = 0x400, scoped, tag = 'input window, operand 2, single buffered']
    #allocation8 [shape = 'u8[262144]{0}', space=vmem, size = 0x40000, scoped, tag = 'output window, operand 0, single buffered']
    %8 = vsyncpa [#allocation3], 0
    %9 = vsyncpa [#allocation6], 0
    %10 = vsyncpa [#allocation4], 0
    // Predicated region
    $region2: #{csp_layer_fwd.6} parent=1 // pred_check
      _
    $region3: #{csp_layer_fwd.6} parent=1 // pred_check_branch
      %12 = sbr.rel (0) target = $region5
    $region4: #{csp_layer_fwd.6} parent=1 // pred_region
      %s14 = ssub.s32 4096, 4096
      %15 = vsyncadd [#allocation3], %s14
      %s16 = sshll.u32 [#allocation2], 4
      %s17 = int_to_ptr.vmem [resolvable:$true] %s16
      %22 = dma.hbm_to_vmem [thread:$0]  %s0, 4096, %s17, [#allocation3], 64, 64, 4
    $region5: #{csp_layer_fwd.6} parent=1 // pred_fallthru
      _
    // Predicated region
    $region6: #{csp_layer_fwd.6} parent=1 // pred_check
      _
    $region7: #{csp_layer_fwd.6} parent=1 // pred_check_branch
      %24 = sbr.rel (0) target = $region9
    $region8: #{csp_layer_fwd.6} parent=1 // pred_region
      %s26 = ssub.s32 512, 512
      %27 = vsyncadd [#allocation6], %s26
      %s28 = sshll.u32 [#allocation5], 4
      %s29 = int_to_ptr.vmem [resolvable:$true] %s28
      %34 = dma.hbm_to_vmem [thread:$0]  %s1, 512, %s29, [#allocation6], 64, 64, 4
    $region9: #{csp_layer_fwd.6} parent=1 // pred_fallthru
      _
    // Predicated region
    $region10: #{csp_layer_fwd.6} parent=1 // pred_check
      _
    $region11: #{csp_layer_fwd.6} parent=1 // pred_check_branch
      %36 = sbr.rel (0) target = $region13
    $region12: #{csp_layer_fwd.6} parent=1 // pred_region
      %s38 = ssub.s32 16, 16
      %39 = vsyncadd [#allocation6], %s38
      %s41 = sshll.u32 [#allocation7], 4
      %s42 = int_to_ptr.vmem [resolvable:$true] %s41
      %44 = dma.hbm_to_vmem [thread:$0]  %s2, 16, %s42, [#allocation6]
    $region13: #{csp_layer_fwd.6} parent=1 // pred_fallthru
      _
    // Predicated region
    $region14: #{csp_layer_fwd.6} parent=1 // pred_check
      _
    $region15: #{csp_layer_fwd.6} parent=1 // pred_check_branch
      %46 = sbr.rel (0) target = $region17
    $region16: #{csp_layer_fwd.6} parent=1 // pred_region
      %47 = dma.done [#allocation3], 4096
    $region17: #{csp_layer_fwd.6} parent=1 // pred_fallthru
      _
    // Predicated region
    $region18: #{csp_layer_fwd.6} parent=1 // pred_check
      _
    $region19: #{csp_layer_fwd.6} parent=1 // pred_check_branch
      %49 = sbr.rel (0) target = $region21
    $region20: #{csp_layer_fwd.6} parent=1 // pred_region
      %50 = dma.done [#allocation6], 512
    $region21: #{csp_layer_fwd.6} parent=1 // pred_fallthru
      _
    // Predicated region
    $region22: #{csp_layer_fwd.6} parent=1 // pred_check
      _
    $region23: #{csp_layer_fwd.6} parent=1 // pred_check_branch
      %52 = sbr.rel (0) target = $region25
    $region24: #{csp_layer_fwd.6} parent=1 // pred_region
      %53 = dma.done [#allocation6], 16
    $region25: #{csp_layer_fwd.6} parent=1 // pred_fallthru
      _
    %v55 = vld [vmem:[#allocation2] sm:$0xf]
    %v56 = vld [vmem:[#allocation2 + $0x4] sm:$0xf]
    %v57 = vld [vmem:[#allocation2 + $0x8] sm:$0xf]
    %v58 = vld [vmem:[#allocation2 + $0xc] sm:$0xf]
    %v59 = vld [vmem:[#allocation2 + $0x10] sm:$0xf]
    %v60 = vld [vmem:[#allocation2 + $0x14] sm:$0xf]
    %v61 = vld [vmem:[#allocation2 + $0x18] sm:$0xf]
    %v62 = vld [vmem:[#allocation2 + $0x1c] sm:$0xf]
    %v63 = vld [vmem:[#allocation2 + $0x20] sm:$0xf]
    %v64 = vld [vmem:[#allocation2 + $0x24] sm:$0xf]
    %v65 = vld [vmem:[#allocation2 + $0x28] sm:$0xf]
    %v66 = vld [vmem:[#allocation2 + $0x2c] sm:$0xf]
    %v67 = vld [vmem:[#allocation2 + $0x30] sm:$0xf]
    %v68 = vld [vmem:[#allocation2 + $0x34] sm:$0xf]
    %v69 = vld [vmem:[#allocation2 + $0x38] sm:$0xf]
    %v70 = vld [vmem:[#allocation2 + $0x3c] sm:$0xf]
    %v71 = vld [vmem:[#allocation2 + $0x40] sm:$0xf]
    %v72 = vld [vmem:[#allocation2 + $0x44] sm:$0xf]
    %v73 = vld [vmem:[#allocation2 + $0x48] sm:$0xf]
    %v74 = vld [vmem:[#allocation2 + $0x4c] sm:$0xf]
    %v75 = vld [vmem:[#allocation2 + $0x50] sm:$0xf]
    %v76 = vld [vmem:[#allocation2 + $0x54] sm:$0xf]
    %v77 = vld [vmem:[#allocation2 + $0x58] sm:$0xf]
    %v78 = vld [vmem:[#allocation2 + $0x5c] sm:$0xf]
    %v79 = vld [vmem:[#allocation2 + $0x60] sm:$0xf]
    %v80 = vld [vmem:[#allocation2 + $0x64] sm:$0xf]
    %v81 = vld [vmem:[#allocation2 + $0x68] sm:$0xf]
    %v82 = vld [vmem:[#allocation2 + $0x6c] sm:$0xf]
    %v83 = vld [vmem:[#allocation2 + $0x70] sm:$0xf]
    %v84 = vld [vmem:[#allocation2 + $0x74] sm:$0xf]
    %v85 = vld [vmem:[#allocation2 + $0x78] sm:$0xf]
    %v86 = vld [vmem:[#allocation2 + $0x7c] sm:$0xf]
    %v87 = vld [vmem:[#allocation2 + $0x80] sm:$0xf]
    %v88 = vld [vmem:[#allocation2 + $0x84] sm:$0xf]
    %v89 = vld [vmem:[#allocation2 + $0x88] sm:$0xf]
    %v90 = vld [vmem:[#allocation2 + $0x8c] sm:$0xf]
    %v91 = vld [vmem:[#allocation2 + $0x90] sm:$0xf]
    %v92 = vld [vmem:[#allocation2 + $0x94] sm:$0xf]
    %v93 = vld [vmem:[#allocation2 + $0x98] sm:$0xf]
    %v94 = vld [vmem:[#allocation2 + $0x9c] sm:$0xf]
    %v95 = vld [vmem:[#allocation2 + $0xa0] sm:$0xf]
    %v96 = vld [vmem:[#allocation2 + $0xa4] sm:$0xf]
    %v97 = vld [vmem:[#allocation2 + $0xa8] sm:$0xf]
    %v98 = vld [vmem:[#allocation2 + $0xac] sm:$0xf]
    %v99 = vld [vmem:[#allocation2 + $0xb0] sm:$0xf]
    %v100 = vld [vmem:[#allocation2 + $0xb4] sm:$0xf]
    %v101 = vld [vmem:[#allocation2 + $0xb8] sm:$0xf]
    %v102 = vld [vmem:[#allocation2 + $0xbc] sm:$0xf]
    %v103 = vld [vmem:[#allocation2 + $0xc0] sm:$0xf]
    %v104 = vld [vmem:[#allocation2 + $0xc4] sm:$0xf]
    %v105 = vld [vmem:[#allocation2 + $0xc8] sm:$0xf]
    %v106 = vld [vmem:[#allocation2 + $0xcc] sm:$0xf]
    %v107 = vld [vmem:[#allocation2 + $0xd0] sm:$0xf]
    %v108 = vld [vmem:[#allocation2 + $0xd4] sm:$0xf]
    %v109 = vld [vmem:[#allocation2 + $0xd8] sm:$0xf]
    %v110 = vld [vmem:[#allocation2 + $0xdc] sm:$0xf]
    %v111 = vld [vmem:[#allocation2 + $0xe0] sm:$0xf]
    %v112 = vld [vmem:[#allocation2 + $0xe4] sm:$0xf]
    %v113 = vld [vmem:[#allocation2 + $0xe8] sm:$0xf]
    %v114 = vld [vmem:[#allocation2 + $0xec] sm:$0xf]
    %v115 = vld [vmem:[#allocation2 + $0xf0] sm:$0xf]
    %v116 = vld [vmem:[#allocation2 + $0xf4] sm:$0xf]
    %v117 = vld [vmem:[#allocation2 + $0xf8] sm:$0xf]
    %v118 = vld [vmem:[#allocation2 + $0xfc] sm:$0xf]
    %v119 = vld [vmem:[#allocation5] sm:$0xf]
    %v120 = vld [vmem:[#allocation5 + $0x4] sm:$0xf]
    %v121 = vld [vmem:[#allocation5 + $0x8] sm:$0xf]
    %v122 = vld [vmem:[#allocation5 + $0xc] sm:$0xf]
    %v123 = vld [vmem:[#allocation5 + $0x10] sm:$0xf]
    %v124 = vld [vmem:[#allocation5 + $0x14] sm:$0xf]
    %v125 = vld [vmem:[#allocation5 + $0x18] sm:$0xf]
    %v126 = vld [vmem:[#allocation5 + $0x1c] sm:$0xf]
    %v127 = vld [vmem:[#allocation7] sm:$0x1]
    %v129 = vlaneseq
    %v130 = vshrl.u32 %v129, 7
    %v131 = vsub.s32 0, %v130
    %v132 = vrot.slane %v127, %v131
    %v198 = vunpack.c.l.b16 %v55
    %v199 = vunpack.c.l.b16 %v56
    %v200 = vunpack.c.l.b16 %v57
    %v201 = vunpack.c.l.b16 %v58
    %v202 = vunpack.c.l.b16 %v59
    %v203 = vunpack.c.l.b16 %v60
    %v204 = vunpack.c.l.b16 %v61
    %v205 = vunpack.c.l.b16 %v62
    %v206 = vunpack.c.l.b16 %v63
    %v207 = vunpack.c.l.b16 %v64
    %v208 = vunpack.c.l.b16 %v65
    %v209 = vunpack.c.l.b16 %v66
    %v210 = vunpack.c.l.b16 %v67
    %v211 = vunpack.c.l.b16 %v68
    %v212 = vunpack.c.l.b16 %v69
    %v213 = vunpack.c.l.b16 %v70
    %v214 = vunpack.c.l.b16 %v71
    %v215 = vunpack.c.l.b16 %v72
    %v216 = vunpack.c.l.b16 %v73
    %v217 = vunpack.c.l.b16 %v74
    %v218 = vunpack.c.l.b16 %v75
    %v219 = vunpack.c.l.b16 %v76
    %v220 = vunpack.c.l.b16 %v77
    %v221 = vunpack.c.l.b16 %v78
    %v222 = vunpack.c.l.b16 %v79
    %v223 = vunpack.c.l.b16 %v80
    %v224 = vunpack.c.l.b16 %v81
    %v225 = vunpack.c.l.b16 %v82
    %v226 = vunpack.c.l.b16 %v83
    %v227 = vunpack.c.l.b16 %v84
    %v228 = vunpack.c.l.b16 %v85
    %v229 = vunpack.c.l.b16 %v86
    %v230 = vunpack.c.l.b16 %v87
    %v231 = vunpack.c.l.b16 %v88
    %v232 = vunpack.c.l.b16 %v89
    %v233 = vunpack.c.l.b16 %v90
    %v234 = vunpack.c.l.b16 %v91
    %v235 = vunpack.c.l.b16 %v92
    %v236 = vunpack.c.l.b16 %v93
    %v237 = vunpack.c.l.b16 %v94
    %v238 = vunpack.c.l.b16 %v95
    %v239 = vunpack.c.l.b16 %v96
    %v240 = vunpack.c.l.b16 %v97
    %v241 = vunpack.c.l.b16 %v98
    %v242 = vunpack.c.l.b16 %v99
    %v243 = vunpack.c.l.b16 %v100
    %v244 = vunpack.c.l.b16 %v101
    %v245 = vunpack.c.l.b16 %v102
    %v246 = vunpack.c.l.b16 %v103
    %v247 = vunpack.c.l.b16 %v104
    %v248 = vunpack.c.l.b16 %v105
    %v249 = vunpack.c.l.b16 %v106
    %v250 = vunpack.c.l.b16 %v107
    %v251 = vunpack.c.l.b16 %v108
    %v252 = vunpack.c.l.b16 %v109
    %v253 = vunpack.c.l.b16 %v110
    %v254 = vunpack.c.l.b16 %v111
    %v255 = vunpack.c.l.b16 %v112
    %v256 = vunpack.c.l.b16 %v113
    %v257 = vunpack.c.l.b16 %v114
    %v258 = vunpack.c.l.b16 %v115
    %v259 = vunpack.c.l.b16 %v116
    %v260 = vunpack.c.l.b16 %v117
    %v261 = vunpack.c.l.b16 %v118
    %v262 = vpack.c.b16 %v199, %v198
    %v263 = vpack.c.b16 %v201, %v200
    %v264 = vpack.c.b16 %v203, %v202
    %v265 = vpack.c.b16 %v205, %v204
    %v266 = vpack.c.b16 %v207, %v206
    %v267 = vpack.c.b16 %v209, %v208
    %v268 = vpack.c.b16 %v211, %v210
    %v269 = vpack.c.b16 %v213, %v212
    %v270 = vpack.c.b16 %v215, %v214
    %v271 = vpack.c.b16 %v217, %v216
    %v272 = vpack.c.b16 %v219, %v218
    %v273 = vpack.c.b16 %v221, %v220
    %v274 = vpack.c.b16 %v223, %v222
    %v275 = vpack.c.b16 %v225, %v224
    %v276 = vpack.c.b16 %v227, %v226
    %v277 = vpack.c.b16 %v229, %v228
    %v278 = vpack.c.b16 %v231, %v230
    %v279 = vpack.c.b16 %v233, %v232
    %v280 = vpack.c.b16 %v235, %v234
    %v281 = vpack.c.b16 %v237, %v236
    %v282 = vpack.c.b16 %v239, %v238
    %v283 = vpack.c.b16 %v241, %v240
    %v284 = vpack.c.b16 %v243, %v242
    %v285 = vpack.c.b16 %v245, %v244
    %v286 = vpack.c.b16 %v247, %v246
    %v287 = vpack.c.b16 %v249, %v248
    %v288 = vpack.c.b16 %v251, %v250
    %v289 = vpack.c.b16 %v253, %v252
    %v290 = vpack.c.b16 %v255, %v254
    %v291 = vpack.c.b16 %v257, %v256
    %v292 = vpack.c.b16 %v259, %v258
    %v293 = vpack.c.b16 %v261, %v260
    %v302 = vunpack.c.l.b16 %v119
    %v303 = vunpack.c.l.b16 %v120
    %v304 = vunpack.c.l.b16 %v121
    %v305 = vunpack.c.l.b16 %v122
    %v306 = vunpack.c.l.b16 %v123
    %v307 = vunpack.c.l.b16 %v124
    %v308 = vunpack.c.l.b16 %v125
    %v309 = vunpack.c.l.b16 %v126
    %v310 = vpack.c.b16 %v303, %v302
    %v311 = vpack.c.b16 %v305, %v304
    %v312 = vpack.c.b16 %v307, %v306
    %v313 = vpack.c.b16 %v309, %v308
    %vm318 = vcmask 523264
    %v320 = vsel %vm318, %v262, 0
    %v323 = vsel %vm318, %v263, 0
    %v326 = vsel %vm318, %v264, 0
    %v329 = vsel %vm318, %v265, 0
    %v332 = vsel %vm318, %v266, 0
    %v335 = vsel %vm318, %v267, 0
    %v338 = vsel %vm318, %v268, 0
    %v341 = vsel %vm318, %v269, 0
    %v344 = vsel %vm318, %v270, 0
    %v347 = vsel %vm318, %v271, 0
    %v350 = vsel %vm318, %v272, 0
    %v353 = vsel %vm318, %v273, 0
    %v356 = vsel %vm318, %v274, 0
    %v359 = vsel %vm318, %v275, 0
    %v362 = vsel %vm318, %v276, 0
    %v365 = vsel %vm318, %v277, 0
    %v368 = vsel %vm318, %v278, 0
    %v371 = vsel %vm318, %v279, 0
    %v374 = vsel %vm318, %v280, 0
    %v377 = vsel %vm318, %v281, 0
    %v380 = vsel %vm318, %v282, 0
    %v383 = vsel %vm318, %v283, 0
    %v386 = vsel %vm318, %v284, 0
    %v389 = vsel %vm318, %v285, 0
    %v392 = vsel %vm318, %v286, 0
    %v395 = vsel %vm318, %v287, 0
    %v398 = vsel %vm318, %v288, 0
    %v401 = vsel %vm318, %v289, 0
    %v404 = vsel %vm318, %v290, 0
    %v407 = vsel %vm318, %v291, 0
    %v410 = vsel %vm318, %v292, 0
    %v413 = vsel %vm318, %v293, 0
    %415 = vmatprep.subr.bf16.mxu0 0
    %416 = vmatpush1.bf16.msra.mxu0 %v310
    %417 = vmatprep.subr.bf16.mxu0 0
    %418 = vmatpush1.bf16.msra.mxu0 %v311
    %419 = vmatprep.subr.bf16.mxu0 0
    %420 = vmatpush1.bf16.msra.mxu0 %v312
    %421 = vmatprep.subr.bf16.mxu0 0
    %422 = vmatpush1.bf16.msra.mxu0 %v313
    %423 = vmatprep.subr.bf16.mxu0 0
    %424 = vmatpush1.bf16.msra.mxu0 0
    %425 = vmatprep.subr.bf16.mxu0 0
    %426 = vmatpush1.bf16.msra.mxu0 0
    %427 = vmatprep.subr.bf16.mxu0 0
    %428 = vmatpush1.bf16.msra.mxu0 0
    %429 = vmatprep.subr.bf16.mxu0 0
    %430 = vmatpush1.bf16.msra.mxu0 0
    %431 = vmatprep.subr.bf16.mxu0 0
    %432 = vmatpush1.bf16.msra.mxu0 0
    %433 = vmatprep.subr.bf16.mxu0 0
    %434 = vmatpush1.bf16.msra.mxu0 0
    %435 = vmatprep.subr.bf16.mxu0 0
    %436 = vmatpush1.bf16.msra.mxu0 0
    %437 = vmatprep.subr.bf16.mxu0 0
    %438 = vmatpush1.bf16.msra.mxu0 0
    %439 = vmatprep.subr.bf16.mxu0 0
    %440 = vmatpush1.bf16.msra.mxu0 0
    %441 = vmatprep.subr.bf16.mxu0 0
    %442 = vmatpush1.bf16.msra.mxu0 0
    %443 = vmatprep.subr.bf16.mxu0 0
    %444 = vmatpush1.bf16.msra.mxu0 0
    %445 = vmatprep.subr.bf16.mxu0 0
    %446 = vmatpush1.bf16.msra.mxu0 0
    %447 = vmatprep.mubr.bf16.mxu0 0
    %448 = vmatmul.mubr.bf16.gmra.mrb[0].mxu0 %v320
    %v449 = vpop.f32.mrb[0].mxu0
    %v450 = vadd.f32 %v132, %v449
    %v451 = vpop.f32.mrb[0].mxu0
    %v452 = vpop.f32.mrb[0].mxu0
    %v453 = vadd.f32 %v132, %v452
    %v454 = vpop.f32.mrb[0].mxu0
    %455 = vmatprep.mubr.bf16.mxu0 0
    %456 = vmatmul.mubr.bf16.gmra.mrb[0].mxu0 %v323
    %v457 = vpop.f32.mrb[0].mxu0
    %v458 = vadd.f32 %v132, %v457
    %v459 = vpop.f32.mrb[0].mxu0
    %v460 = vpop.f32.mrb[0].mxu0
    %v461 = vadd.f32 %v132, %v460
    %v462 = vpop.f32.mrb[0].mxu0
    %463 = vmatprep.mubr.bf16.mxu0 0
    %464 = vmatmul.mubr.bf16.gmra.mrb[0].mxu0 %v326
    %v465 = vpop.f32.mrb[0].mxu0
    %v466 = vadd.f32 %v132, %v465
    %v467 = vpop.f32.mrb[0].mxu0
    %v468 = vpop.f32.mrb[0].mxu0
    %v469 = vadd.f32 %v132, %v468
    %v470 = vpop.f32.mrb[0].mxu0
    %471 = vmatprep.mubr.bf16.mxu0 0
    %472 = vmatmul.mubr.bf16.gmra.mrb[0].mxu0 %v329
    %v473 = vpop.f32.mrb[0].mxu0
    %v474 = vadd.f32 %v132, %v473
    %v475 = vpop.f32.mrb[0].mxu0
    %v476 = vpop.f32.mrb[0].mxu0
    %v477 = vadd.f32 %v132, %v476
    %v478 = vpop.f32.mrb[0].mxu0
    %479 = vmatprep.mubr.bf16.mxu0 0
    %480 = vmatmul.mubr.bf16.gmra.mrb[0].mxu0 %v332
    %v481 = vpop.f32.mrb[0].mxu0
    %v482 = vadd.f32 %v132, %v481
    %v483 = vpop.f32.mrb[0].mxu0
    %v484 = vpop.f32.mrb[0].mxu0
    %v485 = vadd.f32 %v132, %v484
    %v486 = vpop.f32.mrb[0].mxu0
    %487 = vmatprep.mubr.bf16.mxu0 0
    %488 = vmatmul.mubr.bf16.gmra.mrb[0].mxu0 %v335
    %v489 = vpop.f32.mrb[0].mxu0
    %v490 = vadd.f32 %v132, %v489
    %v491 = vpop.f32.mrb[0].mxu0
    %v492 = vpop.f32.mrb[0].mxu0
    %v493 = vadd.f32 %v132, %v492
    %v494 = vpop.f32.mrb[0].mxu0
    %495 = vmatprep.mubr.bf16.mxu0 0
    %496 = vmatmul.mubr.bf16.gmra.mrb[0].mxu0 %v338
    %v497 = vpop.f32.mrb[0].mxu0
    %v498 = vadd.f32 %v132, %v497
    %v499 = vpop.f32.mrb[0].mxu0
    %v500 = vpop.f32.mrb[0].mxu0
    %v501 = vadd.f32 %v132, %v500
    %v502 = vpop.f32.mrb[0].mxu0
    %503 = vmatprep.mubr.bf16.mxu0 0
    %504 = vmatmul.mubr.bf16.gmra.mrb[0].mxu0 %v341
    %v505 = vpop.f32.mrb[0].mxu0
    %v506 = vadd.f32 %v132, %v505
    %v507 = vpop.f32.mrb[0].mxu0
    %v508 = vpop.f32.mrb[0].mxu0
    %v509 = vadd.f32 %v132, %v508
    %v510 = vpop.f32.mrb[0].mxu0
    %511 = vmatprep.mubr.bf16.mxu0 0
    %512 = vmatmul.mubr.bf16.gmra.mrb[0].mxu0 %v344
    %v513 = vpop.f32.mrb[0].mxu0
    %v514 = vadd.f32 %v132, %v513
    %v515 = vpop.f32.mrb[0].mxu0
    %v516 = vpop.f32.mrb[0].mxu0
    %v517 = vadd.f32 %v132, %v516
    %v518 = vpop.f32.mrb[0].mxu0
    %519 = vmatprep.mubr.bf16.mxu0 0
    %520 = vmatmul.mubr.bf16.gmra.mrb[0].mxu0 %v347
    %v521 = vpop.f32.mrb[0].mxu0
    %v522 = vadd.f32 %v132, %v521
    %v523 = vpop.f32.mrb[0].mxu0
    %v524 = vpop.f32.mrb[0].mxu0
    %v525 = vadd.f32 %v132, %v524
    %v526 = vpop.f32.mrb[0].mxu0
    %527 = vmatprep.mubr.bf16.mxu0 0
    %528 = vmatmul.mubr.bf16.gmra.mrb[0].mxu0 %v350
    %v529 = vpop.f32.mrb[0].mxu0
    %v530 = vadd.f32 %v132, %v529
    %v531 = vpop.f32.mrb[0].mxu0
    %v532 = vpop.f32.mrb[0].mxu0
    %v533 = vadd.f32 %v132, %v532
    %v534 = vpop.f32.mrb[0].mxu0
    %535 = vmatprep.mubr.bf16.mxu0 0
    %536 = vmatmul.mubr.bf16.gmra.mrb[0].mxu0 %v353
    %v537 = vpop.f32.mrb[0].mxu0
    %v538 = vadd.f32 %v132, %v537
    %v539 = vpop.f32.mrb[0].mxu0
    %v540 = vpop.f32.mrb[0].mxu0
    %v541 = vadd.f32 %v132, %v540
    %v542 = vpop.f32.mrb[0].mxu0
    %543 = vmatprep.mubr.bf16.mxu0 0
    %544 = vmatmul.mubr.bf16.gmra.mrb[0].mxu0 %v356
    %v545 = vpop.f32.mrb[0].mxu0
    %v546 = vadd.f32 %v132, %v545
    %v547 = vpop.f32.mrb[0].mxu0
    %v548 = vpop.f32.mrb[0].mxu0
    %v549 = vadd.f32 %v132, %v548
    %v550 = vpop.f32.mrb[0].mxu0
    %551 = vmatprep.mubr.bf16.mxu0 0
    %552 = vmatmul.mubr.bf16.gmra.mrb[0].mxu0 %v359
    %v553 = vpop.f32.mrb[0].mxu0
    %v554 = vadd.f32 %v132, %v553
    %v555 = vpop.f32.mrb[0].mxu0
    %v556 = vpop.f32.mrb[0].mxu0
    %v557 = vadd.f32 %v132, %v556
    %v558 = vpop.f32.mrb[0].mxu0
    %559 = vmatprep.mubr.bf16.mxu0 0
    %560 = vmatmul.mubr.bf16.gmra.mrb[0].mxu0 %v362
    %v561 = vpop.f32.mrb[0].mxu0
    %v562 = vadd.f32 %v132, %v561
    %v563 = vpop.f32.mrb[0].mxu0
    %v564 = vpop.f32.mrb[0].mxu0
    %v565 = vadd.f32 %v132, %v564
    %v566 = vpop.f32.mrb[0].mxu0
    %567 = vmatprep.mubr.bf16.mxu0 0
    %568 = vmatmul.mubr.bf16.gmra.mrb[0].mxu0 %v365
    %v569 = vpop.f32.mrb[0].mxu0
    %v570 = vadd.f32 %v132, %v569
    %v571 = vpop.f32.mrb[0].mxu0
    %v572 = vpop.f32.mrb[0].mxu0
    %v573 = vadd.f32 %v132, %v572
    %v574 = vpop.f32.mrb[0].mxu0
    %575 = vmatprep.mubr.bf16.mxu0 0
    %576 = vmatmul.mubr.bf16.gmra.mrb[0].mxu0 %v368
    %v577 = vpop.f32.mrb[0].mxu0
    %v578 = vadd.f32 %v132, %v577
    %v579 = vpop.f32.mrb[0].mxu0
    %v580 = vpop.f32.mrb[0].mxu0
    %v581 = vadd.f32 %v132, %v580
    %v582 = vpop.f32.mrb[0].mxu0
    %583 = vmatprep.mubr.bf16.mxu0 0
    %584 = vmatmul.mubr.bf16.gmra.mrb[0].mxu0 %v371
    %v585 = vpop.f32.mrb[0].mxu0
    %v586 = vadd.f32 %v132, %v585
    %v587 = vpop.f32.mrb[0].mxu0
    %v588 = vpop.f32.mrb[0].mxu0
    %v589 = vadd.f32 %v132, %v588
    %v590 = vpop.f32.mrb[0].mxu0
    %591 = vmatprep.mubr.bf16.mxu0 0
    %592 = vmatmul.mubr.bf16.gmra.mrb[0].mxu0 %v374
    %v593 = vpop.f32.mrb[0].mxu0
    %v594 = vadd.f32 %v132, %v593
    %v595 = vpop.f32.mrb[0].mxu0
    %v596 = vpop.f32.mrb[0].mxu0
    %v597 = vadd.f32 %v132, %v596
    %v598 = vpop.f32.mrb[0].mxu0
    %599 = vmatprep.mubr.bf16.mxu0 0
    %600 = vmatmul.mubr.bf16.gmra.mrb[0].mxu0 %v377
    %v601 = vpop.f32.mrb[0].mxu0
    %v602 = vadd.f32 %v132, %v601
    %v603 = vpop.f32.mrb[0].mxu0
    %v604 = vpop.f32.mrb[0].mxu0
    %v605 = vadd.f32 %v132, %v604
    %v606 = vpop.f32.mrb[0].mxu0
    %607 = vmatprep.mubr.bf16.mxu0 0
    %608 = vmatmul.mubr.bf16.gmra.mrb[0].mxu0 %v380
    %v609 = vpop.f32.mrb[0].mxu0
    %v610 = vadd.f32 %v132, %v609
    %v611 = vpop.f32.mrb[0].mxu0
    %v612 = vpop.f32.mrb[0].mxu0
    %v613 = vadd.f32 %v132, %v612
    %v614 = vpop.f32.mrb[0].mxu0
    %615 = vmatprep.mubr.bf16.mxu0 0
    %616 = vmatmul.mubr.bf16.gmra.mrb[0].mxu0 %v383
    %v617 = vpop.f32.mrb[0].mxu0
    %v618 = vadd.f32 %v132, %v617
    %v619 = vpop.f32.mrb[0].mxu0
    %v620 = vpop.f32.mrb[0].mxu0
    %v621 = vadd.f32 %v132, %v620
    %v622 = vpop.f32.mrb[0].mxu0
    %623 = vmatprep.mubr.bf16.mxu0 0
    %624 = vmatmul.mubr.bf16.gmra.mrb[0].mxu0 %v386
    %v625 = vpop.f32.mrb[0].mxu0
    %v626 = vadd.f32 %v132, %v625
    %v627 = vpop.f32.mrb[0].mxu0
    %v628 = vpop.f32.mrb[0].mxu0
    %v629 = vadd.f32 %v132, %v628
    %v630 = vpop.f32.mrb[0].mxu0
    %631 = vmatprep.mubr.bf16.mxu0 0
    %632 = vmatmul.mubr.bf16.gmra.mrb[0].mxu0 %v389
    %v633 = vpop.f32.mrb[0].mxu0
    %v634 = vadd.f32 %v132, %v633
    %v635 = vpop.f32.mrb[0].mxu0
    %v636 = vpop.f32.mrb[0].mxu0
    %v637 = vadd.f32 %v132, %v636
    %v638 = vpop.f32.mrb[0].mxu0
    %639 = vmatprep.mubr.bf16.mxu0 0
    %640 = vmatmul.mubr.bf16.gmra.mrb[0].mxu0 %v392
    %v641 = vpop.f32.mrb[0].mxu0
    %v642 = vadd.f32 %v132, %v641
    %v643 = vpop.f32.mrb[0].mxu0
    %v644 = vpop.f32.mrb[0].mxu0
    %v645 = vadd.f32 %v132, %v644
    %v646 = vpop.f32.mrb[0].mxu0
    %647 = vmatprep.mubr.bf16.mxu0 0
    %648 = vmatmul.mubr.bf16.gmra.mrb[0].mxu0 %v395
    %v649 = vpop.f32.mrb[0].mxu0
    %v650 = vadd.f32 %v132, %v649
    %v651 = vpop.f32.mrb[0].mxu0
    %v652 = vpop.f32.mrb[0].mxu0
    %v653 = vadd.f32 %v132, %v652
    %v654 = vpop.f32.mrb[0].mxu0
    %655 = vmatprep.mubr.bf16.mxu0 0
    %656 = vmatmul.mubr.bf16.gmra.mrb[0].mxu0 %v398
    %v657 = vpop.f32.mrb[0].mxu0
    %v658 = vadd.f32 %v132, %v657
    %v659 = vpop.f32.mrb[0].mxu0
    %v660 = vpop.f32.mrb[0].mxu0
    %v661 = vadd.f32 %v132, %v660
    %v662 = vpop.f32.mrb[0].mxu0
    %663 = vmatprep.mubr.bf16.mxu0 0
    %664 = vmatmul.mubr.bf16.gmra.mrb[0].mxu0 %v401
    %v665 = vpop.f32.mrb[0].mxu0
    %v666 = vadd.f32 %v132, %v665
    %v667 = vpop.f32.mrb[0].mxu0
    %v668 = vpop.f32.mrb[0].mxu0
    %v669 = vadd.f32 %v132, %v668
    %v670 = vpop.f32.mrb[0].mxu0
    %671 = vmatprep.mubr.bf16.mxu0 0
    %672 = vmatmul.mubr.bf16.gmra.mrb[0].mxu0 %v404
    %v673 = vpop.f32.mrb[0].mxu0
    %v674 = vadd.f32 %v132, %v673
    %v675 = vpop.f32.mrb[0].mxu0
    %v676 = vpop.f32.mrb[0].mxu0
    %v677 = vadd.f32 %v132, %v676
    %v678 = vpop.f32.mrb[0].mxu0
    %679 = vmatprep.mubr.bf16.mxu0 0
    %680 = vmatmul.mubr.bf16.gmra.mrb[0].mxu0 %v407
    %v681 = vpop.f32.mrb[0].mxu0
    %v682 = vadd.f32 %v132, %v681
    %v683 = vpop.f32.mrb[0].mxu0
    %v684 = vpop.f32.mrb[0].mxu0
    %v685 = vadd.f32 %v132, %v684
    %v686 = vpop.f32.mrb[0].mxu0
    %687 = vmatprep.mubr.bf16.mxu0 0
    %688 = vmatmul.mubr.bf16.gmra.mrb[0].mxu0 %v410
    %v689 = vpop.f32.mrb[0].mxu0
    %v690 = vadd.f32 %v132, %v689
    %v691 = vpop.f32.mrb[0].mxu0
    %v692 = vpop.f32.mrb[0].mxu0
    %v693 = vadd.f32 %v132, %v692
    %v694 = vpop.f32.mrb[0].mxu0
    %695 = vmatprep.mubr.bf16.mxu0 0
    %696 = vmatmul.mubr.bf16.gmra.mrb[0].mxu0 %v413
    %v697 = vpop.f32.mrb[0].mxu0
    %v698 = vadd.f32 %v132, %v697
    %v699 = vpop.f32.mrb[0].mxu0
    %v700 = vpop.f32.mrb[0].mxu0
    %v701 = vadd.f32 %v132, %v700
    %v702 = vpop.f32.mrb[0].mxu0
    %703 = vdwg.mxu0
    %v704 = vxor.u32 %v450, 2147483648
    %v705 = vxor.u32 %v453, 2147483648
    %v706 = vxor.u32 %v458, 2147483648
    %v707 = vxor.u32 %v461, 2147483648
    %v708 = vxor.u32 %v466, 2147483648
    %v709 = vxor.u32 %v469, 2147483648
    %v710 = vxor.u32 %v474, 2147483648
    %v711 = vxor.u32 %v477, 2147483648
    %v712 = vxor.u32 %v482, 2147483648
    %v713 = vxor.u32 %v485, 2147483648
    %v714 = vxor.u32 %v490, 2147483648
    %v715 = vxor.u32 %v493, 2147483648
    %v716 = vxor.u32 %v498, 2147483648
    %v717 = vxor.u32 %v501, 2147483648
    %v718 = vxor.u32 %v506, 2147483648
    %v719 = vxor.u32 %v509, 2147483648
    %v720 = vxor.u32 %v514, 2147483648
    %v721 = vxor.u32 %v517, 2147483648
    %v722 = vxor.u32 %v522, 2147483648
    %v723 = vxor.u32 %v525, 2147483648
    %v724 = vxor.u32 %v530, 2147483648
    %v725 = vxor.u32 %v533, 2147483648
    %v726 = vxor.u32 %v538, 2147483648
    %v727 = vxor.u32 %v541, 2147483648
    %v728 = vxor.u32 %v546, 2147483648
    %v729 = vxor.u32 %v549, 2147483648
    %v730 = vxor.u32 %v554, 2147483648
    %v731 = vxor.u32 %v557, 2147483648
    %v732 = vxor.u32 %v562, 2147483648
    %v733 = vxor.u32 %v565, 2147483648
    %v734 = vxor.u32 %v570, 2147483648
    %v735 = vxor.u32 %v573, 2147483648
    %v736 = vxor.u32 %v578, 2147483648
    %v737 = vxor.u32 %v581, 2147483648
    %v738 = vxor.u32 %v586, 2147483648
    %v739 = vxor.u32 %v589, 2147483648
    %v740 = vxor.u32 %v594, 2147483648
    %v741 = vxor.u32 %v597, 2147483648
    %v742 = vxor.u32 %v602, 2147483648
    %v743 = vxor.u32 %v605, 2147483648
    %v744 = vxor.u32 %v610, 2147483648
    %v745 = vxor.u32 %v613, 2147483648
    %v746 = vxor.u32 %v618, 2147483648
    %v747 = vxor.u32 %v621, 2147483648
    %v748 = vxor.u32 %v626, 2147483648
    %v749 = vxor.u32 %v629, 2147483648
    %v750 = vxor.u32 %v634, 2147483648
    %v751 = vxor.u32 %v637, 2147483648
    %v752 = vxor.u32 %v642, 2147483648
    %v753 = vxor.u32 %v645, 2147483648
    %v754 = vxor.u32 %v650, 2147483648
    %v755 = vxor.u32 %v653, 2147483648
    %v756 = vxor.u32 %v658, 2147483648
    %v757 = vxor.u32 %v661, 2147483648
    %v758 = vxor.u32 %v666, 2147483648
    %v759 = vxor.u32 %v669, 2147483648
    %v760 = vxor.u32 %v674, 2147483648
    %v761 = vxor.u32 %v677, 2147483648
    %v762 = vxor.u32 %v682, 2147483648
    %v763 = vxor.u32 %v685, 2147483648
    %v764 = vxor.u32 %v690, 2147483648
    %v765 = vxor.u32 %v693, 2147483648
    %v766 = vxor.u32 %v698, 2147483648
    %v767 = vxor.u32 %v701, 2147483648
    %v768 = vmul.f32 %v704, 1.442695
    %v769 = vpow.pop %v768
    %v770 = vmul.f32 %v705, 1.442695
    %v771 = vpow.pop %v770
    %v772 = vmul.f32 %v706, 1.442695
    %v773 = vpow.pop %v772
    %v774 = vmul.f32 %v707, 1.442695
    %v775 = vpow.pop %v774
    %v776 = vmul.f32 %v708, 1.442695
    %v777 = vpow.pop %v776
    %v778 = vmul.f32 %v709, 1.442695
    %v779 = vpow.pop %v778
    %v780 = vmul.f32 %v710, 1.442695
    %v781 = vpow.pop %v780
    %v782 = vmul.f32 %v711, 1.442695
    %v783 = vpow.pop %v782
    %v784 = vmul.f32 %v712, 1.442695
    %v785 = vpow.pop %v784
    %v786 = vmul.f32 %v713, 1.442695
    %v787 = vpow.pop %v786
    %v788 = vmul.f32 %v714, 1.442695
    %v789 = vpow.pop %v788
    %v790 = vmul.f32 %v715, 1.442695
    %v791 = vpow.pop %v790
    %v792 = vmul.f32 %v716, 1.442695
    %v793 = vpow.pop %v792
    %v794 = vmul.f32 %v717, 1.442695
    %v795 = vpow.pop %v794
    %v796 = vmul.f32 %v718, 1.442695
    %v797 = vpow.pop %v796
    %v798 = vmul.f32 %v719, 1.442695
    %v799 = vpow.pop %v798
    %v800 = vmul.f32 %v720, 1.442695
    %v801 = vpow.pop %v800
    %v802 = vmul.f32 %v721, 1.442695
    %v803 = vpow.pop %v802
    %v804 = vmul.f32 %v722, 1.442695
    %v805 = vpow.pop %v804
    %v806 = vmul.f32 %v723, 1.442695
    %v807 = vpow.pop %v806
    %v808 = vmul.f32 %v724, 1.442695
    %v809 = vpow.pop %v808
    %v810 = vmul.f32 %v725, 1.442695
    %v811 = vpow.pop %v810
    %v812 = vmul.f32 %v726, 1.442695
    %v813 = vpow.pop %v812
    %v814 = vmul.f32 %v727, 1.442695
    %v815 = vpow.pop %v814
    %v816 = vmul.f32 %v728, 1.442695
    %v817 = vpow.pop %v816
    %v818 = vmul.f32 %v729, 1.442695
    %v819 = vpow.pop %v818
    %v820 = vmul.f32 %v730, 1.442695
    %v821 = vpow.pop %v820
    %v822 = vmul.f32 %v731, 1.442695
    %v823 = vpow.pop %v822
    %v824 = vmul.f32 %v732, 1.442695
    %v825 = vpow.pop %v824
    %v826 = vmul.f32 %v733, 1.442695
    %v827 = vpow.pop %v826
    %v828 = vmul.f32 %v734, 1.442695
    %v829 = vpow.pop %v828
    %v830 = vmul.f32 %v735, 1.442695
    %v831 = vpow.pop %v830
    %v832 = vmul.f32 %v736, 1.442695
    %v833 = vpow.pop %v832
    %v834 = vmul.f32 %v737, 1.442695
    %v835 = vpow.pop %v834
    %v836 = vmul.f32 %v738, 1.442695
    %v837 = vpow.pop %v836
    %v838 = vmul.f32 %v739, 1.442695
    %v839 = vpow.pop %v838
    %v840 = vmul.f32 %v740, 1.442695
    %v841 = vpow.pop %v840
    %v842 = vmul.f32 %v741, 1.442695
    %v843 = vpow.pop %v842
    %v844 = vmul.f32 %v742, 1.442695
    %v845 = vpow.pop %v844
    %v846 = vmul.f32 %v743, 1.442695
    %v847 = vpow.pop %v846
    %v848 = vmul.f32 %v744, 1.442695
    %v849 = vpow.pop %v848
    %v850 = vmul.f32 %v745, 1.442695
    %v851 = vpow.pop %v850
    %v852 = vmul.f32 %v746, 1.442695
    %v853 = vpow.pop %v852
    %v854 = vmul.f32 %v747, 1.442695
    %v855 = vpow.pop %v854
    %v856 = vmul.f32 %v748, 1.442695
    %v857 = vpow.pop %v856
    %v858 = vmul.f32 %v749, 1.442695
    %v859 = vpow.pop %v858
    %v860 = vmul.f32 %v750, 1.442695
    %v861 = vpow.pop %v860
    %v862 = vmul.f32 %v751, 1.442695
    %v863 = vpow.pop %v862
    %v864 = vmul.f32 %v752, 1.442695
    %v865 = vpow.pop %v864
    %v866 = vmul.f32 %v753, 1.442695
    %v867 = vpow.pop %v866
    %v868 = vmul.f32 %v754, 1.442695
    %v869 = vpow.pop %v868
    %v870 = vmul.f32 %v755, 1.442695
    %v871 = vpow.pop %v870
    %v872 = vmul.f32 %v756, 1.442695
    %v873 = vpow.pop %v872
    %v874 = vmul.f32 %v757, 1.442695
    %v875 = vpow.pop %v874
    %v876 = vmul.f32 %v758, 1.442695
    %v877 = vpow.pop %v876
    %v878 = vmul.f32 %v759, 1.442695
    %v879 = vpow.pop %v878
    %v880 = vmul.f32 %v760, 1.442695
    %v881 = vpow.pop %v880
    %v882 = vmul.f32 %v761, 1.442695
    %v883 = vpow.pop %v882
    %v884 = vmul.f32 %v762, 1.442695
    %v885 = vpow.pop %v884
    %v886 = vmul.f32 %v763, 1.442695
    %v887 = vpow.pop %v886
    %v888 = vmul.f32 %v764, 1.442695
    %v889 = vpow.pop %v888
    %v890 = vmul.f32 %v765, 1.442695
    %v891 = vpow.pop %v890
    %v892 = vmul.f32 %v766, 1.442695
    %v893 = vpow.pop %v892
    %v894 = vmul.f32 %v767, 1.442695
    %v895 = vpow.pop %v894
    %v896 = vadd.f32 %v769, 1.0
    %v897 = vadd.f32 %v771, 1.0
    %v898 = vadd.f32 %v773, 1.0
    %v899 = vadd.f32 %v775, 1.0
    %v900 = vadd.f32 %v777, 1.0
    %v901 = vadd.f32 %v779, 1.0
    %v902 = vadd.f32 %v781, 1.0
    %v903 = vadd.f32 %v783, 1.0
    %v904 = vadd.f32 %v785, 1.0
    %v905 = vadd.f32 %v787, 1.0
    %v906 = vadd.f32 %v789, 1.0
    %v907 = vadd.f32 %v791, 1.0
    %v908 = vadd.f32 %v793, 1.0
    %v909 = vadd.f32 %v795, 1.0
    %v910 = vadd.f32 %v797, 1.0
    %v911 = vadd.f32 %v799, 1.0
    %v912 = vadd.f32 %v801, 1.0
    %v913 = vadd.f32 %v803, 1.0
    %v914 = vadd.f32 %v805, 1.0
    %v915 = vadd.f32 %v807, 1.0
    %v916 = vadd.f32 %v809, 1.0
    %v917 = vadd.f32 %v811, 1.0
    %v918 = vadd.f32 %v813, 1.0
    %v919 = vadd.f32 %v815, 1.0
    %v920 = vadd.f32 %v817, 1.0
    %v921 = vadd.f32 %v819, 1.0
    %v922 = vadd.f32 %v821, 1.0
    %v923 = vadd.f32 %v823, 1.0
    %v924 = vadd.f32 %v825, 1.0
    %v925 = vadd.f32 %v827, 1.0
    %v926 = vadd.f32 %v829, 1.0
    %v927 = vadd.f32 %v831, 1.0
    %v928 = vadd.f32 %v833, 1.0
    %v929 = vadd.f32 %v835, 1.0
    %v930 = vadd.f32 %v837, 1.0
    %v931 = vadd.f32 %v839, 1.0
    %v932 = vadd.f32 %v841, 1.0
    %v933 = vadd.f32 %v843, 1.0
    %v934 = vadd.f32 %v845, 1.0
    %v935 = vadd.f32 %v847, 1.0
    %v936 = vadd.f32 %v849, 1.0
    %v937 = vadd.f32 %v851, 1.0
    %v938 = vadd.f32 %v853, 1.0
    %v939 = vadd.f32 %v855, 1.0
    %v940 = vadd.f32 %v857, 1.0
    %v941 = vadd.f32 %v859, 1.0
    %v942 = vadd.f32 %v861, 1.0
    %v943 = vadd.f32 %v863, 1.0
    %v944 = vadd.f32 %v865, 1.0
    %v945 = vadd.f32 %v867, 1.0
    %v946 = vadd.f32 %v869, 1.0
    %v947 = vadd.f32 %v871, 1.0
    %v948 = vadd.f32 %v873, 1.0
    %v949 = vadd.f32 %v875, 1.0
    %v950 = vadd.f32 %v877, 1.0
    %v951 = vadd.f32 %v879, 1.0
    %v952 = vadd.f32 %v881, 1.0
    %v953 = vadd.f32 %v883, 1.0
    %v954 = vadd.f32 %v885, 1.0
    %v955 = vadd.f32 %v887, 1.0
    %v956 = vadd.f32 %v889, 1.0
    %v957 = vadd.f32 %v891, 1.0
    %v958 = vadd.f32 %v893, 1.0
    %v959 = vadd.f32 %v895, 1.0
    %v960 = vrcp.pop %v896
    %v961 = vmul.f32 1.0, %v960
    %v962 = vrcp.pop %v897
    %v963 = vmul.f32 1.0, %v962
    %v964 = vrcp.pop %v898
    %v965 = vmul.f32 1.0, %v964
    %v966 = vrcp.pop %v899
    %v967 = vmul.f32 1.0, %v966
    %v968 = vrcp.pop %v900
    %v969 = vmul.f32 1.0, %v968
    %v970 = vrcp.pop %v901
    %v971 = vmul.f32 1.0, %v970
    %v972 = vrcp.pop %v902
    %v973 = vmul.f32 1.0, %v972
    %v974 = vrcp.pop %v903
    %v975 = vmul.f32 1.0, %v974
    %v976 = vrcp.pop %v904
    %v977 = vmul.f32 1.0, %v976
    %v978 = vrcp.pop %v905
    %v979 = vmul.f32 1.0, %v978
    %v980 = vrcp.pop %v906
    %v981 = vmul.f32 1.0, %v980
    %v982 = vrcp.pop %v907
    %v983 = vmul.f32 1.0, %v982
    %v984 = vrcp.pop %v908
    %v985 = vmul.f32 1.0, %v984
    %v986 = vrcp.pop %v909
    %v987 = vmul.f32 1.0, %v986
    %v988 = vrcp.pop %v910
    %v989 = vmul.f32 1.0, %v988
    %v990 = vrcp.pop %v911
    %v991 = vmul.f32 1.0, %v990
    %v992 = vrcp.pop %v912
    %v993 = vmul.f32 1.0, %v992
    %v994 = vrcp.pop %v913
    %v995 = vmul.f32 1.0, %v994
    %v996 = vrcp.pop %v914
    %v997 = vmul.f32 1.0, %v996
    %v998 = vrcp.pop %v915
    %v999 = vmul.f32 1.0, %v998
    %v1000 = vrcp.pop %v916
    %v1001 = vmul.f32 1.0, %v1000
    %v1002 = vrcp.pop %v917
    %v1003 = vmul.f32 1.0, %v1002
    %v1004 = vrcp.pop %v918
    %v1005 = vmul.f32 1.0, %v1004
    %v1006 = vrcp.pop %v919
    %v1007 = vmul.f32 1.0, %v1006
    %v1008 = vrcp.pop %v920
    %v1009 = vmul.f32 1.0, %v1008
    %v1010 = vrcp.pop %v921
    %v1011 = vmul.f32 1.0, %v1010
    %v1012 = vrcp.pop %v922
    %v1013 = vmul.f32 1.0, %v1012
    %v1014 = vrcp.pop %v923
    %v1015 = vmul.f32 1.0, %v1014
    %v1016 = vrcp.pop %v924
    %v1017 = vmul.f32 1.0, %v1016
    %v1018 = vrcp.pop %v925
    %v1019 = vmul.f32 1.0, %v1018
    %v1020 = vrcp.pop %v926
    %v1021 = vmul.f32 1.0, %v1020
    %v1022 = vrcp.pop %v927
    %v1023 = vmul.f32 1.0, %v1022
    %v1024 = vrcp.pop %v928
    %v1025 = vmul.f32 1.0, %v1024
    %v1026 = vrcp.pop %v929
    %v1027 = vmul.f32 1.0, %v1026
    %v1028 = vrcp.pop %v930
    %v1029 = vmul.f32 1.0, %v1028
    %v1030 = vrcp.pop %v931
    %v1031 = vmul.f32 1.0, %v1030
    %v1032 = vrcp.pop %v932
    %v1033 = vmul.f32 1.0, %v1032
    %v1034 = vrcp.pop %v933
    %v1035 = vmul.f32 1.0, %v1034
    %v1036 = vrcp.pop %v934
    %v1037 = vmul.f32 1.0, %v1036
    %v1038 = vrcp.pop %v935
    %v1039 = vmul.f32 1.0, %v1038
    %v1040 = vrcp.pop %v936
    %v1041 = vmul.f32 1.0, %v1040
    %v1042 = vrcp.pop %v937
    %v1043 = vmul.f32 1.0, %v1042
    %v1044 = vrcp.pop %v938
    %v1045 = vmul.f32 1.0, %v1044
    %v1046 = vrcp.pop %v939
    %v1047 = vmul.f32 1.0, %v1046
    %v1048 = vrcp.pop %v940
    %v1049 = vmul.f32 1.0, %v1048
    %v1050 = vrcp.pop %v941
    %v1051 = vmul.f32 1.0, %v1050
    %v1052 = vrcp.pop %v942
    %v1053 = vmul.f32 1.0, %v1052
    %v1054 = vrcp.pop %v943
    %v1055 = vmul.f32 1.0, %v1054
    %v1056 = vrcp.pop %v944
    %v1057 = vmul.f32 1.0, %v1056
    %v1058 = vrcp.pop %v945
    %v1059 = vmul.f32 1.0, %v1058
    %v1060 = vrcp.pop %v946
    %v1061 = vmul.f32 1.0, %v1060
    %v1062 = vrcp.pop %v947
    %v1063 = vmul.f32 1.0, %v1062
    %v1064 = vrcp.pop %v948
    %v1065 = vmul.f32 1.0, %v1064
    %v1066 = vrcp.pop %v949
    %v1067 = vmul.f32 1.0, %v1066
    %v1068 = vrcp.pop %v950
    %v1069 = vmul.f32 1.0, %v1068
    %v1070 = vrcp.pop %v951
    %v1071 = vmul.f32 1.0, %v1070
    %v1072 = vrcp.pop %v952
    %v1073 = vmul.f32 1.0, %v1072
    %v1074 = vrcp.pop %v953
    %v1075 = vmul.f32 1.0, %v1074
    %v1076 = vrcp.pop %v954
    %v1077 = vmul.f32 1.0, %v1076
    %v1078 = vrcp.pop %v955
    %v1079 = vmul.f32 1.0, %v1078
    %v1080 = vrcp.pop %v956
    %v1081 = vmul.f32 1.0, %v1080
    %v1082 = vrcp.pop %v957
    %v1083 = vmul.f32 1.0, %v1082
    %v1084 = vrcp.pop %v958
    %v1085 = vmul.f32 1.0, %v1084
    %v1086 = vrcp.pop %v959
    %v1087 = vmul.f32 1.0, %v1086
    %v1088 = vmul.f32 %v450, %v961
    %v1089 = vmul.f32 %v453, %v963
    %v1090 = vmul.f32 %v458, %v965
    %v1091 = vmul.f32 %v461, %v967
    %v1092 = vmul.f32 %v466, %v969
    %v1093 = vmul.f32 %v469, %v971
    %v1094 = vmul.f32 %v474, %v973
    %v1095 = vmul.f32 %v477, %v975
    %v1096 = vmul.f32 %v482, %v977
    %v1097 = vmul.f32 %v485, %v979
    %v1098 = vmul.f32 %v490, %v981
    %v1099 = vmul.f32 %v493, %v983
    %v1100 = vmul.f32 %v498, %v985
    %v1101 = vmul.f32 %v501, %v987
    %v1102 = vmul.f32 %v506, %v989
    %v1103 = vmul.f32 %v509, %v991
    %v1104 = vmul.f32 %v514, %v993
    %v1105 = vmul.f32 %v517, %v995
    %v1106 = vmul.f32 %v522, %v997
    %v1107 = vmul.f32 %v525, %v999
    %v1108 = vmul.f32 %v530, %v1001
    %v1109 = vmul.f32 %v533, %v1003
    %v1110 = vmul.f32 %v538, %v1005
    %v1111 = vmul.f32 %v541, %v1007
    %v1112 = vmul.f32 %v546, %v1009
    %v1113 = vmul.f32 %v549, %v1011
    %v1114 = vmul.f32 %v554, %v1013
    %v1115 = vmul.f32 %v557, %v1015
    %v1116 = vmul.f32 %v562, %v1017
    %v1117 = vmul.f32 %v565, %v1019
    %v1118 = vmul.f32 %v570, %v1021
    %v1119 = vmul.f32 %v573, %v1023
    %v1120 = vmul.f32 %v578, %v1025
    %v1121 = vmul.f32 %v581, %v1027
    %v1122 = vmul.f32 %v586, %v1029
    %v1123 = vmul.f32 %v589, %v1031
    %v1124 = vmul.f32 %v594, %v1033
    %v1125 = vmul.f32 %v597, %v1035
    %v1126 = vmul.f32 %v602, %v1037
    %v1127 = vmul.f32 %v605, %v1039
    %v1128 = vmul.f32 %v610, %v1041
    %v1129 = vmul.f32 %v613, %v1043
    %v1130 = vmul.f32 %v618, %v1045
    %v1131 = vmul.f32 %v621, %v1047
    %v1132 = vmul.f32 %v626, %v1049
    %v1133 = vmul.f32 %v629, %v1051
    %v1134 = vmul.f32 %v634, %v1053
    %v1135 = vmul.f32 %v637, %v1055
    %v1136 = vmul.f32 %v642, %v1057
    %v1137 = vmul.f32 %v645, %v1059
    %v1138 = vmul.f32 %v650, %v1061
    %v1139 = vmul.f32 %v653, %v1063
    %v1140 = vmul.f32 %v658, %v1065
    %v1141 = vmul.f32 %v661, %v1067
    %v1142 = vmul.f32 %v666, %v1069
    %v1143 = vmul.f32 %v669, %v1071
    %v1144 = vmul.f32 %v674, %v1073
    %v1145 = vmul.f32 %v677, %v1075
    %v1146 = vmul.f32 %v682, %v1077
    %v1147 = vmul.f32 %v685, %v1079
    %v1148 = vmul.f32 %v690, %v1081
    %v1149 = vmul.f32 %v693, %v1083
    %v1150 = vmul.f32 %v698, %v1085
    %v1151 = vmul.f32 %v701, %v1087
    %1152 = vst.msk [vmem:[#allocation8] sm:$0xff] %vm318, %v1088
    %1153 = vst.msk [vmem:[#allocation8 + $0x8] sm:$0xff] %vm318, %v1089
    %1154 = vst.msk [vmem:[#allocation8 + $0x10] sm:$0xff] %vm318, %v1090
    %1155 = vst.msk [vmem:[#allocation8 + $0x18] sm:$0xff] %vm318, %v1091
    %1156 = vst.msk [vmem:[#allocation8 + $0x20] sm:$0xff] %vm318, %v1092
    %1157 = vst.msk [vmem:[#allocation8 + $0x28] sm:$0xff] %vm318, %v1093
    %1158 = vst.msk [vmem:[#allocation8 + $0x30] sm:$0xff] %vm318, %v1094
    %1159 = vst.msk [vmem:[#allocation8 + $0x38] sm:$0xff] %vm318, %v1095
    %1160 = vst.msk [vmem:[#allocation8 + $0x40] sm:$0xff] %vm318, %v1096
    %1161 = vst.msk [vmem:[#allocation8 + $0x48] sm:$0xff] %vm318, %v1097
    %1162 = vst.msk [vmem:[#allocation8 + $0x50] sm:$0xff] %vm318, %v1098
    %1163 = vst.msk [vmem:[#allocation8 + $0x58] sm:$0xff] %vm318, %v1099
    %1164 = vst.msk [vmem:[#allocation8 + $0x60] sm:$0xff] %vm318, %v1100
    %1165 = vst.msk [vmem:[#allocation8 + $0x68] sm:$0xff] %vm318, %v1101
    %1166 = vst.msk [vmem:[#allocation8 + $0x70] sm:$0xff] %vm318, %v1102
    %1167 = vst.msk [vmem:[#allocation8 + $0x78] sm:$0xff] %vm318, %v1103
    %1168 = vst.msk [vmem:[#allocation8 + $0x80] sm:$0xff] %vm318, %v1104
    %1169 = vst.msk [vmem:[#allocation8 + $0x88] sm:$0xff] %vm318, %v1105
    %1170 = vst.msk [vmem:[#allocation8 + $0x90] sm:$0xff] %vm318, %v1106
    %1171 = vst.msk [vmem:[#allocation8 + $0x98] sm:$0xff] %vm318, %v1107
    %1172 = vst.msk [vmem:[#allocation8 + $0xa0] sm:$0xff] %vm318, %v1108
    %1173 = vst.msk [vmem:[#allocation8 + $0xa8] sm:$0xff] %vm318, %v1109
    %1174 = vst.msk [vmem:[#allocation8 + $0xb0] sm:$0xff] %vm318, %v1110
    %1175 = vst.msk [vmem:[#allocation8 + $0xb8] sm:$0xff] %vm318, %v1111
    %1176 = vst.msk [vmem:[#allocation8 + $0xc0] sm:$0xff] %vm318, %v1112
    %1177 = vst.msk [vmem:[#allocation8 + $0xc8] sm:$0xff] %vm318, %v1113
    %1178 = vst.msk [vmem:[#allocation8 + $0xd0] sm:$0xff] %vm318, %v1114
    %1179 = vst.msk [vmem:[#allocation8 + $0xd8] sm:$0xff] %vm318, %v1115
    %1180 = vst.msk [vmem:[#allocation8 + $0xe0] sm:$0xff] %vm318, %v1116
    %1181 = vst.msk [vmem:[#allocation8 + $0xe8] sm:$0xff] %vm318, %v1117
    %1182 = vst.msk [vmem:[#allocation8 + $0xf0] sm:$0xff] %vm318, %v1118
    %1183 = vst.msk [vmem:[#allocation8 + $0xf8] sm:$0xff] %vm318, %v1119
    %1184 = vst.msk [vmem:[#allocation8 + $0x100] sm:$0xff] %vm318, %v1120
    %1185 = vst.msk [vmem:[#allocation8 + $0x108] sm:$0xff] %vm318, %v1121
    %1186 = vst.msk [vmem:[#allocation8 + $0x110] sm:$0xff] %vm318, %v1122
    %1187 = vst.msk [vmem:[#allocation8 + $0x118] sm:$0xff] %vm318, %v1123
    %1188 = vst.msk [vmem:[#allocation8 + $0x120] sm:$0xff] %vm318, %v1124
    %1189 = vst.msk [vmem:[#allocation8 + $0x128] sm:$0xff] %vm318, %v1125
    %1190 = vst.msk [vmem:[#allocation8 + $0x130] sm:$0xff] %vm318, %v1126
    %1191 = vst.msk [vmem:[#allocation8 + $0x138] sm:$0xff] %vm318, %v1127
    %1192 = vst.msk [vmem:[#allocation8 + $0x140] sm:$0xff] %vm318, %v1128
    %1193 = vst.msk [vmem:[#allocation8 + $0x148] sm:$0xff] %vm318, %v1129
    %1194 = vst.msk [vmem:[#allocation8 + $0x150] sm:$0xff] %vm318, %v1130
    %1195 = vst.msk [vmem:[#allocation8 + $0x158] sm:$0xff] %vm318, %v1131
    %1196 = vst.msk [vmem:[#allocation8 + $0x160] sm:$0xff] %vm318, %v1132
    %1197 = vst.msk [vmem:[#allocation8 + $0x168] sm:$0xff] %vm318, %v1133
    %1198 = vst.msk [vmem:[#allocation8 + $0x170] sm:$0xff] %vm318, %v1134
    %1199 = vst.msk [vmem:[#allocation8 + $0x178] sm:$0xff] %vm318, %v1135
    %1200 = vst.msk [vmem:[#allocation8 + $0x180] sm:$0xff] %vm318, %v1136
    %1201 = vst.msk [vmem:[#allocation8 + $0x188] sm:$0xff] %vm318, %v1137
    %1202 = vst.msk [vmem:[#allocation8 + $0x190] sm:$0xff] %vm318, %v1138
    %1203 = vst.msk [vmem:[#allocation8 + $0x198] sm:$0xff] %vm318, %v1139
    %1204 = vst.msk [vmem:[#allocation8 + $0x1a0] sm:$0xff] %vm318, %v1140
    %1205 = vst.msk [vmem:[#allocation8 + $0x1a8] sm:$0xff] %vm318, %v1141
    %1206 = vst.msk [vmem:[#allocation8 + $0x1b0] sm:$0xff] %vm318, %v1142
    %1207 = vst.msk [vmem:[#allocation8 + $0x1b8] sm:$0xff] %vm318, %v1143
    %1208 = vst.msk [vmem:[#allocation8 + $0x1c0] sm:$0xff] %vm318, %v1144
    %1209 = vst.msk [vmem:[#allocation8 + $0x1c8] sm:$0xff] %vm318, %v1145
    %1210 = vst.msk [vmem:[#allocation8 + $0x1d0] sm:$0xff] %vm318, %v1146
    %1211 = vst.msk [vmem:[#allocation8 + $0x1d8] sm:$0xff] %vm318, %v1147
    %1212 = vst.msk [vmem:[#allocation8 + $0x1e0] sm:$0xff] %vm318, %v1148
    %1213 = vst.msk [vmem:[#allocation8 + $0x1e8] sm:$0xff] %vm318, %v1149
    %1214 = vst.msk [vmem:[#allocation8 + $0x1f0] sm:$0xff] %vm318, %v1150
    %1215 = vst.msk [vmem:[#allocation8 + $0x1f8] sm:$0xff] %vm318, %v1151
    // Predicated region
    $region26: #{csp_layer_fwd.6} parent=1 // pred_check
      _
    $region27: #{csp_layer_fwd.6} parent=1 // pred_check_branch
      %1217 = sbr.rel (0) target = $region29
    $region28: #{csp_layer_fwd.6} parent=1 // pred_region
      %s1219 = ssub.s32 8192, 8192
      %1220 = vsyncadd [#allocation4], %s1219
      %s1221 = sshll.u32 [#allocation8], 4
      %s1222 = int_to_ptr.vmem [resolvable:$true] %s1221
      %1227 = dma.vmem_to_hbm [thread:$0]  %s1222, 8192, %s3, [#allocation4], 128, 128, 8
    $region29: #{csp_layer_fwd.6} parent=1 // pred_fallthru
      _
    // Predicated region
    $region30: #{csp_layer_fwd.6} parent=1 // pred_check
      _
    $region31: #{csp_layer_fwd.6} parent=1 // pred_check_branch
      %1229 = sbr.rel (0) target = $region33
    $region32: #{csp_layer_fwd.6} parent=1 // pred_region
      %1230 = dma.done [#allocation4], 8192
    $region33: #{csp_layer_fwd.6} parent=1 // pred_fallthru
      _
    %1231 = vsyncpa [#allocation3], 1
    %1232 = vsyncpa [#allocation6], 1
    %1233 = vsyncpa [#allocation4], 1

// kernel: csp_layer_fwd.7
$region0: #{csp_layer_fwd.7}
  #allocation0 [shape = 'u32[]', space=smem, size = 0x4, offset = 0x4, fixed_abs, tag = 'smem constant byte address 0x4 - core index']
  #allocation1 [shape = 'u32[144,128]{1,0:T(1,128)}', space=vmem, size = 0x12000, scoped, tag = 'internal scratch']
  %s0 = inlined_call_operand.hbm [shape: bf16[512,32], index: 0, kind: input, shape index: {}]
  %s1 = inlined_call_operand.hbm [shape: bf16[32,32], index: 1, kind: input, shape index: {}]
  %s2 = inlined_call_operand.hbm [shape: f32[1,32], index: 2, kind: input, shape index: {}]
  %s3 = inlined_call_operand.hbm [shape: f32[512,32], index: 3, kind: output, shape index: {}]
  %s4 = sld [smem:[#allocation0]]
  $region34: #{csp_layer_fwd.7} parent=0
    _
  %s6 = ssub.s32 1, %s4
  %s7 = scalar_select 0, %s6, %s4
  $region1: #{csp_layer_fwd.7} parent=0
    #allocation2 [shape = 'u8[131072]{0}', space=vmem, size = 0x20000, scoped, tag = 'input window, operand 0, single buffered']
    #allocation3 [shape = 's32[1]{0}', space=sflag, size = 0x4, scoped, tag = 'scoped memory for csp_layer_fwd.7']
    #allocation4 [shape = 's32[1]{0}', space=sflag, size = 0x4, scoped, tag = 'scoped memory for csp_layer_fwd.7']
    #allocation5 [shape = 'u8[8192]{0}', space=vmem, size = 0x2000, scoped, tag = 'input window, operand 1, single buffered']
    #allocation6 [shape = 's32[1]{0}', space=sflag, size = 0x4, scoped, tag = 'scoped memory for csp_layer_fwd.7']
    #allocation7 [shape = 'u8[512]{0}', space=vmem, size = 0x400, scoped, tag = 'input window, operand 2, single buffered']
    #allocation8 [shape = 'u8[262144]{0}', space=vmem, size = 0x40000, scoped, tag = 'output window, operand 0, single buffered']
    %8 = vsyncpa [#allocation3], 0
    %9 = vsyncpa [#allocation6], 0
    %10 = vsyncpa [#allocation4], 0
    // Predicated region
    $region2: #{csp_layer_fwd.7} parent=1 // pred_check
      _
    $region3: #{csp_layer_fwd.7} parent=1 // pred_check_branch
      %12 = sbr.rel (0) target = $region5
    $region4: #{csp_layer_fwd.7} parent=1 // pred_region
      %s14 = ssub.s32 4096, 4096
      %15 = vsyncadd [#allocation3], %s14
      %s16 = sshll.u32 [#allocation2], 4
      %s17 = int_to_ptr.vmem [resolvable:$true] %s16
      %22 = dma.hbm_to_vmem [thread:$0]  %s0, 4096, %s17, [#allocation3], 64, 64, 4
    $region5: #{csp_layer_fwd.7} parent=1 // pred_fallthru
      _
    // Predicated region
    $region6: #{csp_layer_fwd.7} parent=1 // pred_check
      _
    $region7: #{csp_layer_fwd.7} parent=1 // pred_check_branch
      %24 = sbr.rel (0) target = $region9
    $region8: #{csp_layer_fwd.7} parent=1 // pred_region
      %s26 = ssub.s32 256, 256
      %27 = vsyncadd [#allocation6], %s26
      %s28 = sshll.u32 [#allocation5], 4
      %s29 = int_to_ptr.vmem [resolvable:$true] %s28
      %34 = dma.hbm_to_vmem [thread:$0]  %s1, 256, %s29, [#allocation6], 64, 64, 4
    $region9: #{csp_layer_fwd.7} parent=1 // pred_fallthru
      _
    // Predicated region
    $region10: #{csp_layer_fwd.7} parent=1 // pred_check
      _
    $region11: #{csp_layer_fwd.7} parent=1 // pred_check_branch
      %36 = sbr.rel (0) target = $region13
    $region12: #{csp_layer_fwd.7} parent=1 // pred_region
      %s38 = ssub.s32 16, 16
      %39 = vsyncadd [#allocation6], %s38
      %s41 = sshll.u32 [#allocation7], 4
      %s42 = int_to_ptr.vmem [resolvable:$true] %s41
      %44 = dma.hbm_to_vmem [thread:$0]  %s2, 16, %s42, [#allocation6]
    $region13: #{csp_layer_fwd.7} parent=1 // pred_fallthru
      _
    // Predicated region
    $region14: #{csp_layer_fwd.7} parent=1 // pred_check
      _
    $region15: #{csp_layer_fwd.7} parent=1 // pred_check_branch
      %46 = sbr.rel (0) target = $region17
    $region16: #{csp_layer_fwd.7} parent=1 // pred_region
      %47 = dma.done [#allocation3], 4096
    $region17: #{csp_layer_fwd.7} parent=1 // pred_fallthru
      _
    // Predicated region
    $region18: #{csp_layer_fwd.7} parent=1 // pred_check
      _
    $region19: #{csp_layer_fwd.7} parent=1 // pred_check_branch
      %49 = sbr.rel (0) target = $region21
    $region20: #{csp_layer_fwd.7} parent=1 // pred_region
      %50 = dma.done [#allocation6], 256
    $region21: #{csp_layer_fwd.7} parent=1 // pred_fallthru
      _
    // Predicated region
    $region22: #{csp_layer_fwd.7} parent=1 // pred_check
      _
    $region23: #{csp_layer_fwd.7} parent=1 // pred_check_branch
      %52 = sbr.rel (0) target = $region25
    $region24: #{csp_layer_fwd.7} parent=1 // pred_region
      %53 = dma.done [#allocation6], 16
    $region25: #{csp_layer_fwd.7} parent=1 // pred_fallthru
      _
    %v55 = vld [vmem:[#allocation2] sm:$0xf]
    %v56 = vld [vmem:[#allocation2 + $0x4] sm:$0xf]
    %v57 = vld [vmem:[#allocation2 + $0x8] sm:$0xf]
    %v58 = vld [vmem:[#allocation2 + $0xc] sm:$0xf]
    %v59 = vld [vmem:[#allocation2 + $0x10] sm:$0xf]
    %v60 = vld [vmem:[#allocation2 + $0x14] sm:$0xf]
    %v61 = vld [vmem:[#allocation2 + $0x18] sm:$0xf]
    %v62 = vld [vmem:[#allocation2 + $0x1c] sm:$0xf]
    %v63 = vld [vmem:[#allocation2 + $0x20] sm:$0xf]
    %v64 = vld [vmem:[#allocation2 + $0x24] sm:$0xf]
    %v65 = vld [vmem:[#allocation2 + $0x28] sm:$0xf]
    %v66 = vld [vmem:[#allocation2 + $0x2c] sm:$0xf]
    %v67 = vld [vmem:[#allocation2 + $0x30] sm:$0xf]
    %v68 = vld [vmem:[#allocation2 + $0x34] sm:$0xf]
    %v69 = vld [vmem:[#allocation2 + $0x38] sm:$0xf]
    %v70 = vld [vmem:[#allocation2 + $0x3c] sm:$0xf]
    %v71 = vld [vmem:[#allocation2 + $0x40] sm:$0xf]
    %v72 = vld [vmem:[#allocation2 + $0x44] sm:$0xf]
    %v73 = vld [vmem:[#allocation2 + $0x48] sm:$0xf]
    %v74 = vld [vmem:[#allocation2 + $0x4c] sm:$0xf]
    %v75 = vld [vmem:[#allocation2 + $0x50] sm:$0xf]
    %v76 = vld [vmem:[#allocation2 + $0x54] sm:$0xf]
    %v77 = vld [vmem:[#allocation2 + $0x58] sm:$0xf]
    %v78 = vld [vmem:[#allocation2 + $0x5c] sm:$0xf]
    %v79 = vld [vmem:[#allocation2 + $0x60] sm:$0xf]
    %v80 = vld [vmem:[#allocation2 + $0x64] sm:$0xf]
    %v81 = vld [vmem:[#allocation2 + $0x68] sm:$0xf]
    %v82 = vld [vmem:[#allocation2 + $0x6c] sm:$0xf]
    %v83 = vld [vmem:[#allocation2 + $0x70] sm:$0xf]
    %v84 = vld [vmem:[#allocation2 + $0x74] sm:$0xf]
    %v85 = vld [vmem:[#allocation2 + $0x78] sm:$0xf]
    %v86 = vld [vmem:[#allocation2 + $0x7c] sm:$0xf]
    %v87 = vld [vmem:[#allocation2 + $0x80] sm:$0xf]
    %v88 = vld [vmem:[#allocation2 + $0x84] sm:$0xf]
    %v89 = vld [vmem:[#allocation2 + $0x88] sm:$0xf]
    %v90 = vld [vmem:[#allocation2 + $0x8c] sm:$0xf]
    %v91 = vld [vmem:[#allocation2 + $0x90] sm:$0xf]
    %v92 = vld [vmem:[#allocation2 + $0x94] sm:$0xf]
    %v93 = vld [vmem:[#allocation2 + $0x98] sm:$0xf]
    %v94 = vld [vmem:[#allocation2 + $0x9c] sm:$0xf]
    %v95 = vld [vmem:[#allocation2 + $0xa0] sm:$0xf]
    %v96 = vld [vmem:[#allocation2 + $0xa4] sm:$0xf]
    %v97 = vld [vmem:[#allocation2 + $0xa8] sm:$0xf]
    %v98 = vld [vmem:[#allocation2 + $0xac] sm:$0xf]
    %v99 = vld [vmem:[#allocation2 + $0xb0] sm:$0xf]
    %v100 = vld [vmem:[#allocation2 + $0xb4] sm:$0xf]
    %v101 = vld [vmem:[#allocation2 + $0xb8] sm:$0xf]
    %v102 = vld [vmem:[#allocation2 + $0xbc] sm:$0xf]
    %v103 = vld [vmem:[#allocation2 + $0xc0] sm:$0xf]
    %v104 = vld [vmem:[#allocation2 + $0xc4] sm:$0xf]
    %v105 = vld [vmem:[#allocation2 + $0xc8] sm:$0xf]
    %v106 = vld [vmem:[#allocation2 + $0xcc] sm:$0xf]
    %v107 = vld [vmem:[#allocation2 + $0xd0] sm:$0xf]
    %v108 = vld [vmem:[#allocation2 + $0xd4] sm:$0xf]
    %v109 = vld [vmem:[#allocation2 + $0xd8] sm:$0xf]
    %v110 = vld [vmem:[#allocation2 + $0xdc] sm:$0xf]
    %v111 = vld [vmem:[#allocation2 + $0xe0] sm:$0xf]
    %v112 = vld [vmem:[#allocation2 + $0xe4] sm:$0xf]
    %v113 = vld [vmem:[#allocation2 + $0xe8] sm:$0xf]
    %v114 = vld [vmem:[#allocation2 + $0xec] sm:$0xf]
    %v115 = vld [vmem:[#allocation2 + $0xf0] sm:$0xf]
    %v116 = vld [vmem:[#allocation2 + $0xf4] sm:$0xf]
    %v117 = vld [vmem:[#allocation2 + $0xf8] sm:$0xf]
    %v118 = vld [vmem:[#allocation2 + $0xfc] sm:$0xf]
    %v119 = vld [vmem:[#allocation5] sm:$0xf]
    %v120 = vld [vmem:[#allocation5 + $0x4] sm:$0xf]
    %v121 = vld [vmem:[#allocation5 + $0x8] sm:$0xf]
    %v122 = vld [vmem:[#allocation5 + $0xc] sm:$0xf]
    %v123 = vld [vmem:[#allocation7] sm:$0x1]
    %v125 = vlaneseq
    %v126 = vshrl.u32 %v125, 7
    %v127 = vsub.s32 0, %v126
    %v128 = vrot.slane %v123, %v127
    %v194 = vunpack.c.l.b16 %v55
    %v195 = vunpack.c.l.b16 %v56
    %v196 = vunpack.c.l.b16 %v57
    %v197 = vunpack.c.l.b16 %v58
    %v198 = vunpack.c.l.b16 %v59
    %v199 = vunpack.c.l.b16 %v60
    %v200 = vunpack.c.l.b16 %v61
    %v201 = vunpack.c.l.b16 %v62
    %v202 = vunpack.c.l.b16 %v63
    %v203 = vunpack.c.l.b16 %v64
    %v204 = vunpack.c.l.b16 %v65
    %v205 = vunpack.c.l.b16 %v66
    %v206 = vunpack.c.l.b16 %v67
    %v207 = vunpack.c.l.b16 %v68
    %v208 = vunpack.c.l.b16 %v69
    %v209 = vunpack.c.l.b16 %v70
    %v210 = vunpack.c.l.b16 %v71
    %v211 = vunpack.c.l.b16 %v72
    %v212 = vunpack.c.l.b16 %v73
    %v213 = vunpack.c.l.b16 %v74
    %v214 = vunpack.c.l.b16 %v75
    %v215 = vunpack.c.l.b16 %v76
    %v216 = vunpack.c.l.b16 %v77
    %v217 = vunpack.c.l.b16 %v78
    %v218 = vunpack.c.l.b16 %v79
    %v219 = vunpack.c.l.b16 %v80
    %v220 = vunpack.c.l.b16 %v81
    %v221 = vunpack.c.l.b16 %v82
    %v222 = vunpack.c.l.b16 %v83
    %v223 = vunpack.c.l.b16 %v84
    %v224 = vunpack.c.l.b16 %v85
    %v225 = vunpack.c.l.b16 %v86
    %v226 = vunpack.c.l.b16 %v87
    %v227 = vunpack.c.l.b16 %v88
    %v228 = vunpack.c.l.b16 %v89
    %v229 = vunpack.c.l.b16 %v90
    %v230 = vunpack.c.l.b16 %v91
    %v231 = vunpack.c.l.b16 %v92
    %v232 = vunpack.c.l.b16 %v93
    %v233 = vunpack.c.l.b16 %v94
    %v234 = vunpack.c.l.b16 %v95
    %v235 = vunpack.c.l.b16 %v96
    %v236 = vunpack.c.l.b16 %v97
    %v237 = vunpack.c.l.b16 %v98
    %v238 = vunpack.c.l.b16 %v99
    %v239 = vunpack.c.l.b16 %v100
    %v240 = vunpack.c.l.b16 %v101
    %v241 = vunpack.c.l.b16 %v102
    %v242 = vunpack.c.l.b16 %v103
    %v243 = vunpack.c.l.b16 %v104
    %v244 = vunpack.c.l.b16 %v105
    %v245 = vunpack.c.l.b16 %v106
    %v246 = vunpack.c.l.b16 %v107
    %v247 = vunpack.c.l.b16 %v108
    %v248 = vunpack.c.l.b16 %v109
    %v249 = vunpack.c.l.b16 %v110
    %v250 = vunpack.c.l.b16 %v111
    %v251 = vunpack.c.l.b16 %v112
    %v252 = vunpack.c.l.b16 %v113
    %v253 = vunpack.c.l.b16 %v114
    %v254 = vunpack.c.l.b16 %v115
    %v255 = vunpack.c.l.b16 %v116
    %v256 = vunpack.c.l.b16 %v117
    %v257 = vunpack.c.l.b16 %v118
    %v258 = vpack.c.b16 %v195, %v194
    %v259 = vpack.c.b16 %v197, %v196
    %v260 = vpack.c.b16 %v199, %v198
    %v261 = vpack.c.b16 %v201, %v200
    %v262 = vpack.c.b16 %v203, %v202
    %v263 = vpack.c.b16 %v205, %v204
    %v264 = vpack.c.b16 %v207, %v206
    %v265 = vpack.c.b16 %v209, %v208
    %v266 = vpack.c.b16 %v211, %v210
    %v267 = vpack.c.b16 %v213, %v212
    %v268 = vpack.c.b16 %v215, %v214
    %v269 = vpack.c.b16 %v217, %v216
    %v270 = vpack.c.b16 %v219, %v218
    %v271 = vpack.c.b16 %v221, %v220
    %v272 = vpack.c.b16 %v223, %v222
    %v273 = vpack.c.b16 %v225, %v224
    %v274 = vpack.c.b16 %v227, %v226
    %v275 = vpack.c.b16 %v229, %v228
    %v276 = vpack.c.b16 %v231, %v230
    %v277 = vpack.c.b16 %v233, %v232
    %v278 = vpack.c.b16 %v235, %v234
    %v279 = vpack.c.b16 %v237, %v236
    %v280 = vpack.c.b16 %v239, %v238
    %v281 = vpack.c.b16 %v241, %v240
    %v282 = vpack.c.b16 %v243, %v242
    %v283 = vpack.c.b16 %v245, %v244
    %v284 = vpack.c.b16 %v247, %v246
    %v285 = vpack.c.b16 %v249, %v248
    %v286 = vpack.c.b16 %v251, %v250
    %v287 = vpack.c.b16 %v253, %v252
    %v288 = vpack.c.b16 %v255, %v254
    %v289 = vpack.c.b16 %v257, %v256
    %v294 = vunpack.c.l.b16 %v119
    %v295 = vunpack.c.l.b16 %v120
    %v296 = vunpack.c.l.b16 %v121
    %v297 = vunpack.c.l.b16 %v122
    %v298 = vpack.c.b16 %v295, %v294
    %v299 = vpack.c.b16 %v297, %v296
    %vm302 = vcmask 261120
    %v304 = vsel %vm302, %v258, 0
    %v307 = vsel %vm302, %v259, 0
    %v310 = vsel %vm302, %v260, 0
    %v313 = vsel %vm302, %v261, 0
    %v316 = vsel %vm302, %v262, 0
    %v319 = vsel %vm302, %v263, 0
    %v322 = vsel %vm302, %v264, 0
    %v325 = vsel %vm302, %v265, 0
    %v328 = vsel %vm302, %v266, 0
    %v331 = vsel %vm302, %v267, 0
    %v334 = vsel %vm302, %v268, 0
    %v337 = vsel %vm302, %v269, 0
    %v340 = vsel %vm302, %v270, 0
    %v343 = vsel %vm302, %v271, 0
    %v346 = vsel %vm302, %v272, 0
    %v349 = vsel %vm302, %v273, 0
    %v352 = vsel %vm302, %v274, 0
    %v355 = vsel %vm302, %v275, 0
    %v358 = vsel %vm302, %v276, 0
    %v361 = vsel %vm302, %v277, 0
    %v364 = vsel %vm302, %v278, 0
    %v367 = vsel %vm302, %v279, 0
    %v370 = vsel %vm302, %v280, 0
    %v373 = vsel %vm302, %v281, 0
    %v376 = vsel %vm302, %v282, 0
    %v379 = vsel %vm302, %v283, 0
    %v382 = vsel %vm302, %v284, 0
    %v385 = vsel %vm302, %v285, 0
    %v388 = vsel %vm302, %v286, 0
    %v391 = vsel %vm302, %v287, 0
    %v394 = vsel %vm302, %v288, 0
    %v397 = vsel %vm302, %v289, 0
    %399 = vmatprep.subr.bf16.mxu0 0
    %400 = vmatpush1.bf16.msra.mxu0 %v298
    %401 = vmatprep.subr.bf16.mxu0 0
    %402 = vmatpush1.bf16.msra.mxu0 %v299
    %403 = vmatprep.subr.bf16.mxu0 0
    %404 = vmatpush1.bf16.msra.mxu0 0
    %405 = vmatprep.subr.bf16.mxu0 0
    %406 = vmatpush1.bf16.msra.mxu0 0
    %407 = vmatprep.subr.bf16.mxu0 0
    %408 = vmatpush1.bf16.msra.mxu0 0
    %409 = vmatprep.subr.bf16.mxu0 0
    %410 = vmatpush1.bf16.msra.mxu0 0
    %411 = vmatprep.subr.bf16.mxu0 0
    %412 = vmatpush1.bf16.msra.mxu0 0
    %413 = vmatprep.subr.bf16.mxu0 0
    %414 = vmatpush1.bf16.msra.mxu0 0
    %415 = vmatprep.subr.bf16.mxu0 0
    %416 = vmatpush1.bf16.msra.mxu0 0
    %417 = vmatprep.subr.bf16.mxu0 0
    %418 = vmatpush1.bf16.msra.mxu0 0
    %419 = vmatprep.subr.bf16.mxu0 0
    %420 = vmatpush1.bf16.msra.mxu0 0
    %421 = vmatprep.subr.bf16.mxu0 0
    %422 = vmatpush1.bf16.msra.mxu0 0
    %423 = vmatprep.subr.bf16.mxu0 0
    %424 = vmatpush1.bf16.msra.mxu0 0
    %425 = vmatprep.subr.bf16.mxu0 0
    %426 = vmatpush1.bf16.msra.mxu0 0
    %427 = vmatprep.subr.bf16.mxu0 0
    %428 = vmatpush1.bf16.msra.mxu0 0
    %429 = vmatprep.subr.bf16.mxu0 0
    %430 = vmatpush1.bf16.msra.mxu0 0
    %431 = vmatprep.mubr.bf16.mxu0 0
    %432 = vmatmul.mubr.bf16.gmra.mrb[0].mxu0 %v304
    %v433 = vpop.f32.mrb[0].mxu0
    %v434 = vadd.f32 %v128, %v433
    %v435 = vpop.f32.mrb[0].mxu0
    %v436 = vpop.f32.mrb[0].mxu0
    %v437 = vadd.f32 %v128, %v436
    %v438 = vpop.f32.mrb[0].mxu0
    %439 = vmatprep.mubr.bf16.mxu0 0
    %440 = vmatmul.mubr.bf16.gmra.mrb[0].mxu0 %v307
    %v441 = vpop.f32.mrb[0].mxu0
    %v442 = vadd.f32 %v128, %v441
    %v443 = vpop.f32.mrb[0].mxu0
    %v444 = vpop.f32.mrb[0].mxu0
    %v445 = vadd.f32 %v128, %v444
    %v446 = vpop.f32.mrb[0].mxu0
    %447 = vmatprep.mubr.bf16.mxu0 0
    %448 = vmatmul.mubr.bf16.gmra.mrb[0].mxu0 %v310
    %v449 = vpop.f32.mrb[0].mxu0
    %v450 = vadd.f32 %v128, %v449
    %v451 = vpop.f32.mrb[0].mxu0
    %v452 = vpop.f32.mrb[0].mxu0
    %v453 = vadd.f32 %v128, %v452
    %v454 = vpop.f32.mrb[0].mxu0
    %455 = vmatprep.mubr.bf16.mxu0 0
    %456 = vmatmul.mubr.bf16.gmra.mrb[0].mxu0 %v313
    %v457 = vpop.f32.mrb[0].mxu0
    %v458 = vadd.f32 %v128, %v457
    %v459 = vpop.f32.mrb[0].mxu0
    %v460 = vpop.f32.mrb[0].mxu0
    %v461 = vadd.f32 %v128, %v460
    %v462 = vpop.f32.mrb[0].mxu0
    %463 = vmatprep.mubr.bf16.mxu0 0
    %464 = vmatmul.mubr.bf16.gmra.mrb[0].mxu0 %v316
    %v465 = vpop.f32.mrb[0].mxu0
    %v466 = vadd.f32 %v128, %v465
    %v467 = vpop.f32.mrb[0].mxu0
    %v468 = vpop.f32.mrb[0].mxu0
    %v469 = vadd.f32 %v128, %v468
    %v470 = vpop.f32.mrb[0].mxu0
    %471 = vmatprep.mubr.bf16.mxu0 0
    %472 = vmatmul.mubr.bf16.gmra.mrb[0].mxu0 %v319
    %v473 = vpop.f32.mrb[0].mxu0
    %v474 = vadd.f32 %v128, %v473
    %v475 = vpop.f32.mrb[0].mxu0
    %v476 = vpop.f32.mrb[0].mxu0
    %v477 = vadd.f32 %v128, %v476
    %v478 = vpop.f32.mrb[0].mxu0
    %479 = vmatprep.mubr.bf16.mxu0 0
    %480 = vmatmul.mubr.bf16.gmra.mrb[0].mxu0 %v322
    %v481 = vpop.f32.mrb[0].mxu0
    %v482 = vadd.f32 %v128, %v481
    %v483 = vpop.f32.mrb[0].mxu0
    %v484 = vpop.f32.mrb[0].mxu0
    %v485 = vadd.f32 %v128, %v484
    %v486 = vpop.f32.mrb[0].mxu0
    %487 = vmatprep.mubr.bf16.mxu0 0
    %488 = vmatmul.mubr.bf16.gmra.mrb[0].mxu0 %v325
    %v489 = vpop.f32.mrb[0].mxu0
    %v490 = vadd.f32 %v128, %v489
    %v491 = vpop.f32.mrb[0].mxu0
    %v492 = vpop.f32.mrb[0].mxu0
    %v493 = vadd.f32 %v128, %v492
    %v494 = vpop.f32.mrb[0].mxu0
    %495 = vmatprep.mubr.bf16.mxu0 0
    %496 = vmatmul.mubr.bf16.gmra.mrb[0].mxu0 %v328
    %v497 = vpop.f32.mrb[0].mxu0
    %v498 = vadd.f32 %v128, %v497
    %v499 = vpop.f32.mrb[0].mxu0
    %v500 = vpop.f32.mrb[0].mxu0
    %v501 = vadd.f32 %v128, %v500
    %v502 = vpop.f32.mrb[0].mxu0
    %503 = vmatprep.mubr.bf16.mxu0 0
    %504 = vmatmul.mubr.bf16.gmra.mrb[0].mxu0 %v331
    %v505 = vpop.f32.mrb[0].mxu0
    %v506 = vadd.f32 %v128, %v505
    %v507 = vpop.f32.mrb[0].mxu0
    %v508 = vpop.f32.mrb[0].mxu0
    %v509 = vadd.f32 %v128, %v508
    %v510 = vpop.f32.mrb[0].mxu0
    %511 = vmatprep.mubr.bf16.mxu0 0
    %512 = vmatmul.mubr.bf16.gmra.mrb[0].mxu0 %v334
    %v513 = vpop.f32.mrb[0].mxu0
    %v514 = vadd.f32 %v128, %v513
    %v515 = vpop.f32.mrb[0].mxu0
    %v516 = vpop.f32.mrb[0].mxu0
    %v517 = vadd.f32 %v128, %v516
    %v518 = vpop.f32.mrb[0].mxu0
    %519 = vmatprep.mubr.bf16.mxu0 0
    %520 = vmatmul.mubr.bf16.gmra.mrb[0].mxu0 %v337
    %v521 = vpop.f32.mrb[0].mxu0
    %v522 = vadd.f32 %v128, %v521
    %v523 = vpop.f32.mrb[0].mxu0
    %v524 = vpop.f32.mrb[0].mxu0
    %v525 = vadd.f32 %v128, %v524
    %v526 = vpop.f32.mrb[0].mxu0
    %527 = vmatprep.mubr.bf16.mxu0 0
    %528 = vmatmul.mubr.bf16.gmra.mrb[0].mxu0 %v340
    %v529 = vpop.f32.mrb[0].mxu0
    %v530 = vadd.f32 %v128, %v529
    %v531 = vpop.f32.mrb[0].mxu0
    %v532 = vpop.f32.mrb[0].mxu0
    %v533 = vadd.f32 %v128, %v532
    %v534 = vpop.f32.mrb[0].mxu0
    %535 = vmatprep.mubr.bf16.mxu0 0
    %536 = vmatmul.mubr.bf16.gmra.mrb[0].mxu0 %v343
    %v537 = vpop.f32.mrb[0].mxu0
    %v538 = vadd.f32 %v128, %v537
    %v539 = vpop.f32.mrb[0].mxu0
    %v540 = vpop.f32.mrb[0].mxu0
    %v541 = vadd.f32 %v128, %v540
    %v542 = vpop.f32.mrb[0].mxu0
    %543 = vmatprep.mubr.bf16.mxu0 0
    %544 = vmatmul.mubr.bf16.gmra.mrb[0].mxu0 %v346
    %v545 = vpop.f32.mrb[0].mxu0
    %v546 = vadd.f32 %v128, %v545
    %v547 = vpop.f32.mrb[0].mxu0
    %v548 = vpop.f32.mrb[0].mxu0
    %v549 = vadd.f32 %v128, %v548
    %v550 = vpop.f32.mrb[0].mxu0
    %551 = vmatprep.mubr.bf16.mxu0 0
    %552 = vmatmul.mubr.bf16.gmra.mrb[0].mxu0 %v349
    %v553 = vpop.f32.mrb[0].mxu0
    %v554 = vadd.f32 %v128, %v553
    %v555 = vpop.f32.mrb[0].mxu0
    %v556 = vpop.f32.mrb[0].mxu0
    %v557 = vadd.f32 %v128, %v556
    %v558 = vpop.f32.mrb[0].mxu0
    %559 = vmatprep.mubr.bf16.mxu0 0
    %560 = vmatmul.mubr.bf16.gmra.mrb[0].mxu0 %v352
    %v561 = vpop.f32.mrb[0].mxu0
    %v562 = vadd.f32 %v128, %v561
    %v563 = vpop.f32.mrb[0].mxu0
    %v564 = vpop.f32.mrb[0].mxu0
    %v565 = vadd.f32 %v128, %v564
    %v566 = vpop.f32.mrb[0].mxu0
    %567 = vmatprep.mubr.bf16.mxu0 0
    %568 = vmatmul.mubr.bf16.gmra.mrb[0].mxu0 %v355
    %v569 = vpop.f32.mrb[0].mxu0
    %v570 = vadd.f32 %v128, %v569
    %v571 = vpop.f32.mrb[0].mxu0
    %v572 = vpop.f32.mrb[0].mxu0
    %v573 = vadd.f32 %v128, %v572
    %v574 = vpop.f32.mrb[0].mxu0
    %575 = vmatprep.mubr.bf16.mxu0 0
    %576 = vmatmul.mubr.bf16.gmra.mrb[0].mxu0 %v358
    %v577 = vpop.f32.mrb[0].mxu0
    %v578 = vadd.f32 %v128, %v577
    %v579 = vpop.f32.mrb[0].mxu0
    %v580 = vpop.f32.mrb[0].mxu0
    %v581 = vadd.f32 %v128, %v580
    %v582 = vpop.f32.mrb[0].mxu0
    %583 = vmatprep.mubr.bf16.mxu0 0
    %584 = vmatmul.mubr.bf16.gmra.mrb[0].mxu0 %v361
    %v585 = vpop.f32.mrb[0].mxu0
    %v586 = vadd.f32 %v128, %v585
    %v587 = vpop.f32.mrb[0].mxu0
    %v588 = vpop.f32.mrb[0].mxu0
    %v589 = vadd.f32 %v128, %v588
    %v590 = vpop.f32.mrb[0].mxu0
    %591 = vmatprep.mubr.bf16.mxu0 0
    %592 = vmatmul.mubr.bf16.gmra.mrb[0].mxu0 %v364
    %v593 = vpop.f32.mrb[0].mxu0
    %v594 = vadd.f32 %v128, %v593
    %v595 = vpop.f32.mrb[0].mxu0
    %v596 = vpop.f32.mrb[0].mxu0
    %v597 = vadd.f32 %v128, %v596
    %v598 = vpop.f32.mrb[0].mxu0
    %599 = vmatprep.mubr.bf16.mxu0 0
    %600 = vmatmul.mubr.bf16.gmra.mrb[0].mxu0 %v367
    %v601 = vpop.f32.mrb[0].mxu0
    %v602 = vadd.f32 %v128, %v601
    %v603 = vpop.f32.mrb[0].mxu0
    %v604 = vpop.f32.mrb[0].mxu0
    %v605 = vadd.f32 %v128, %v604
    %v606 = vpop.f32.mrb[0].mxu0
    %607 = vmatprep.mubr.bf16.mxu0 0
    %608 = vmatmul.mubr.bf16.gmra.mrb[0].mxu0 %v370
    %v609 = vpop.f32.mrb[0].mxu0
    %v610 = vadd.f32 %v128, %v609
    %v611 = vpop.f32.mrb[0].mxu0
    %v612 = vpop.f32.mrb[0].mxu0
    %v613 = vadd.f32 %v128, %v612
    %v614 = vpop.f32.mrb[0].mxu0
    %615 = vmatprep.mubr.bf16.mxu0 0
    %616 = vmatmul.mubr.bf16.gmra.mrb[0].mxu0 %v373
    %v617 = vpop.f32.mrb[0].mxu0
    %v618 = vadd.f32 %v128, %v617
    %v619 = vpop.f32.mrb[0].mxu0
    %v620 = vpop.f32.mrb[0].mxu0
    %v621 = vadd.f32 %v128, %v620
    %v622 = vpop.f32.mrb[0].mxu0
    %623 = vmatprep.mubr.bf16.mxu0 0
    %624 = vmatmul.mubr.bf16.gmra.mrb[0].mxu0 %v376
    %v625 = vpop.f32.mrb[0].mxu0
    %v626 = vadd.f32 %v128, %v625
    %v627 = vpop.f32.mrb[0].mxu0
    %v628 = vpop.f32.mrb[0].mxu0
    %v629 = vadd.f32 %v128, %v628
    %v630 = vpop.f32.mrb[0].mxu0
    %631 = vmatprep.mubr.bf16.mxu0 0
    %632 = vmatmul.mubr.bf16.gmra.mrb[0].mxu0 %v379
    %v633 = vpop.f32.mrb[0].mxu0
    %v634 = vadd.f32 %v128, %v633
    %v635 = vpop.f32.mrb[0].mxu0
    %v636 = vpop.f32.mrb[0].mxu0
    %v637 = vadd.f32 %v128, %v636
    %v638 = vpop.f32.mrb[0].mxu0
    %639 = vmatprep.mubr.bf16.mxu0 0
    %640 = vmatmul.mubr.bf16.gmra.mrb[0].mxu0 %v382
    %v641 = vpop.f32.mrb[0].mxu0
    %v642 = vadd.f32 %v128, %v641
    %v643 = vpop.f32.mrb[0].mxu0
    %v644 = vpop.f32.mrb[0].mxu0
    %v645 = vadd.f32 %v128, %v644
    %v646 = vpop.f32.mrb[0].mxu0
    %647 = vmatprep.mubr.bf16.mxu0 0
    %648 = vmatmul.mubr.bf16.gmra.mrb[0].mxu0 %v385
    %v649 = vpop.f32.mrb[0].mxu0
    %v650 = vadd.f32 %v128, %v649
    %v651 = vpop.f32.mrb[0].mxu0
    %v652 = vpop.f32.mrb[0].mxu0
    %v653 = vadd.f32 %v128, %v652
    %v654 = vpop.f32.mrb[0].mxu0
    %655 = vmatprep.mubr.bf16.mxu0 0
    %656 = vmatmul.mubr.bf16.gmra.mrb[0].mxu0 %v388
    %v657 = vpop.f32.mrb[0].mxu0
    %v658 = vadd.f32 %v128, %v657
    %v659 = vpop.f32.mrb[0].mxu0
    %v660 = vpop.f32.mrb[0].mxu0
    %v661 = vadd.f32 %v128, %v660
    %v662 = vpop.f32.mrb[0].mxu0
    %663 = vmatprep.mubr.bf16.mxu0 0
    %664 = vmatmul.mubr.bf16.gmra.mrb[0].mxu0 %v391
    %v665 = vpop.f32.mrb[0].mxu0
    %v666 = vadd.f32 %v128, %v665
    %v667 = vpop.f32.mrb[0].mxu0
    %v668 = vpop.f32.mrb[0].mxu0
    %v669 = vadd.f32 %v128, %v668
    %v670 = vpop.f32.mrb[0].mxu0
    %671 = vmatprep.mubr.bf16.mxu0 0
    %672 = vmatmul.mubr.bf16.gmra.mrb[0].mxu0 %v394
    %v673 = vpop.f32.mrb[0].mxu0
    %v674 = vadd.f32 %v128, %v673
    %v675 = vpop.f32.mrb[0].mxu0
    %v676 = vpop.f32.mrb[0].mxu0
    %v677 = vadd.f32 %v128, %v676
    %v678 = vpop.f32.mrb[0].mxu0
    %679 = vmatprep.mubr.bf16.mxu0 0
    %680 = vmatmul.mubr.bf16.gmra.mrb[0].mxu0 %v397
    %v681 = vpop.f32.mrb[0].mxu0
    %v682 = vadd.f32 %v128, %v681
    %v683 = vpop.f32.mrb[0].mxu0
    %v684 = vpop.f32.mrb[0].mxu0
    %v685 = vadd.f32 %v128, %v684
    %v686 = vpop.f32.mrb[0].mxu0
    %687 = vdwg.mxu0
    %v688 = vxor.u32 %v434, 2147483648
    %v689 = vxor.u32 %v437, 2147483648
    %v690 = vxor.u32 %v442, 2147483648
    %v691 = vxor.u32 %v445, 2147483648
    %v692 = vxor.u32 %v450, 2147483648
    %v693 = vxor.u32 %v453, 2147483648
    %v694 = vxor.u32 %v458, 2147483648
    %v695 = vxor.u32 %v461, 2147483648
    %v696 = vxor.u32 %v466, 2147483648
    %v697 = vxor.u32 %v469, 2147483648
    %v698 = vxor.u32 %v474, 2147483648
    %v699 = vxor.u32 %v477, 2147483648
    %v700 = vxor.u32 %v482, 2147483648
    %v701 = vxor.u32 %v485, 2147483648
    %v702 = vxor.u32 %v490, 2147483648
    %v703 = vxor.u32 %v493, 2147483648
    %v704 = vxor.u32 %v498, 2147483648
    %v705 = vxor.u32 %v501, 2147483648
    %v706 = vxor.u32 %v506, 2147483648
    %v707 = vxor.u32 %v509, 2147483648
    %v708 = vxor.u32 %v514, 2147483648
    %v709 = vxor.u32 %v517, 2147483648
    %v710 = vxor.u32 %v522, 2147483648
    %v711 = vxor.u32 %v525, 2147483648
    %v712 = vxor.u32 %v530, 2147483648
    %v713 = vxor.u32 %v533, 2147483648
    %v714 = vxor.u32 %v538, 2147483648
    %v715 = vxor.u32 %v541, 2147483648
    %v716 = vxor.u32 %v546, 2147483648
    %v717 = vxor.u32 %v549, 2147483648
    %v718 = vxor.u32 %v554, 2147483648
    %v719 = vxor.u32 %v557, 2147483648
    %v720 = vxor.u32 %v562, 2147483648
    %v721 = vxor.u32 %v565, 2147483648
    %v722 = vxor.u32 %v570, 2147483648
    %v723 = vxor.u32 %v573, 2147483648
    %v724 = vxor.u32 %v578, 2147483648
    %v725 = vxor.u32 %v581, 2147483648
    %v726 = vxor.u32 %v586, 2147483648
    %v727 = vxor.u32 %v589, 2147483648
    %v728 = vxor.u32 %v594, 2147483648
    %v729 = vxor.u32 %v597, 2147483648
    %v730 = vxor.u32 %v602, 2147483648
    %v731 = vxor.u32 %v605, 2147483648
    %v732 = vxor.u32 %v610, 2147483648
    %v733 = vxor.u32 %v613, 2147483648
    %v734 = vxor.u32 %v618, 2147483648
    %v735 = vxor.u32 %v621, 2147483648
    %v736 = vxor.u32 %v626, 2147483648
    %v737 = vxor.u32 %v629, 2147483648
    %v738 = vxor.u32 %v634, 2147483648
    %v739 = vxor.u32 %v637, 2147483648
    %v740 = vxor.u32 %v642, 2147483648
    %v741 = vxor.u32 %v645, 2147483648
    %v742 = vxor.u32 %v650, 2147483648
    %v743 = vxor.u32 %v653, 2147483648
    %v744 = vxor.u32 %v658, 2147483648
    %v745 = vxor.u32 %v661, 2147483648
    %v746 = vxor.u32 %v666, 2147483648
    %v747 = vxor.u32 %v669, 2147483648
    %v748 = vxor.u32 %v674, 2147483648
    %v749 = vxor.u32 %v677, 2147483648
    %v750 = vxor.u32 %v682, 2147483648
    %v751 = vxor.u32 %v685, 2147483648
    %v752 = vmul.f32 %v688, 1.442695
    %v753 = vpow.pop %v752
    %v754 = vmul.f32 %v689, 1.442695
    %v755 = vpow.pop %v754
    %v756 = vmul.f32 %v690, 1.442695
    %v757 = vpow.pop %v756
    %v758 = vmul.f32 %v691, 1.442695
    %v759 = vpow.pop %v758
    %v760 = vmul.f32 %v692, 1.442695
    %v761 = vpow.pop %v760
    %v762 = vmul.f32 %v693, 1.442695
    %v763 = vpow.pop %v762
    %v764 = vmul.f32 %v694, 1.442695
    %v765 = vpow.pop %v764
    %v766 = vmul.f32 %v695, 1.442695
    %v767 = vpow.pop %v766
    %v768 = vmul.f32 %v696, 1.442695
    %v769 = vpow.pop %v768
    %v770 = vmul.f32 %v697, 1.442695
    %v771 = vpow.pop %v770
    %v772 = vmul.f32 %v698, 1.442695
    %v773 = vpow.pop %v772
    %v774 = vmul.f32 %v699, 1.442695
    %v775 = vpow.pop %v774
    %v776 = vmul.f32 %v700, 1.442695
    %v777 = vpow.pop %v776
    %v778 = vmul.f32 %v701, 1.442695
    %v779 = vpow.pop %v778
    %v780 = vmul.f32 %v702, 1.442695
    %v781 = vpow.pop %v780
    %v782 = vmul.f32 %v703, 1.442695
    %v783 = vpow.pop %v782
    %v784 = vmul.f32 %v704, 1.442695
    %v785 = vpow.pop %v784
    %v786 = vmul.f32 %v705, 1.442695
    %v787 = vpow.pop %v786
    %v788 = vmul.f32 %v706, 1.442695
    %v789 = vpow.pop %v788
    %v790 = vmul.f32 %v707, 1.442695
    %v791 = vpow.pop %v790
    %v792 = vmul.f32 %v708, 1.442695
    %v793 = vpow.pop %v792
    %v794 = vmul.f32 %v709, 1.442695
    %v795 = vpow.pop %v794
    %v796 = vmul.f32 %v710, 1.442695
    %v797 = vpow.pop %v796
    %v798 = vmul.f32 %v711, 1.442695
    %v799 = vpow.pop %v798
    %v800 = vmul.f32 %v712, 1.442695
    %v801 = vpow.pop %v800
    %v802 = vmul.f32 %v713, 1.442695
    %v803 = vpow.pop %v802
    %v804 = vmul.f32 %v714, 1.442695
    %v805 = vpow.pop %v804
    %v806 = vmul.f32 %v715, 1.442695
    %v807 = vpow.pop %v806
    %v808 = vmul.f32 %v716, 1.442695
    %v809 = vpow.pop %v808
    %v810 = vmul.f32 %v717, 1.442695
    %v811 = vpow.pop %v810
    %v812 = vmul.f32 %v718, 1.442695
    %v813 = vpow.pop %v812
    %v814 = vmul.f32 %v719, 1.442695
    %v815 = vpow.pop %v814
    %v816 = vmul.f32 %v720, 1.442695
    %v817 = vpow.pop %v816
    %v818 = vmul.f32 %v721, 1.442695
    %v819 = vpow.pop %v818
    %v820 = vmul.f32 %v722, 1.442695
    %v821 = vpow.pop %v820
    %v822 = vmul.f32 %v723, 1.442695
    %v823 = vpow.pop %v822
    %v824 = vmul.f32 %v724, 1.442695
    %v825 = vpow.pop %v824
    %v826 = vmul.f32 %v725, 1.442695
    %v827 = vpow.pop %v826
    %v828 = vmul.f32 %v726, 1.442695
    %v829 = vpow.pop %v828
    %v830 = vmul.f32 %v727, 1.442695
    %v831 = vpow.pop %v830
    %v832 = vmul.f32 %v728, 1.442695
    %v833 = vpow.pop %v832
    %v834 = vmul.f32 %v729, 1.442695
    %v835 = vpow.pop %v834
    %v836 = vmul.f32 %v730, 1.442695
    %v837 = vpow.pop %v836
    %v838 = vmul.f32 %v731, 1.442695
    %v839 = vpow.pop %v838
    %v840 = vmul.f32 %v732, 1.442695
    %v841 = vpow.pop %v840
    %v842 = vmul.f32 %v733, 1.442695
    %v843 = vpow.pop %v842
    %v844 = vmul.f32 %v734, 1.442695
    %v845 = vpow.pop %v844
    %v846 = vmul.f32 %v735, 1.442695
    %v847 = vpow.pop %v846
    %v848 = vmul.f32 %v736, 1.442695
    %v849 = vpow.pop %v848
    %v850 = vmul.f32 %v737, 1.442695
    %v851 = vpow.pop %v850
    %v852 = vmul.f32 %v738, 1.442695
    %v853 = vpow.pop %v852
    %v854 = vmul.f32 %v739, 1.442695
    %v855 = vpow.pop %v854
    %v856 = vmul.f32 %v740, 1.442695
    %v857 = vpow.pop %v856
    %v858 = vmul.f32 %v741, 1.442695
    %v859 = vpow.pop %v858
    %v860 = vmul.f32 %v742, 1.442695
    %v861 = vpow.pop %v860
    %v862 = vmul.f32 %v743, 1.442695
    %v863 = vpow.pop %v862
    %v864 = vmul.f32 %v744, 1.442695
    %v865 = vpow.pop %v864
    %v866 = vmul.f32 %v745, 1.442695
    %v867 = vpow.pop %v866
    %v868 = vmul.f32 %v746, 1.442695
    %v869 = vpow.pop %v868
    %v870 = vmul.f32 %v747, 1.442695
    %v871 = vpow.pop %v870
    %v872 = vmul.f32 %v748, 1.442695
    %v873 = vpow.pop %v872
    %v874 = vmul.f32 %v749, 1.442695
    %v875 = vpow.pop %v874
    %v876 = vmul.f32 %v750, 1.442695
    %v877 = vpow.pop %v876
    %v878 = vmul.f32 %v751, 1.442695
    %v879 = vpow.pop %v878
    %v880 = vadd.f32 %v753, 1.0
    %v881 = vadd.f32 %v755, 1.0
    %v882 = vadd.f32 %v757, 1.0
    %v883 = vadd.f32 %v759, 1.0
    %v884 = vadd.f32 %v761, 1.0
    %v885 = vadd.f32 %v763, 1.0
    %v886 = vadd.f32 %v765, 1.0
    %v887 = vadd.f32 %v767, 1.0
    %v888 = vadd.f32 %v769, 1.0
    %v889 = vadd.f32 %v771, 1.0
    %v890 = vadd.f32 %v773, 1.0
    %v891 = vadd.f32 %v775, 1.0
    %v892 = vadd.f32 %v777, 1.0
    %v893 = vadd.f32 %v779, 1.0
    %v894 = vadd.f32 %v781, 1.0
    %v895 = vadd.f32 %v783, 1.0
    %v896 = vadd.f32 %v785, 1.0
    %v897 = vadd.f32 %v787, 1.0
    %v898 = vadd.f32 %v789, 1.0
    %v899 = vadd.f32 %v791, 1.0
    %v900 = vadd.f32 %v793, 1.0
    %v901 = vadd.f32 %v795, 1.0
    %v902 = vadd.f32 %v797, 1.0
    %v903 = vadd.f32 %v799, 1.0
    %v904 = vadd.f32 %v801, 1.0
    %v905 = vadd.f32 %v803, 1.0
    %v906 = vadd.f32 %v805, 1.0
    %v907 = vadd.f32 %v807, 1.0
    %v908 = vadd.f32 %v809, 1.0
    %v909 = vadd.f32 %v811, 1.0
    %v910 = vadd.f32 %v813, 1.0
    %v911 = vadd.f32 %v815, 1.0
    %v912 = vadd.f32 %v817, 1.0
    %v913 = vadd.f32 %v819, 1.0
    %v914 = vadd.f32 %v821, 1.0
    %v915 = vadd.f32 %v823, 1.0
    %v916 = vadd.f32 %v825, 1.0
    %v917 = vadd.f32 %v827, 1.0
    %v918 = vadd.f32 %v829, 1.0
    %v919 = vadd.f32 %v831, 1.0
    %v920 = vadd.f32 %v833, 1.0
    %v921 = vadd.f32 %v835, 1.0
    %v922 = vadd.f32 %v837, 1.0
    %v923 = vadd.f32 %v839, 1.0
    %v924 = vadd.f32 %v841, 1.0
    %v925 = vadd.f32 %v843, 1.0
    %v926 = vadd.f32 %v845, 1.0
    %v927 = vadd.f32 %v847, 1.0
    %v928 = vadd.f32 %v849, 1.0
    %v929 = vadd.f32 %v851, 1.0
    %v930 = vadd.f32 %v853, 1.0
    %v931 = vadd.f32 %v855, 1.0
    %v932 = vadd.f32 %v857, 1.0
    %v933 = vadd.f32 %v859, 1.0
    %v934 = vadd.f32 %v861, 1.0
    %v935 = vadd.f32 %v863, 1.0
    %v936 = vadd.f32 %v865, 1.0
    %v937 = vadd.f32 %v867, 1.0
    %v938 = vadd.f32 %v869, 1.0
    %v939 = vadd.f32 %v871, 1.0
    %v940 = vadd.f32 %v873, 1.0
    %v941 = vadd.f32 %v875, 1.0
    %v942 = vadd.f32 %v877, 1.0
    %v943 = vadd.f32 %v879, 1.0
    %v944 = vrcp.pop %v880
    %v945 = vmul.f32 1.0, %v944
    %v946 = vrcp.pop %v881
    %v947 = vmul.f32 1.0, %v946
    %v948 = vrcp.pop %v882
    %v949 = vmul.f32 1.0, %v948
    %v950 = vrcp.pop %v883
    %v951 = vmul.f32 1.0, %v950
    %v952 = vrcp.pop %v884
    %v953 = vmul.f32 1.0, %v952
    %v954 = vrcp.pop %v885
    %v955 = vmul.f32 1.0, %v954
    %v956 = vrcp.pop %v886
    %v957 = vmul.f32 1.0, %v956
    %v958 = vrcp.pop %v887
    %v959 = vmul.f32 1.0, %v958
    %v960 = vrcp.pop %v888
    %v961 = vmul.f32 1.0, %v960
    %v962 = vrcp.pop %v889
    %v963 = vmul.f32 1.0, %v962
    %v964 = vrcp.pop %v890
    %v965 = vmul.f32 1.0, %v964
    %v966 = vrcp.pop %v891
    %v967 = vmul.f32 1.0, %v966
    %v968 = vrcp.pop %v892
    %v969 = vmul.f32 1.0, %v968
    %v970 = vrcp.pop %v893
    %v971 = vmul.f32 1.0, %v970
    %v972 = vrcp.pop %v894
    %v973 = vmul.f32 1.0, %v972
    %v974 = vrcp.pop %v895
    %v975 = vmul.f32 1.0, %v974
    %v976 = vrcp.pop %v896
    %v977 = vmul.f32 1.0, %v976
    %v978 = vrcp.pop %v897
    %v979 = vmul.f32 1.0, %v978
    %v980 = vrcp.pop %v898
    %v981 = vmul.f32 1.0, %v980
    %v982 = vrcp.pop %v899
    %v983 = vmul.f32 1.0, %v982
    %v984 = vrcp.pop %v900
    %v985 = vmul.f32 1.0, %v984
    %v986 = vrcp.pop %v901
    %v987 = vmul.f32 1.0, %v986
    %v988 = vrcp.pop %v902
    %v989 = vmul.f32 1.0, %v988
    %v990 = vrcp.pop %v903
    %v991 = vmul.f32 1.0, %v990
    %v992 = vrcp.pop %v904
    %v993 = vmul.f32 1.0, %v992
    %v994 = vrcp.pop %v905
    %v995 = vmul.f32 1.0, %v994
    %v996 = vrcp.pop %v906
    %v997 = vmul.f32 1.0, %v996
    %v998 = vrcp.pop %v907
    %v999 = vmul.f32 1.0, %v998
    %v1000 = vrcp.pop %v908
    %v1001 = vmul.f32 1.0, %v1000
    %v1002 = vrcp.pop %v909
    %v1003 = vmul.f32 1.0, %v1002
    %v1004 = vrcp.pop %v910
    %v1005 = vmul.f32 1.0, %v1004
    %v1006 = vrcp.pop %v911
    %v1007 = vmul.f32 1.0, %v1006
    %v1008 = vrcp.pop %v912
    %v1009 = vmul.f32 1.0, %v1008
    %v1010 = vrcp.pop %v913
    %v1011 = vmul.f32 1.0, %v1010
    %v1012 = vrcp.pop %v914
    %v1013 = vmul.f32 1.0, %v1012
    %v1014 = vrcp.pop %v915
    %v1015 = vmul.f32 1.0, %v1014
    %v1016 = vrcp.pop %v916
    %v1017 = vmul.f32 1.0, %v1016
    %v1018 = vrcp.pop %v917
    %v1019 = vmul.f32 1.0, %v1018
    %v1020 = vrcp.pop %v918
    %v1021 = vmul.f32 1.0, %v1020
    %v1022 = vrcp.pop %v919
    %v1023 = vmul.f32 1.0, %v1022
    %v1024 = vrcp.pop %v920
    %v1025 = vmul.f32 1.0, %v1024
    %v1026 = vrcp.pop %v921
    %v1027 = vmul.f32 1.0, %v1026
    %v1028 = vrcp.pop %v922
    %v1029 = vmul.f32 1.0, %v1028
    %v1030 = vrcp.pop %v923
    %v1031 = vmul.f32 1.0, %v1030
    %v1032 = vrcp.pop %v924
    %v1033 = vmul.f32 1.0, %v1032
    %v1034 = vrcp.pop %v925
    %v1035 = vmul.f32 1.0, %v1034
    %v1036 = vrcp.pop %v926
    %v1037 = vmul.f32 1.0, %v1036
    %v1038 = vrcp.pop %v927
    %v1039 = vmul.f32 1.0, %v1038
    %v1040 = vrcp.pop %v928
    %v1041 = vmul.f32 1.0, %v1040
    %v1042 = vrcp.pop %v929
    %v1043 = vmul.f32 1.0, %v1042
    %v1044 = vrcp.pop %v930
    %v1045 = vmul.f32 1.0, %v1044
    %v1046 = vrcp.pop %v931
    %v1047 = vmul.f32 1.0, %v1046
    %v1048 = vrcp.pop %v932
    %v1049 = vmul.f32 1.0, %v1048
    %v1050 = vrcp.pop %v933
    %v1051 = vmul.f32 1.0, %v1050
    %v1052 = vrcp.pop %v934
    %v1053 = vmul.f32 1.0, %v1052
    %v1054 = vrcp.pop %v935
    %v1055 = vmul.f32 1.0, %v1054
    %v1056 = vrcp.pop %v936
    %v1057 = vmul.f32 1.0, %v1056
    %v1058 = vrcp.pop %v937
    %v1059 = vmul.f32 1.0, %v1058
    %v1060 = vrcp.pop %v938
    %v1061 = vmul.f32 1.0, %v1060
    %v1062 = vrcp.pop %v939
    %v1063 = vmul.f32 1.0, %v1062
    %v1064 = vrcp.pop %v940
    %v1065 = vmul.f32 1.0, %v1064
    %v1066 = vrcp.pop %v941
    %v1067 = vmul.f32 1.0, %v1066
    %v1068 = vrcp.pop %v942
    %v1069 = vmul.f32 1.0, %v1068
    %v1070 = vrcp.pop %v943
    %v1071 = vmul.f32 1.0, %v1070
    %v1072 = vmul.f32 %v434, %v945
    %v1073 = vmul.f32 %v437, %v947
    %v1074 = vmul.f32 %v442, %v949
    %v1075 = vmul.f32 %v445, %v951
    %v1076 = vmul.f32 %v450, %v953
    %v1077 = vmul.f32 %v453, %v955
    %v1078 = vmul.f32 %v458, %v957
    %v1079 = vmul.f32 %v461, %v959
    %v1080 = vmul.f32 %v466, %v961
    %v1081 = vmul.f32 %v469, %v963
    %v1082 = vmul.f32 %v474, %v965
    %v1083 = vmul.f32 %v477, %v967
    %v1084 = vmul.f32 %v482, %v969
    %v1085 = vmul.f32 %v485, %v971
    %v1086 = vmul.f32 %v490, %v973
    %v1087 = vmul.f32 %v493, %v975
    %v1088 = vmul.f32 %v498, %v977
    %v1089 = vmul.f32 %v501, %v979
    %v1090 = vmul.f32 %v506, %v981
    %v1091 = vmul.f32 %v509, %v983
    %v1092 = vmul.f32 %v514, %v985
    %v1093 = vmul.f32 %v517, %v987
    %v1094 = vmul.f32 %v522, %v989
    %v1095 = vmul.f32 %v525, %v991
    %v1096 = vmul.f32 %v530, %v993
    %v1097 = vmul.f32 %v533, %v995
    %v1098 = vmul.f32 %v538, %v997
    %v1099 = vmul.f32 %v541, %v999
    %v1100 = vmul.f32 %v546, %v1001
    %v1101 = vmul.f32 %v549, %v1003
    %v1102 = vmul.f32 %v554, %v1005
    %v1103 = vmul.f32 %v557, %v1007
    %v1104 = vmul.f32 %v562, %v1009
    %v1105 = vmul.f32 %v565, %v1011
    %v1106 = vmul.f32 %v570, %v1013
    %v1107 = vmul.f32 %v573, %v1015
    %v1108 = vmul.f32 %v578, %v1017
    %v1109 = vmul.f32 %v581, %v1019
    %v1110 = vmul.f32 %v586, %v1021
    %v1111 = vmul.f32 %v589, %v1023
    %v1112 = vmul.f32 %v594, %v1025
    %v1113 = vmul.f32 %v597, %v1027
    %v1114 = vmul.f32 %v602, %v1029
    %v1115 = vmul.f32 %v605, %v1031
    %v1116 = vmul.f32 %v610, %v1033
    %v1117 = vmul.f32 %v613, %v1035
    %v1118 = vmul.f32 %v618, %v1037
    %v1119 = vmul.f32 %v621, %v1039
    %v1120 = vmul.f32 %v626, %v1041
    %v1121 = vmul.f32 %v629, %v1043
    %v1122 = vmul.f32 %v634, %v1045
    %v1123 = vmul.f32 %v637, %v1047
    %v1124 = vmul.f32 %v642, %v1049
    %v1125 = vmul.f32 %v645, %v1051
    %v1126 = vmul.f32 %v650, %v1053
    %v1127 = vmul.f32 %v653, %v1055
    %v1128 = vmul.f32 %v658, %v1057
    %v1129 = vmul.f32 %v661, %v1059
    %v1130 = vmul.f32 %v666, %v1061
    %v1131 = vmul.f32 %v669, %v1063
    %v1132 = vmul.f32 %v674, %v1065
    %v1133 = vmul.f32 %v677, %v1067
    %v1134 = vmul.f32 %v682, %v1069
    %v1135 = vmul.f32 %v685, %v1071
    %1136 = vst.msk [vmem:[#allocation8] sm:$0xff] %vm302, %v1072
    %1137 = vst.msk [vmem:[#allocation8 + $0x8] sm:$0xff] %vm302, %v1073
    %1138 = vst.msk [vmem:[#allocation8 + $0x10] sm:$0xff] %vm302, %v1074
    %1139 = vst.msk [vmem:[#allocation8 + $0x18] sm:$0xff] %vm302, %v1075
    %1140 = vst.msk [vmem:[#allocation8 + $0x20] sm:$0xff] %vm302, %v1076
    %1141 = vst.msk [vmem:[#allocation8 + $0x28] sm:$0xff] %vm302, %v1077
    %1142 = vst.msk [vmem:[#allocation8 + $0x30] sm:$0xff] %vm302, %v1078
    %1143 = vst.msk [vmem:[#allocation8 + $0x38] sm:$0xff] %vm302, %v1079
    %1144 = vst.msk [vmem:[#allocation8 + $0x40] sm:$0xff] %vm302, %v1080
    %1145 = vst.msk [vmem:[#allocation8 + $0x48] sm:$0xff] %vm302, %v1081
    %1146 = vst.msk [vmem:[#allocation8 + $0x50] sm:$0xff] %vm302, %v1082
    %1147 = vst.msk [vmem:[#allocation8 + $0x58] sm:$0xff] %vm302, %v1083
    %1148 = vst.msk [vmem:[#allocation8 + $0x60] sm:$0xff] %vm302, %v1084
    %1149 = vst.msk [vmem:[#allocation8 + $0x68] sm:$0xff] %vm302, %v1085
    %1150 = vst.msk [vmem:[#allocation8 + $0x70] sm:$0xff] %vm302, %v1086
    %1151 = vst.msk [vmem:[#allocation8 + $0x78] sm:$0xff] %vm302, %v1087
    %1152 = vst.msk [vmem:[#allocation8 + $0x80] sm:$0xff] %vm302, %v1088
    %1153 = vst.msk [vmem:[#allocation8 + $0x88] sm:$0xff] %vm302, %v1089
    %1154 = vst.msk [vmem:[#allocation8 + $0x90] sm:$0xff] %vm302, %v1090
    %1155 = vst.msk [vmem:[#allocation8 + $0x98] sm:$0xff] %vm302, %v1091
    %1156 = vst.msk [vmem:[#allocation8 + $0xa0] sm:$0xff] %vm302, %v1092
    %1157 = vst.msk [vmem:[#allocation8 + $0xa8] sm:$0xff] %vm302, %v1093
    %1158 = vst.msk [vmem:[#allocation8 + $0xb0] sm:$0xff] %vm302, %v1094
    %1159 = vst.msk [vmem:[#allocation8 + $0xb8] sm:$0xff] %vm302, %v1095
    %1160 = vst.msk [vmem:[#allocation8 + $0xc0] sm:$0xff] %vm302, %v1096
    %1161 = vst.msk [vmem:[#allocation8 + $0xc8] sm:$0xff] %vm302, %v1097
    %1162 = vst.msk [vmem:[#allocation8 + $0xd0] sm:$0xff] %vm302, %v1098
    %1163 = vst.msk [vmem:[#allocation8 + $0xd8] sm:$0xff] %vm302, %v1099
    %1164 = vst.msk [vmem:[#allocation8 + $0xe0] sm:$0xff] %vm302, %v1100
    %1165 = vst.msk [vmem:[#allocation8 + $0xe8] sm:$0xff] %vm302, %v1101
    %1166 = vst.msk [vmem:[#allocation8 + $0xf0] sm:$0xff] %vm302, %v1102
    %1167 = vst.msk [vmem:[#allocation8 + $0xf8] sm:$0xff] %vm302, %v1103
    %1168 = vst.msk [vmem:[#allocation8 + $0x100] sm:$0xff] %vm302, %v1104
    %1169 = vst.msk [vmem:[#allocation8 + $0x108] sm:$0xff] %vm302, %v1105
    %1170 = vst.msk [vmem:[#allocation8 + $0x110] sm:$0xff] %vm302, %v1106
    %1171 = vst.msk [vmem:[#allocation8 + $0x118] sm:$0xff] %vm302, %v1107
    %1172 = vst.msk [vmem:[#allocation8 + $0x120] sm:$0xff] %vm302, %v1108
    %1173 = vst.msk [vmem:[#allocation8 + $0x128] sm:$0xff] %vm302, %v1109
    %1174 = vst.msk [vmem:[#allocation8 + $0x130] sm:$0xff] %vm302, %v1110
    %1175 = vst.msk [vmem:[#allocation8 + $0x138] sm:$0xff] %vm302, %v1111
    %1176 = vst.msk [vmem:[#allocation8 + $0x140] sm:$0xff] %vm302, %v1112
    %1177 = vst.msk [vmem:[#allocation8 + $0x148] sm:$0xff] %vm302, %v1113
    %1178 = vst.msk [vmem:[#allocation8 + $0x150] sm:$0xff] %vm302, %v1114
    %1179 = vst.msk [vmem:[#allocation8 + $0x158] sm:$0xff] %vm302, %v1115
    %1180 = vst.msk [vmem:[#allocation8 + $0x160] sm:$0xff] %vm302, %v1116
    %1181 = vst.msk [vmem:[#allocation8 + $0x168] sm:$0xff] %vm302, %v1117
    %1182 = vst.msk [vmem:[#allocation8 + $0x170] sm:$0xff] %vm302, %v1118
    %1183 = vst.msk [vmem:[#allocation8 + $0x178] sm:$0xff] %vm302, %v1119
    %1184 = vst.msk [vmem:[#allocation8 + $0x180] sm:$0xff] %vm302, %v1120
    %1185 = vst.msk [vmem:[#allocation8 + $0x188] sm:$0xff] %vm302, %v1121
    %1186 = vst.msk [vmem:[#allocation8 + $0x190] sm:$0xff] %vm302, %v1122
    %1187 = vst.msk [vmem:[#allocation8 + $0x198] sm:$0xff] %vm302, %v1123
    %1188 = vst.msk [vmem:[#allocation8 + $0x1a0] sm:$0xff] %vm302, %v1124
    %1189 = vst.msk [vmem:[#allocation8 + $0x1a8] sm:$0xff] %vm302, %v1125
    %1190 = vst.msk [vmem:[#allocation8 + $0x1b0] sm:$0xff] %vm302, %v1126
    %1191 = vst.msk [vmem:[#allocation8 + $0x1b8] sm:$0xff] %vm302, %v1127
    %1192 = vst.msk [vmem:[#allocation8 + $0x1c0] sm:$0xff] %vm302, %v1128
    %1193 = vst.msk [vmem:[#allocation8 + $0x1c8] sm:$0xff] %vm302, %v1129
    %1194 = vst.msk [vmem:[#allocation8 + $0x1d0] sm:$0xff] %vm302, %v1130
    %1195 = vst.msk [vmem:[#allocation8 + $0x1d8] sm:$0xff] %vm302, %v1131
    %1196 = vst.msk [vmem:[#allocation8 + $0x1e0] sm:$0xff] %vm302, %v1132
    %1197 = vst.msk [vmem:[#allocation8 + $0x1e8] sm:$0xff] %vm302, %v1133
    %1198 = vst.msk [vmem:[#allocation8 + $0x1f0] sm:$0xff] %vm302, %v1134
    %1199 = vst.msk [vmem:[#allocation8 + $0x1f8] sm:$0xff] %vm302, %v1135
    // Predicated region
    $region26: #{csp_layer_fwd.7} parent=1 // pred_check
      _
    $region27: #{csp_layer_fwd.7} parent=1 // pred_check_branch
      %1201 = sbr.rel (0) target = $region29
    $region28: #{csp_layer_fwd.7} parent=1 // pred_region
      %s1203 = ssub.s32 8192, 8192
      %1204 = vsyncadd [#allocation4], %s1203
      %s1205 = sshll.u32 [#allocation8], 4
      %s1206 = int_to_ptr.vmem [resolvable:$true] %s1205
      %1211 = dma.vmem_to_hbm [thread:$0]  %s1206, 8192, %s3, [#allocation4], 128, 128, 8
    $region29: #{csp_layer_fwd.7} parent=1 // pred_fallthru
      _
    // Predicated region
    $region30: #{csp_layer_fwd.7} parent=1 // pred_check
      _
    $region31: #{csp_layer_fwd.7} parent=1 // pred_check_branch
      %1213 = sbr.rel (0) target = $region33
    $region32: #{csp_layer_fwd.7} parent=1 // pred_region
      %1214 = dma.done [#allocation4], 8192
    $region33: #{csp_layer_fwd.7} parent=1 // pred_fallthru
      _
    %1215 = vsyncpa [#allocation3], 1
    %1216 = vsyncpa [#allocation6], 1
    %1217 = vsyncpa [#allocation4], 1

// kernel: csp_layer_fwd.8
$region0: #{csp_layer_fwd.8}
  #allocation0 [shape = 'u32[]', space=smem, size = 0x4, offset = 0x4, fixed_abs, tag = 'smem constant byte address 0x4 - core index']
  #allocation1 [shape = 'u32[144,128]{1,0:T(1,128)}', space=vmem, size = 0x12000, scoped, tag = 'internal scratch']
  %s0 = inlined_call_operand.hbm [shape: bf16[512,288], index: 0, kind: input, shape index: {}]
  %s1 = inlined_call_operand.hbm [shape: bf16[288,32], index: 1, kind: input, shape index: {}]
  %s2 = inlined_call_operand.hbm [shape: f32[1,32], index: 2, kind: input, shape index: {}]
  %s3 = inlined_call_operand.hbm [shape: f32[512,32], index: 3, kind: output, shape index: {}]
  %s4 = sld [smem:[#allocation0]]
  $region34: #{csp_layer_fwd.8} parent=0
    _
  %s6 = ssub.s32 1, %s4
  %s7 = scalar_select 0, %s6, %s4
  $region1: #{csp_layer_fwd.8} parent=0
    #allocation2 [shape = 'u8[393216]{0}', space=vmem, size = 0x60000, scoped, tag = 'input window, operand 0, single buffered']
    #allocation3 [shape = 's32[1]{0}', space=sflag, size = 0x4, scoped, tag = 'scoped memory for csp_layer_fwd.8']
    #allocation4 [shape = 's32[1]{0}', space=sflag, size = 0x4, scoped, tag = 'scoped memory for csp_layer_fwd.8']
    #allocation5 [shape = 'u8[73728]{0}', space=vmem, size = 0x12000, scoped, tag = 'input window, operand 1, single buffered']
    #allocation6 [shape = 's32[1]{0}', space=sflag, size = 0x4, scoped, tag = 'scoped memory for csp_layer_fwd.8']
    #allocation7 [shape = 'u8[512]{0}', space=vmem, size = 0x400, scoped, tag = 'input window, operand 2, single buffered']
    #allocation8 [shape = 'u8[262144]{0}', space=vmem, size = 0x40000, scoped, tag = 'output window, operand 0, single buffered']
    %8 = vsyncpa [#allocation3], 0
    %9 = vsyncpa [#allocation6], 0
    %10 = vsyncpa [#allocation4], 0
    // Predicated region
    $region2: #{csp_layer_fwd.8} parent=1 // pred_check
      _
    $region3: #{csp_layer_fwd.8} parent=1 // pred_check_branch
      %12 = sbr.rel (0) target = $region5
    $region4: #{csp_layer_fwd.8} parent=1 // pred_region
      %s14 = ssub.s32 12288, 12288
      %15 = vsyncadd [#allocation3], %s14
      %s16 = sshll.u32 [#allocation2], 4
      %s17 = int_to_ptr.vmem [resolvable:$true] %s16
      %22 = dma.hbm_to_vmem [thread:$0]  %s0, 12288, %s17, [#allocation3], 192, 192, 12
    $region5: #{csp_layer_fwd.8} parent=1 // pred_fallthru
      _
    // Predicated region
    $region6: #{csp_layer_fwd.8} parent=1 // pred_check
      _
    $region7: #{csp_layer_fwd.8} parent=1 // pred_check_branch
      %24 = sbr.rel (0) target = $region9
    $region8: #{csp_layer_fwd.8} parent=1 // pred_region
      %s26 = ssub.s32 2304, 2304
      %27 = vsyncadd [#allocation6], %s26
      %s28 = sshll.u32 [#allocation5], 4
      %s29 = int_to_ptr.vmem [resolvable:$true] %s28
      %34 = dma.hbm_to_vmem [thread:$0]  %s1, 2304, %s29, [#allocation6], 64, 64, 4
    $region9: #{csp_layer_fwd.8} parent=1 // pred_fallthru
      _
    // Predicated region
    $region10: #{csp_layer_fwd.8} parent=1 // pred_check
      _
    $region11: #{csp_layer_fwd.8} parent=1 // pred_check_branch
      %36 = sbr.rel (0) target = $region13
    $region12: #{csp_layer_fwd.8} parent=1 // pred_region
      %s38 = ssub.s32 16, 16
      %39 = vsyncadd [#allocation6], %s38
      %s41 = sshll.u32 [#allocation7], 4
      %s42 = int_to_ptr.vmem [resolvable:$true] %s41
      %44 = dma.hbm_to_vmem [thread:$0]  %s2, 16, %s42, [#allocation6]
    $region13: #{csp_layer_fwd.8} parent=1 // pred_fallthru
      _
    // Predicated region
    $region14: #{csp_layer_fwd.8} parent=1 // pred_check
      _
    $region15: #{csp_layer_fwd.8} parent=1 // pred_check_branch
      %46 = sbr.rel (0) target = $region17
    $region16: #{csp_layer_fwd.8} parent=1 // pred_region
      %47 = dma.done [#allocation3], 12288
    $region17: #{csp_layer_fwd.8} parent=1 // pred_fallthru
      _
    // Predicated region
    $region18: #{csp_layer_fwd.8} parent=1 // pred_check
      _
    $region19: #{csp_layer_fwd.8} parent=1 // pred_check_branch
      %49 = sbr.rel (0) target = $region21
    $region20: #{csp_layer_fwd.8} parent=1 // pred_region
      %50 = dma.done [#allocation6], 2304
    $region21: #{csp_layer_fwd.8} parent=1 // pred_fallthru
      _
    // Predicated region
    $region22: #{csp_layer_fwd.8} parent=1 // pred_check
      _
    $region23: #{csp_layer_fwd.8} parent=1 // pred_check_branch
      %52 = sbr.rel (0) target = $region25
    $region24: #{csp_layer_fwd.8} parent=1 // pred_region
      %53 = dma.done [#allocation6], 16
    $region25: #{csp_layer_fwd.8} parent=1 // pred_fallthru
      _
    %v55 = vld [vmem:[#allocation2] sm:$0xff]
    %v56 = vld [vmem:[#allocation2 + $0x8] sm:$0xf]
    %v57 = vld [vmem:[#allocation2 + $0xc] sm:$0xff]
    %v58 = vld [vmem:[#allocation2 + $0x14] sm:$0xf]
    %v59 = vld [vmem:[#allocation2 + $0x18] sm:$0xff]
    %v60 = vld [vmem:[#allocation2 + $0x20] sm:$0xf]
    %v61 = vld [vmem:[#allocation2 + $0x24] sm:$0xff]
    %v62 = vld [vmem:[#allocation2 + $0x2c] sm:$0xf]
    %v63 = vld [vmem:[#allocation2 + $0x30] sm:$0xff]
    %v64 = vld [vmem:[#allocation2 + $0x38] sm:$0xf]
    %v65 = vld [vmem:[#allocation2 + $0x3c] sm:$0xff]
    %v66 = vld [vmem:[#allocation2 + $0x44] sm:$0xf]
    %v67 = vld [vmem:[#allocation2 + $0x48] sm:$0xff]
    %v68 = vld [vmem:[#allocation2 + $0x50] sm:$0xf]
    %v69 = vld [vmem:[#allocation2 + $0x54] sm:$0xff]
    %v70 = vld [vmem:[#allocation2 + $0x5c] sm:$0xf]
    %v71 = vld [vmem:[#allocation2 + $0x60] sm:$0xff]
    %v72 = vld [vmem:[#allocation2 + $0x68] sm:$0xf]
    %v73 = vld [vmem:[#allocation2 + $0x6c] sm:$0xff]
    %v74 = vld [vmem:[#allocation2 + $0x74] sm:$0xf]
    %v75 = vld [vmem:[#allocation2 + $0x78] sm:$0xff]
    %v76 = vld [vmem:[#allocation2 + $0x80] sm:$0xf]
    %v77 = vld [vmem:[#allocation2 + $0x84] sm:$0xff]
    %v78 = vld [vmem:[#allocation2 + $0x8c] sm:$0xf]
    %v79 = vld [vmem:[#allocation2 + $0x90] sm:$0xff]
    %v80 = vld [vmem:[#allocation2 + $0x98] sm:$0xf]
    %v81 = vld [vmem:[#allocation2 + $0x9c] sm:$0xff]
    %v82 = vld [vmem:[#allocation2 + $0xa4] sm:$0xf]
    %v83 = vld [vmem:[#allocation2 + $0xa8] sm:$0xff]
    %v84 = vld [vmem:[#allocation2 + $0xb0] sm:$0xf]
    %v85 = vld [vmem:[#allocation2 + $0xb4] sm:$0xff]
    %v86 = vld [vmem:[#allocation2 + $0xbc] sm:$0xf]
    %v87 = vld [vmem:[#allocation2 + $0xc0] sm:$0xff]
    %v88 = vld [vmem:[#allocation2 + $0xc8] sm:$0xf]
    %v89 = vld [vmem:[#allocation2 + $0xcc] sm:$0xff]
    %v90 = vld [vmem:[#allocation2 + $0xd4] sm:$0xf]
    %v91 = vld [vmem:[#allocation2 + $0xd8] sm:$0xff]
    %v92 = vld [vmem:[#allocation2 + $0xe0] sm:$0xf]
    %v93 = vld [vmem:[#allocation2 + $0xe4] sm:$0xff]
    %v94 = vld [vmem:[#allocation2 + $0xec] sm:$0xf]
    %v95 = vld [vmem:[#allocation2 + $0xf0] sm:$0xff]
    %v96 = vld [vmem:[#allocation2 + $0xf8] sm:$0xf]
    %v97 = vld [vmem:[#allocation2 + $0xfc] sm:$0xff]
    %v98 = vld [vmem:[#allocation2 + $0x104] sm:$0xf]
    %v99 = vld [vmem:[#allocation2 + $0x108] sm:$0xff]
    %v100 = vld [vmem:[#allocation2 + $0x110] sm:$0xf]
    %v101 = vld [vmem:[#allocation2 + $0x114] sm:$0xff]
    %v102 = vld [vmem:[#allocation2 + $0x11c] sm:$0xf]
    %v103 = vld [vmem:[#allocation2 + $0x120] sm:$0xff]
    %v104 = vld [vmem:[#allocation2 + $0x128] sm:$0xf]
    %v105 = vld [vmem:[#allocation2 + $0x12c] sm:$0xff]
    %v106 = vld [vmem:[#allocation2 + $0x134] sm:$0xf]
    %v107 = vld [vmem:[#allocation2 + $0x138] sm:$0xff]
    %v108 = vld [vmem:[#allocation2 + $0x140] sm:$0xf]
    %v109 = vld [vmem:[#allocation2 + $0x144] sm:$0xff]
    %v110 = vld [vmem:[#allocation2 + $0x14c] sm:$0xf]
    %v111 = vld [vmem:[#allocation2 + $0x150] sm:$0xff]
    %v112 = vld [vmem:[#allocation2 + $0x158] sm:$0xf]
    %v113 = vld [vmem:[#allocation2 + $0x15c] sm:$0xff]
    %v114 = vld [vmem:[#allocation2 + $0x164] sm:$0xf]
    %v115 = vld [vmem:[#allocation2 + $0x168] sm:$0xff]
    %v116 = vld [vmem:[#allocation2 + $0x170] sm:$0xf]
    %v117 = vld [vmem:[#allocation2 + $0x174] sm:$0xff]
    %v118 = vld [vmem:[#allocation2 + $0x17c] sm:$0xf]
    %v119 = vld [vmem:[#allocation2 + $0x180] sm:$0xff]
    %v120 = vld [vmem:[#allocation2 + $0x188] sm:$0xf]
    %v121 = vld [vmem:[#allocation2 + $0x18c] sm:$0xff]
    %v122 = vld [vmem:[#allocation2 + $0x194] sm:$0xf]
    %v123 = vld [vmem:[#allocation2 + $0x198] sm:$0xff]
    %v124 = vld [vmem:[#allocation2 + $0x1a0] sm:$0xf]
    %v125 = vld [vmem:[#allocation2 + $0x1a4] sm:$0xff]
    %v126 = vld [vmem:[#allocation2 + $0x1ac] sm:$0xf]
    %v127 = vld [vmem:[#allocation2 + $0x1b0] sm:$0xff]
    %v128 = vld [vmem:[#allocation2 + $0x1b8] sm:$0xf]
    %v129 = vld [vmem:[#allocation2 + $0x1bc] sm:$0xff]
    %v130 = vld [vmem:[#allocation2 + $0x1c4] sm:$0xf]
    %v131 = vld [vmem:[#allocation2 + $0x1c8] sm:$0xff]
    %v132 = vld [vmem:[#allocation2 + $0x1d0] sm:$0xf]
    %v133 = vld [vmem:[#allocation2 + $0x1d4] sm:$0xff]
    %v134 = vld [vmem:[#allocation2 + $0x1dc] sm:$0xf]
    %v135 = vld [vmem:[#allocation2 + $0x1e0] sm:$0xff]
    %v136 = vld [vmem:[#allocation2 + $0x1e8] sm:$0xf]
    %v137 = vld [vmem:[#allocation2 + $0x1ec] sm:$0xff]
    %v138 = vld [vmem:[#allocation2 + $0x1f4] sm:$0xf]
    %v139 = vld [vmem:[#allocation2 + $0x1f8] sm:$0xff]
    %v140 = vld [vmem:[#allocation2 + $0x200] sm:$0xf]
    %v141 = vld [vmem:[#allocation2 + $0x204] sm:$0xff]
    %v142 = vld [vmem:[#allocation2 + $0x20c] sm:$0xf]
    %v143 = vld [vmem:[#allocation2 + $0x210] sm:$0xff]
    %v144 = vld [vmem:[#allocation2 + $0x218] sm:$0xf]
    %v145 = vld [vmem:[#allocation2 + $0x21c] sm:$0xff]
    %v146 = vld [vmem:[#allocation2 + $0x224] sm:$0xf]
    %v147 = vld [vmem:[#allocation2 + $0x228] sm:$0xff]
    %v148 = vld [vmem:[#allocation2 + $0x230] sm:$0xf]
    %v149 = vld [vmem:[#allocation2 + $0x234] sm:$0xff]
    %v150 = vld [vmem:[#allocation2 + $0x23c] sm:$0xf]
    %v151 = vld [vmem:[#allocation2 + $0x240] sm:$0xff]
    %v152 = vld [vmem:[#allocation2 + $0x248] sm:$0xf]
    %v153 = vld [vmem:[#allocation2 + $0x24c] sm:$0xff]
    %v154 = vld [vmem:[#allocation2 + $0x254] sm:$0xf]
    %v155 = vld [vmem:[#allocation2 + $0x258] sm:$0xff]
    %v156 = vld [vmem:[#allocation2 + $0x260] sm:$0xf]
    %v157 = vld [vmem:[#allocation2 + $0x264] sm:$0xff]
    %v158 = vld [vmem:[#allocation2 + $0x26c] sm:$0xf]
    %v159 = vld [vmem:[#allocation2 + $0x270] sm:$0xff]
    %v160 = vld [vmem:[#allocation2 + $0x278] sm:$0xf]
    %v161 = vld [vmem:[#allocation2 + $0x27c] sm:$0xff]
    %v162 = vld [vmem:[#allocation2 + $0x284] sm:$0xf]
    %v163 = vld [vmem:[#allocation2 + $0x288] sm:$0xff]
    %v164 = vld [vmem:[#allocation2 + $0x290] sm:$0xf]
    %v165 = vld [vmem:[#allocation2 + $0x294] sm:$0xff]
    %v166 = vld [vmem:[#allocation2 + $0x29c] sm:$0xf]
    %v167 = vld [vmem:[#allocation2 + $0x2a0] sm:$0xff]
    %v168 = vld [vmem:[#allocation2 + $0x2a8] sm:$0xf]
    %v169 = vld [vmem:[#allocation2 + $0x2ac] sm:$0xff]
    %v170 = vld [vmem:[#allocation2 + $0x2b4] sm:$0xf]
    %v171 = vld [vmem:[#allocation2 + $0x2b8] sm:$0xff]
    %v172 = vld [vmem:[#allocation2 + $0x2c0] sm:$0xf]
    %v173 = vld [vmem:[#allocation2 + $0x2c4] sm:$0xff]
    %v174 = vld [vmem:[#allocation2 + $0x2cc] sm:$0xf]
    %v175 = vld [vmem:[#allocation2 + $0x2d0] sm:$0xff]
    %v176 = vld [vmem:[#allocation2 + $0x2d8] sm:$0xf]
    %v177 = vld [vmem:[#allocation2 + $0x2dc] sm:$0xff]
    %v178 = vld [vmem:[#allocation2 + $0x2e4] sm:$0xf]
    %v179 = vld [vmem:[#allocation2 + $0x2e8] sm:$0xff]
    %v180 = vld [vmem:[#allocation2 + $0x2f0] sm:$0xf]
    %v181 = vld [vmem:[#allocation2 + $0x2f4] sm:$0xff]
    %v182 = vld [vmem:[#allocation2 + $0x2fc] sm:$0xf]
    %v183 = vld [vmem:[#allocation5] sm:$0xf]
    %v184 = vld [vmem:[#allocation5 + $0x4] sm:$0xf]
    %v185 = vld [vmem:[#allocation5 + $0x8] sm:$0xf]
    %v186 = vld [vmem:[#allocation5 + $0xc] sm:$0xf]
    %v187 = vld [vmem:[#allocation5 + $0x10] sm:$0xf]
    %v188 = vld [vmem:[#allocation5 + $0x14] sm:$0xf]
    %v189 = vld [vmem:[#allocation5 + $0x18] sm:$0xf]
    %v190 = vld [vmem:[#allocation5 + $0x1c] sm:$0xf]
    %v191 = vld [vmem:[#allocation5 + $0x20] sm:$0xf]
    %v192 = vld [vmem:[#allocation5 + $0x24] sm:$0xf]
    %v193 = vld [vmem:[#allocation5 + $0x28] sm:$0xf]
    %v194 = vld [vmem:[#allocation5 + $0x2c] sm:$0xf]
    %v195 = vld [vmem:[#allocation5 + $0x30] sm:$0xf]
    %v196 = vld [vmem:[#allocation5 + $0x34] sm:$0xf]
    %v197 = vld [vmem:[#allocation5 + $0x38] sm:$0xf]
    %v198 = vld [vmem:[#allocation5 + $0x3c] sm:$0xf]
    %v199 = vld [vmem:[#allocation5 + $0x40] sm:$0xf]
    %v200 = vld [vmem:[#allocation5 + $0x44] sm:$0xf]
    %v201 = vld [vmem:[#allocation5 + $0x48] sm:$0xf]
    %v202 = vld [vmem:[#allocation5 + $0x4c] sm:$0xf]
    %v203 = vld [vmem:[#allocation5 + $0x50] sm:$0xf]
    %v204 = vld [vmem:[#allocation5 + $0x54] sm:$0xf]
    %v205 = vld [vmem:[#allocation5 + $0x58] sm:$0xf]
    %v206 = vld [vmem:[#allocation5 + $0x5c] sm:$0xf]
    %v207 = vld [vmem:[#allocation5 + $0x60] sm:$0xf]
    %v208 = vld [vmem:[#allocation5 + $0x64] sm:$0xf]
    %v209 = vld [vmem:[#allocation5 + $0x68] sm:$0xf]
    %v210 = vld [vmem:[#allocation5 + $0x6c] sm:$0xf]
    %v211 = vld [vmem:[#allocation5 + $0x70] sm:$0xf]
    %v212 = vld [vmem:[#allocation5 + $0x74] sm:$0xf]
    %v213 = vld [vmem:[#allocation5 + $0x78] sm:$0xf]
    %v214 = vld [vmem:[#allocation5 + $0x7c] sm:$0xf]
    %v215 = vld [vmem:[#allocation5 + $0x80] sm:$0xf]
    %v216 = vld [vmem:[#allocation5 + $0x84] sm:$0xf]
    %v217 = vld [vmem:[#allocation5 + $0x88] sm:$0xf]
    %v218 = vld [vmem:[#allocation5 + $0x8c] sm:$0xf]
    %v219 = vld [vmem:[#allocation7] sm:$0x1]
    %v221 = vlaneseq
    %v222 = vshrl.u32 %v221, 7
    %v223 = vsub.s32 0, %v222
    %v224 = vrot.slane %v219, %v223
    %v354 = vunpack.c.l.b16 %v55
    %v355 = vunpack.c.h.b16 %v55
    %v356 = vunpack.c.l.b16 %v56
    %v357 = vunpack.c.l.b16 %v57
    %v358 = vunpack.c.h.b16 %v57
    %v359 = vunpack.c.l.b16 %v58
    %v360 = vunpack.c.l.b16 %v59
    %v361 = vunpack.c.h.b16 %v59
    %v362 = vunpack.c.l.b16 %v60
    %v363 = vunpack.c.l.b16 %v61
    %v364 = vunpack.c.h.b16 %v61
    %v365 = vunpack.c.l.b16 %v62
    %v366 = vunpack.c.l.b16 %v63
    %v367 = vunpack.c.h.b16 %v63
    %v368 = vunpack.c.l.b16 %v64
    %v369 = vunpack.c.l.b16 %v65
    %v370 = vunpack.c.h.b16 %v65
    %v371 = vunpack.c.l.b16 %v66
    %v372 = vunpack.c.l.b16 %v67
    %v373 = vunpack.c.h.b16 %v67
    %v374 = vunpack.c.l.b16 %v68
    %v375 = vunpack.c.l.b16 %v69
    %v376 = vunpack.c.h.b16 %v69
    %v377 = vunpack.c.l.b16 %v70
    %v378 = vunpack.c.l.b16 %v71
    %v379 = vunpack.c.h.b16 %v71
    %v380 = vunpack.c.l.b16 %v72
    %v381 = vunpack.c.l.b16 %v73
    %v382 = vunpack.c.h.b16 %v73
    %v383 = vunpack.c.l.b16 %v74
    %v384 = vunpack.c.l.b16 %v75
    %v385 = vunpack.c.h.b16 %v75
    %v386 = vunpack.c.l.b16 %v76
    %v387 = vunpack.c.l.b16 %v77
    %v388 = vunpack.c.h.b16 %v77
    %v389 = vunpack.c.l.b16 %v78
    %v390 = vunpack.c.l.b16 %v79
    %v391 = vunpack.c.h.b16 %v79
    %v392 = vunpack.c.l.b16 %v80
    %v393 = vunpack.c.l.b16 %v81
    %v394 = vunpack.c.h.b16 %v81
    %v395 = vunpack.c.l.b16 %v82
    %v396 = vunpack.c.l.b16 %v83
    %v397 = vunpack.c.h.b16 %v83
    %v398 = vunpack.c.l.b16 %v84
    %v399 = vunpack.c.l.b16 %v85
    %v400 = vunpack.c.h.b16 %v85
    %v401 = vunpack.c.l.b16 %v86
    %v402 = vunpack.c.l.b16 %v87
    %v403 = vunpack.c.h.b16 %v87
    %v404 = vunpack.c.l.b16 %v88
    %v405 = vunpack.c.l.b16 %v89
    %v406 = vunpack.c.h.b16 %v89
    %v407 = vunpack.c.l.b16 %v90
    %v408 = vunpack.c.l.b16 %v91
    %v409 = vunpack.c.h.b16 %v91
    %v410 = vunpack.c.l.b16 %v92
    %v411 = vunpack.c.l.b16 %v93
    %v412 = vunpack.c.h.b16 %v93
    %v413 = vunpack.c.l.b16 %v94
    %v414 = vunpack.c.l.b16 %v95
    %v415 = vunpack.c.h.b16 %v95
    %v416 = vunpack.c.l.b16 %v96
    %v417 = vunpack.c.l.b16 %v97
    %v418 = vunpack.c.h.b16 %v97
    %v419 = vunpack.c.l.b16 %v98
    %v420 = vunpack.c.l.b16 %v99
    %v421 = vunpack.c.h.b16 %v99
    %v422 = vunpack.c.l.b16 %v100
    %v423 = vunpack.c.l.b16 %v101
    %v424 = vunpack.c.h.b16 %v101
    %v425 = vunpack.c.l.b16 %v102
    %v426 = vunpack.c.l.b16 %v103
    %v427 = vunpack.c.h.b16 %v103
    %v428 = vunpack.c.l.b16 %v104
    %v429 = vunpack.c.l.b16 %v105
    %v430 = vunpack.c.h.b16 %v105
    %v431 = vunpack.c.l.b16 %v106
    %v432 = vunpack.c.l.b16 %v107
    %v433 = vunpack.c.h.b16 %v107
    %v434 = vunpack.c.l.b16 %v108
    %v435 = vunpack.c.l.b16 %v109
    %v436 = vunpack.c.h.b16 %v109
    %v437 = vunpack.c.l.b16 %v110
    %v438 = vunpack.c.l.b16 %v111
    %v439 = vunpack.c.h.b16 %v111
    %v440 = vunpack.c.l.b16 %v112
    %v441 = vunpack.c.l.b16 %v113
    %v442 = vunpack.c.h.b16 %v113
    %v443 = vunpack.c.l.b16 %v114
    %v444 = vunpack.c.l.b16 %v115
    %v445 = vunpack.c.h.b16 %v115
    %v446 = vunpack.c.l.b16 %v116
    %v447 = vunpack.c.l.b16 %v117
    %v448 = vunpack.c.h.b16 %v117
    %v449 = vunpack.c.l.b16 %v118
    %v450 = vunpack.c.l.b16 %v119
    %v451 = vunpack.c.h.b16 %v119
    %v452 = vunpack.c.l.b16 %v120
    %v453 = vunpack.c.l.b16 %v121
    %v454 = vunpack.c.h.b16 %v121
    %v455 = vunpack.c.l.b16 %v122
    %v456 = vunpack.c.l.b16 %v123
    %v457 = vunpack.c.h.b16 %v123
    %v458 = vunpack.c.l.b16 %v124
    %v459 = vunpack.c.l.b16 %v125
    %v460 = vunpack.c.h.b16 %v125
    %v461 = vunpack.c.l.b16 %v126
    %v462 = vunpack.c.l.b16 %v127
    %v463 = vunpack.c.h.b16 %v127
    %v464 = vunpack.c.l.b16 %v128
    %v465 = vunpack.c.l.b16 %v129
    %v466 = vunpack.c.h.b16 %v129
    %v467 = vunpack.c.l.b16 %v130
    %v468 = vunpack.c.l.b16 %v131
    %v469 = vunpack.c.h.b16 %v131
    %v470 = vunpack.c.l.b16 %v132
    %v471 = vunpack.c.l.b16 %v133
    %v472 = vunpack.c.h.b16 %v133
    %v473 = vunpack.c.l.b16 %v134
    %v474 = vunpack.c.l.b16 %v135
    %v475 = vunpack.c.h.b16 %v135
    %v476 = vunpack.c.l.b16 %v136
    %v477 = vunpack.c.l.b16 %v137
    %v478 = vunpack.c.h.b16 %v137
    %v479 = vunpack.c.l.b16 %v138
    %v480 = vunpack.c.l.b16 %v139
    %v481 = vunpack.c.h.b16 %v139
    %v482 = vunpack.c.l.b16 %v140
    %v483 = vunpack.c.l.b16 %v141
    %v484 = vunpack.c.h.b16 %v141
    %v485 = vunpack.c.l.b16 %v142
    %v486 = vunpack.c.l.b16 %v143
    %v487 = vunpack.c.h.b16 %v143
    %v488 = vunpack.c.l.b16 %v144
    %v489 = vunpack.c.l.b16 %v145
    %v490 = vunpack.c.h.b16 %v145
    %v491 = vunpack.c.l.b16 %v146
    %v492 = vunpack.c.l.b16 %v147
    %v493 = vunpack.c.h.b16 %v147
    %v494 = vunpack.c.l.b16 %v148
    %v495 = vunpack.c.l.b16 %v149
    %v496 = vunpack.c.h.b16 %v149
    %v497 = vunpack.c.l.b16 %v150
    %v498 = vunpack.c.l.b16 %v151
    %v499 = vunpack.c.h.b16 %v151
    %v500 = vunpack.c.l.b16 %v152
    %v501 = vunpack.c.l.b16 %v153
    %v502 = vunpack.c.h.b16 %v153
    %v503 = vunpack.c.l.b16 %v154
    %v504 = vunpack.c.l.b16 %v155
    %v505 = vunpack.c.h.b16 %v155
    %v506 = vunpack.c.l.b16 %v156
    %v507 = vunpack.c.l.b16 %v157
    %v508 = vunpack.c.h.b16 %v157
    %v509 = vunpack.c.l.b16 %v158
    %v510 = vunpack.c.l.b16 %v159
    %v511 = vunpack.c.h.b16 %v159
    %v512 = vunpack.c.l.b16 %v160
    %v513 = vunpack.c.l.b16 %v161
    %v514 = vunpack.c.h.b16 %v161
    %v515 = vunpack.c.l.b16 %v162
    %v516 = vunpack.c.l.b16 %v163
    %v517 = vunpack.c.h.b16 %v163
    %v518 = vunpack.c.l.b16 %v164
    %v519 = vunpack.c.l.b16 %v165
    %v520 = vunpack.c.h.b16 %v165
    %v521 = vunpack.c.l.b16 %v166
    %v522 = vunpack.c.l.b16 %v167
    %v523 = vunpack.c.h.b16 %v167
    %v524 = vunpack.c.l.b16 %v168
    %v525 = vunpack.c.l.b16 %v169
    %v526 = vunpack.c.h.b16 %v169
    %v527 = vunpack.c.l.b16 %v170
    %v528 = vunpack.c.l.b16 %v171
    %v529 = vunpack.c.h.b16 %v171
    %v530 = vunpack.c.l.b16 %v172
    %v531 = vunpack.c.l.b16 %v173
    %v532 = vunpack.c.h.b16 %v173
    %v533 = vunpack.c.l.b16 %v174
    %v534 = vunpack.c.l.b16 %v175
    %v535 = vunpack.c.h.b16 %v175
    %v536 = vunpack.c.l.b16 %v176
    %v537 = vunpack.c.l.b16 %v177
    %v538 = vunpack.c.h.b16 %v177
    %v539 = vunpack.c.l.b16 %v178
    %v540 = vunpack.c.l.b16 %v179
    %v541 = vunpack.c.h.b16 %v179
    %v542 = vunpack.c.l.b16 %v180
    %v543 = vunpack.c.l.b16 %v181
    %v544 = vunpack.c.h.b16 %v181
    %v545 = vunpack.c.l.b16 %v182
    %v546 = vpack.c.b16 %v357, %v354
    %v547 = vpack.c.b16 %v358, %v355
    %v548 = vpack.c.b16 %v359, %v356
    %v549 = vpack.c.b16 %v363, %v360
    %v550 = vpack.c.b16 %v364, %v361
    %v551 = vpack.c.b16 %v365, %v362
    %v552 = vpack.c.b16 %v369, %v366
    %v553 = vpack.c.b16 %v370, %v367
    %v554 = vpack.c.b16 %v371, %v368
    %v555 = vpack.c.b16 %v375, %v372
    %v556 = vpack.c.b16 %v376, %v373
    %v557 = vpack.c.b16 %v377, %v374
    %v558 = vpack.c.b16 %v381, %v378
    %v559 = vpack.c.b16 %v382, %v379
    %v560 = vpack.c.b16 %v383, %v380
    %v561 = vpack.c.b16 %v387, %v384
    %v562 = vpack.c.b16 %v388, %v385
    %v563 = vpack.c.b16 %v389, %v386
    %v564 = vpack.c.b16 %v393, %v390
    %v565 = vpack.c.b16 %v394, %v391
    %v566 = vpack.c.b16 %v395, %v392
    %v567 = vpack.c.b16 %v399, %v396
    %v568 = vpack.c.b16 %v400, %v397
    %v569 = vpack.c.b16 %v401, %v398
    %v570 = vpack.c.b16 %v405, %v402
    %v571 = vpack.c.b16 %v406, %v403
    %v572 = vpack.c.b16 %v407, %v404
    %v573 = vpack.c.b16 %v411, %v408
    %v574 = vpack.c.b16 %v412, %v409
    %v575 = vpack.c.b16 %v413, %v410
    %v576 = vpack.c.b16 %v417, %v414
    %v577 = vpack.c.b16 %v418, %v415
    %v578 = vpack.c.b16 %v419, %v416
    %v579 = vpack.c.b16 %v423, %v420
    %v580 = vpack.c.b16 %v424, %v421
    %v581 = vpack.c.b16 %v425, %v422
    %v582 = vpack.c.b16 %v429, %v426
    %v583 = vpack.c.b16 %v430, %v427
    %v584 = vpack.c.b16 %v431, %v428
    %v585 = vpack.c.b16 %v435, %v432
    %v586 = vpack.c.b16 %v436, %v433
    %v587 = vpack.c.b16 %v437, %v434
    %v588 = vpack.c.b16 %v441, %v438
    %v589 = vpack.c.b16 %v442, %v439
    %v590 = vpack.c.b16 %v443, %v440
    %v591 = vpack.c.b16 %v447, %v444
    %v592 = vpack.c.b16 %v448, %v445
    %v593 = vpack.c.b16 %v449, %v446
    %v594 = vpack.c.b16 %v453, %v450
    %v595 = vpack.c.b16 %v454, %v451
    %v596 = vpack.c.b16 %v455, %v452
    %v597 = vpack.c.b16 %v459, %v456
    %v598 = vpack.c.b16 %v460, %v457
    %v599 = vpack.c.b16 %v461, %v458
    %v600 = vpack.c.b16 %v465, %v462
    %v601 = vpack.c.b16 %v466, %v463
    %v602 = vpack.c.b16 %v467, %v464
    %v603 = vpack.c.b16 %v471, %v468
    %v604 = vpack.c.b16 %v472, %v469
    %v605 = vpack.c.b16 %v473, %v470
    %v606 = vpack.c.b16 %v477, %v474
    %v607 = vpack.c.b16 %v478, %v475
    %v608 = vpack.c.b16 %v479, %v476
    %v609 = vpack.c.b16 %v483, %v480
    %v610 = vpack.c.b16 %v484, %v481
    %v611 = vpack.c.b16 %v485, %v482
    %v612 = vpack.c.b16 %v489, %v486
    %v613 = vpack.c.b16 %v490, %v487
    %v614 = vpack.c.b16 %v491, %v488
    %v615 = vpack.c.b16 %v495, %v492
    %v616 = vpack.c.b16 %v496, %v493
    %v617 = vpack.c.b16 %v497, %v494
    %v618 = vpack.c.b16 %v501, %v498
    %v619 = vpack.c.b16 %v502, %v499
    %v620 = vpack.c.b16 %v503, %v500
    %v621 = vpack.c.b16 %v507, %v504
    %v622 = vpack.c.b16 %v508, %v505
    %v623 = vpack.c.b16 %v509, %v506
    %v624 = vpack.c.b16 %v513, %v510
    %v625 = vpack.c.b16 %v514, %v511
    %v626 = vpack.c.b16 %v515, %v512
    %v627 = vpack.c.b16 %v519, %v516
    %v628 = vpack.c.b16 %v520, %v517
    %v629 = vpack.c.b16 %v521, %v518
    %v630 = vpack.c.b16 %v525, %v522
    %v631 = vpack.c.b16 %v526, %v523
    %v632 = vpack.c.b16 %v527, %v524
    %v633 = vpack.c.b16 %v531, %v528
    %v634 = vpack.c.b16 %v532, %v529
    %v635 = vpack.c.b16 %v533, %v530
    %v636 = vpack.c.b16 %v537, %v534
    %v637 = vpack.c.b16 %v538, %v535
    %v638 = vpack.c.b16 %v539, %v536
    %v639 = vpack.c.b16 %v543, %v540
    %v640 = vpack.c.b16 %v544, %v541
    %v641 = vpack.c.b16 %v545, %v542
    %v742 = vunpack.c.l.b16 %v183
    %v743 = vunpack.c.l.b16 %v184
    %v744 = vunpack.c.l.b16 %v185
    %v745 = vunpack.c.l.b16 %v186
    %v746 = vunpack.c.l.b16 %v187
    %v747 = vunpack.c.l.b16 %v188
    %v748 = vunpack.c.l.b16 %v189
    %v749 = vunpack.c.l.b16 %v190
    %v750 = vunpack.c.l.b16 %v191
    %v751 = vunpack.c.l.b16 %v192
    %v752 = vunpack.c.l.b16 %v193
    %v753 = vunpack.c.l.b16 %v194
    %v754 = vunpack.c.l.b16 %v195
    %v755 = vunpack.c.l.b16 %v196
    %v756 = vunpack.c.l.b16 %v197
    %v757 = vunpack.c.l.b16 %v198
    %v758 = vunpack.c.l.b16 %v199
    %v759 = vunpack.c.l.b16 %v200
    %v760 = vunpack.c.l.b16 %v201
    %v761 = vunpack.c.l.b16 %v202
    %v762 = vunpack.c.l.b16 %v203
    %v763 = vunpack.c.l.b16 %v204
    %v764 = vunpack.c.l.b16 %v205
    %v765 = vunpack.c.l.b16 %v206
    %v766 = vunpack.c.l.b16 %v207
    %v767 = vunpack.c.l.b16 %v208
    %v768 = vunpack.c.l.b16 %v209
    %v769 = vunpack.c.l.b16 %v210
    %v770 = vunpack.c.l.b16 %v211
    %v771 = vunpack.c.l.b16 %v212
    %v772 = vunpack.c.l.b16 %v213
    %v773 = vunpack.c.l.b16 %v214
    %v774 = vunpack.c.l.b16 %v215
    %v775 = vunpack.c.l.b16 %v216
    %v776 = vunpack.c.l.b16 %v217
    %v777 = vunpack.c.l.b16 %v218
    %v778 = vpack.c.b16 %v743, %v742
    %v779 = vpack.c.b16 %v745, %v744
    %v780 = vpack.c.b16 %v747, %v746
    %v781 = vpack.c.b16 %v749, %v748
    %v782 = vpack.c.b16 %v751, %v750
    %v783 = vpack.c.b16 %v753, %v752
    %v784 = vpack.c.b16 %v755, %v754
    %v785 = vpack.c.b16 %v757, %v756
    %v786 = vpack.c.b16 %v759, %v758
    %v787 = vpack.c.b16 %v761, %v760
    %v788 = vpack.c.b16 %v763, %v762
    %v789 = vpack.c.b16 %v765, %v764
    %v790 = vpack.c.b16 %v767, %v766
    %v791 = vpack.c.b16 %v769, %v768
    %v792 = vpack.c.b16 %v771, %v770
    %v793 = vpack.c.b16 %v773, %v772
    %v794 = vpack.c.b16 %v775, %v774
    %v795 = vpack.c.b16 %v777, %v776
    %vm814 = vcmask 261120
    %v816 = vsel %vm814, %v548, 0
    %v819 = vsel %vm814, %v551, 0
    %v822 = vsel %vm814, %v554, 0
    %v825 = vsel %vm814, %v557, 0
    %v828 = vsel %vm814, %v560, 0
    %v831 = vsel %vm814, %v563, 0
    %v834 = vsel %vm814, %v566, 0
    %v837 = vsel %vm814, %v569, 0
    %v840 = vsel %vm814, %v572, 0
    %v843 = vsel %vm814, %v575, 0
    %v846 = vsel %vm814, %v578, 0
    %v849 = vsel %vm814, %v581, 0
    %v852 = vsel %vm814, %v584, 0
    %v855 = vsel %vm814, %v587, 0
    %v858 = vsel %vm814, %v590, 0
    %v861 = vsel %vm814, %v593, 0
    %v864 = vsel %vm814, %v596, 0
    %v867 = vsel %vm814, %v599, 0
    %v870 = vsel %vm814, %v602, 0
    %v873 = vsel %vm814, %v605, 0
    %v876 = vsel %vm814, %v608, 0
    %v879 = vsel %vm814, %v611, 0
    %v882 = vsel %vm814, %v614, 0
    %v885 = vsel %vm814, %v617, 0
    %v888 = vsel %vm814, %v620, 0
    %v891 = vsel %vm814, %v623, 0
    %v894 = vsel %vm814, %v626, 0
    %v897 = vsel %vm814, %v629, 0
    %v900 = vsel %vm814, %v632, 0
    %v903 = vsel %vm814, %v635, 0
    %v906 = vsel %vm814, %v638, 0
    %v909 = vsel %vm814, %v641, 0
    %911 = vmatprep.subr.bf16.mxu0 0
    %912 = vmatpush1.bf16.msra.mxu0 %v778
    %913 = vmatprep.subr.bf16.mxu0 0
    %914 = vmatpush1.bf16.msra.mxu0 %v779
    %915 = vmatprep.subr.bf16.mxu0 0
    %916 = vmatpush1.bf16.msra.mxu0 %v780
    %917 = vmatprep.subr.bf16.mxu0 0
    %918 = vmatpush1.bf16.msra.mxu0 %v781
    %919 = vmatprep.subr.bf16.mxu0 0
    %920 = vmatpush1.bf16.msra.mxu0 %v782
    %921 = vmatprep.subr.bf16.mxu0 0
    %922 = vmatpush1.bf16.msra.mxu0 %v783
    %923 = vmatprep.subr.bf16.mxu0 0
    %924 = vmatpush1.bf16.msra.mxu0 %v784
    %925 = vmatprep.subr.bf16.mxu0 0
    %926 = vmatpush1.bf16.msra.mxu0 %v785
    %927 = vmatprep.subr.bf16.mxu0 0
    %928 = vmatpush1.bf16.msra.mxu0 %v786
    %929 = vmatprep.subr.bf16.mxu0 0
    %930 = vmatpush1.bf16.msra.mxu0 %v787
    %931 = vmatprep.subr.bf16.mxu0 0
    %932 = vmatpush1.bf16.msra.mxu0 %v788
    %933 = vmatprep.subr.bf16.mxu0 0
    %934 = vmatpush1.bf16.msra.mxu0 %v789
    %935 = vmatprep.subr.bf16.mxu0 0
    %936 = vmatpush1.bf16.msra.mxu0 %v790
    %937 = vmatprep.subr.bf16.mxu0 0
    %938 = vmatpush1.bf16.msra.mxu0 %v791
    %939 = vmatprep.subr.bf16.mxu0 0
    %940 = vmatpush1.bf16.msra.mxu0 %v792
    %941 = vmatprep.subr.bf16.mxu0 0
    %942 = vmatpush1.bf16.msra.mxu0 %v793
    %943 = vmatprep.mubr.bf16.mxu0 %v547
    %944 = vmatmul.mubr.bf16.gmra.mrb[0].mxu0 %v546
    %v945 = vpop.f32.mrb[0].mxu0
    %v946 = vadd.f32 %v224, %v945
    %v947 = vpop.f32.mrb[0].mxu0
    %v948 = vpop.f32.mrb[0].mxu0
    %v949 = vadd.f32 %v224, %v948
    %v950 = vpop.f32.mrb[0].mxu0
    %951 = vmatprep.mubr.bf16.mxu0 %v550
    %952 = vmatmul.mubr.bf16.gmra.mrb[0].mxu0 %v549
    %v953 = vpop.f32.mrb[0].mxu0
    %v954 = vadd.f32 %v224, %v953
    %v955 = vpop.f32.mrb[0].mxu0
    %v956 = vpop.f32.mrb[0].mxu0
    %v957 = vadd.f32 %v224, %v956
    %v958 = vpop.f32.mrb[0].mxu0
    %959 = vmatprep.mubr.bf16.mxu0 %v553
    %960 = vmatmul.mubr.bf16.gmra.mrb[0].mxu0 %v552
    %v961 = vpop.f32.mrb[0].mxu0
    %v962 = vadd.f32 %v224, %v961
    %v963 = vpop.f32.mrb[0].mxu0
    %v964 = vpop.f32.mrb[0].mxu0
    %v965 = vadd.f32 %v224, %v964
    %v966 = vpop.f32.mrb[0].mxu0
    %967 = vmatprep.mubr.bf16.mxu0 %v556
    %968 = vmatmul.mubr.bf16.gmra.mrb[0].mxu0 %v555
    %v969 = vpop.f32.mrb[0].mxu0
    %v970 = vadd.f32 %v224, %v969
    %v971 = vpop.f32.mrb[0].mxu0
    %v972 = vpop.f32.mrb[0].mxu0
    %v973 = vadd.f32 %v224, %v972
    %v974 = vpop.f32.mrb[0].mxu0
    %975 = vmatprep.mubr.bf16.mxu0 %v559
    %976 = vmatmul.mubr.bf16.gmra.mrb[0].mxu0 %v558
    %v977 = vpop.f32.mrb[0].mxu0
    %v978 = vadd.f32 %v224, %v977
    %v979 = vpop.f32.mrb[0].mxu0
    %v980 = vpop.f32.mrb[0].mxu0
    %v981 = vadd.f32 %v224, %v980
    %v982 = vpop.f32.mrb[0].mxu0
    %983 = vmatprep.mubr.bf16.mxu0 %v562
    %984 = vmatmul.mubr.bf16.gmra.mrb[0].mxu0 %v561
    %v985 = vpop.f32.mrb[0].mxu0
    %v986 = vadd.f32 %v224, %v985
    %v987 = vpop.f32.mrb[0].mxu0
    %v988 = vpop.f32.mrb[0].mxu0
    %v989 = vadd.f32 %v224, %v988
    %v990 = vpop.f32.mrb[0].mxu0
    %991 = vmatprep.mubr.bf16.mxu0 %v565
    %992 = vmatmul.mubr.bf16.gmra.mrb[0].mxu0 %v564
    %v993 = vpop.f32.mrb[0].mxu0
    %v994 = vadd.f32 %v224, %v993
    %v995 = vpop.f32.mrb[0].mxu0
    %v996 = vpop.f32.mrb[0].mxu0
    %v997 = vadd.f32 %v224, %v996
    %v998 = vpop.f32.mrb[0].mxu0
    %999 = vmatprep.mubr.bf16.mxu0 %v568
    %1000 = vmatmul.mubr.bf16.gmra.mrb[0].mxu0 %v567
    %v1001 = vpop.f32.mrb[0].mxu0
    %v1002 = vadd.f32 %v224, %v1001
    %v1003 = vpop.f32.mrb[0].mxu0
    %v1004 = vpop.f32.mrb[0].mxu0
    %v1005 = vadd.f32 %v224, %v1004
    %v1006 = vpop.f32.mrb[0].mxu0
    %1007 = vmatprep.mubr.bf16.mxu0 %v571
    %1008 = vmatmul.mubr.bf16.gmra.mrb[0].mxu0 %v570
    %v1009 = vpop.f32.mrb[0].mxu0
    %v1010 = vadd.f32 %v224, %v1009
    %v1011 = vpop.f32.mrb[0].mxu0
    %v1012 = vpop.f32.mrb[0].mxu0
    %v1013 = vadd.f32 %v224, %v1012
    %v1014 = vpop.f32.mrb[0].mxu0
    %1015 = vmatprep.mubr.bf16.mxu0 %v574
    %1016 = vmatmul.mubr.bf16.gmra.mrb[0].mxu0 %v573
    %v1017 = vpop.f32.mrb[0].mxu0
    %v1018 = vadd.f32 %v224, %v1017
    %v1019 = vpop.f32.mrb[0].mxu0
    %v1020 = vpop.f32.mrb[0].mxu0
    %v1021 = vadd.f32 %v224, %v1020
    %v1022 = vpop.f32.mrb[0].mxu0
    %1023 = vmatprep.mubr.bf16.mxu0 %v577
    %1024 = vmatmul.mubr.bf16.gmra.mrb[0].mxu0 %v576
    %v1025 = vpop.f32.mrb[0].mxu0
    %v1026 = vadd.f32 %v224, %v1025
    %v1027 = vpop.f32.mrb[0].mxu0
    %v1028 = vpop.f32.mrb[0].mxu0
    %v1029 = vadd.f32 %v224, %v1028
    %v1030 = vpop.f32.mrb[0].mxu0
    %1031 = vmatprep.mubr.bf16.mxu0 %v580
    %1032 = vmatmul.mubr.bf16.gmra.mrb[0].mxu0 %v579
    %v1033 = vpop.f32.mrb[0].mxu0
    %v1034 = vadd.f32 %v224, %v1033
    %v1035 = vpop.f32.mrb[0].mxu0
    %v1036 = vpop.f32.mrb[0].mxu0
    %v1037 = vadd.f32 %v224, %v1036
    %v1038 = vpop.f32.mrb[0].mxu0
    %1039 = vmatprep.mubr.bf16.mxu0 %v583
    %1040 = vmatmul.mubr.bf16.gmra.mrb[0].mxu0 %v582
    %v1041 = vpop.f32.mrb[0].mxu0
    %v1042 = vadd.f32 %v224, %v1041
    %v1043 = vpop.f32.mrb[0].mxu0
    %v1044 = vpop.f32.mrb[0].mxu0
    %v1045 = vadd.f32 %v224, %v1044
    %v1046 = vpop.f32.mrb[0].mxu0
    %1047 = vmatprep.mubr.bf16.mxu0 %v586
    %1048 = vmatmul.mubr.bf16.gmra.mrb[0].mxu0 %v585
    %v1049 = vpop.f32.mrb[0].mxu0
    %v1050 = vadd.f32 %v224, %v1049
    %v1051 = vpop.f32.mrb[0].mxu0
    %v1052 = vpop.f32.mrb[0].mxu0
    %v1053 = vadd.f32 %v224, %v1052
    %v1054 = vpop.f32.mrb[0].mxu0
    %1055 = vmatprep.mubr.bf16.mxu0 %v589
    %1056 = vmatmul.mubr.bf16.gmra.mrb[0].mxu0 %v588
    %v1057 = vpop.f32.mrb[0].mxu0
    %v1058 = vadd.f32 %v224, %v1057
    %v1059 = vpop.f32.mrb[0].mxu0
    %v1060 = vpop.f32.mrb[0].mxu0
    %v1061 = vadd.f32 %v224, %v1060
    %v1062 = vpop.f32.mrb[0].mxu0
    %1063 = vmatprep.mubr.bf16.mxu0 %v592
    %1064 = vmatmul.mubr.bf16.gmra.mrb[0].mxu0 %v591
    %v1065 = vpop.f32.mrb[0].mxu0
    %v1066 = vadd.f32 %v224, %v1065
    %v1067 = vpop.f32.mrb[0].mxu0
    %v1068 = vpop.f32.mrb[0].mxu0
    %v1069 = vadd.f32 %v224, %v1068
    %v1070 = vpop.f32.mrb[0].mxu0
    %1071 = vmatprep.mubr.bf16.mxu0 %v595
    %1072 = vmatmul.mubr.bf16.gmra.mrb[0].mxu0 %v594
    %v1073 = vpop.f32.mrb[0].mxu0
    %v1074 = vadd.f32 %v224, %v1073
    %v1075 = vpop.f32.mrb[0].mxu0
    %v1076 = vpop.f32.mrb[0].mxu0
    %v1077 = vadd.f32 %v224, %v1076
    %v1078 = vpop.f32.mrb[0].mxu0
    %1079 = vmatprep.mubr.bf16.mxu0 %v598
    %1080 = vmatmul.mubr.bf16.gmra.mrb[0].mxu0 %v597
    %v1081 = vpop.f32.mrb[0].mxu0
    %v1082 = vadd.f32 %v224, %v1081
    %v1083 = vpop.f32.mrb[0].mxu0
    %v1084 = vpop.f32.mrb[0].mxu0
    %v1085 = vadd.f32 %v224, %v1084
    %v1086 = vpop.f32.mrb[0].mxu0
    %1087 = vmatprep.mubr.bf16.mxu0 %v601
    %1088 = vmatmul.mubr.bf16.gmra.mrb[0].mxu0 %v600
    %v1089 = vpop.f32.mrb[0].mxu0
    %v1090 = vadd.f32 %v224, %v1089
    %v1091 = vpop.f32.mrb[0].mxu0
    %v1092 = vpop.f32.mrb[0].mxu0
    %v1093 = vadd.f32 %v224, %v1092
    %v1094 = vpop.f32.mrb[0].mxu0
    %1095 = vmatprep.mubr.bf16.mxu0 %v604
    %1096 = vmatmul.mubr.bf16.gmra.mrb[0].mxu0 %v603
    %v1097 = vpop.f32.mrb[0].mxu0
    %v1098 = vadd.f32 %v224, %v1097
    %v1099 = vpop.f32.mrb[0].mxu0
    %v1100 = vpop.f32.mrb[0].mxu0
    %v1101 = vadd.f32 %v224, %v1100
    %v1102 = vpop.f32.mrb[0].mxu0
    %1103 = vmatprep.mubr.bf16.mxu0 %v607
    %1104 = vmatmul.mubr.bf16.gmra.mrb[0].mxu0 %v606
    %v1105 = vpop.f32.mrb[0].mxu0
    %v1106 = vadd.f32 %v224, %v1105
    %v1107 = vpop.f32.mrb[0].mxu0
    %v1108 = vpop.f32.mrb[0].mxu0
    %v1109 = vadd.f32 %v224, %v1108
    %v1110 = vpop.f32.mrb[0].mxu0
    %1111 = vmatprep.mubr.bf16.mxu0 %v610
    %1112 = vmatmul.mubr.bf16.gmra.mrb[0].mxu0 %v609
    %v1113 = vpop.f32.mrb[0].mxu0
    %v1114 = vadd.f32 %v224, %v1113
    %v1115 = vpop.f32.mrb[0].mxu0
    %v1116 = vpop.f32.mrb[0].mxu0
    %v1117 = vadd.f32 %v224, %v1116
    %v1118 = vpop.f32.mrb[0].mxu0
    %1119 = vmatprep.mubr.bf16.mxu0 %v613
    %1120 = vmatmul.mubr.bf16.gmra.mrb[0].mxu0 %v612
    %v1121 = vpop.f32.mrb[0].mxu0
    %v1122 = vadd.f32 %v224, %v1121
    %v1123 = vpop.f32.mrb[0].mxu0
    %v1124 = vpop.f32.mrb[0].mxu0
    %v1125 = vadd.f32 %v224, %v1124
    %v1126 = vpop.f32.mrb[0].mxu0
    %1127 = vmatprep.mubr.bf16.mxu0 %v616
    %1128 = vmatmul.mubr.bf16.gmra.mrb[0].mxu0 %v615
    %v1129 = vpop.f32.mrb[0].mxu0
    %v1130 = vadd.f32 %v224, %v1129
    %v1131 = vpop.f32.mrb[0].mxu0
    %v1132 = vpop.f32.mrb[0].mxu0
    %v1133 = vadd.f32 %v224, %v1132
    %v1134 = vpop.f32.mrb[0].mxu0
    %1135 = vmatprep.mubr.bf16.mxu0 %v619
    %1136 = vmatmul.mubr.bf16.gmra.mrb[0].mxu0 %v618
    %v1137 = vpop.f32.mrb[0].mxu0
    %v1138 = vadd.f32 %v224, %v1137
    %v1139 = vpop.f32.mrb[0].mxu0
    %v1140 = vpop.f32.mrb[0].mxu0
    %v1141 = vadd.f32 %v224, %v1140
    %v1142 = vpop.f32.mrb[0].mxu0
    %1143 = vmatprep.mubr.bf16.mxu0 %v622
    %1144 = vmatmul.mubr.bf16.gmra.mrb[0].mxu0 %v621
    %v1145 = vpop.f32.mrb[0].mxu0
    %v1146 = vadd.f32 %v224, %v1145
    %v1147 = vpop.f32.mrb[0].mxu0
    %v1148 = vpop.f32.mrb[0].mxu0
    %v1149 = vadd.f32 %v224, %v1148
    %v1150 = vpop.f32.mrb[0].mxu0
    %1151 = vmatprep.mubr.bf16.mxu0 %v625
    %1152 = vmatmul.mubr.bf16.gmra.mrb[0].mxu0 %v624
    %v1153 = vpop.f32.mrb[0].mxu0
    %v1154 = vadd.f32 %v224, %v1153
    %v1155 = vpop.f32.mrb[0].mxu0
    %v1156 = vpop.f32.mrb[0].mxu0
    %v1157 = vadd.f32 %v224, %v1156
    %v1158 = vpop.f32.mrb[0].mxu0
    %1159 = vmatprep.mubr.bf16.mxu0 %v628
    %1160 = vmatmul.mubr.bf16.gmra.mrb[0].mxu0 %v627
    %v1161 = vpop.f32.mrb[0].mxu0
    %v1162 = vadd.f32 %v224, %v1161
    %v1163 = vpop.f32.mrb[0].mxu0
    %v1164 = vpop.f32.mrb[0].mxu0
    %v1165 = vadd.f32 %v224, %v1164
    %v1166 = vpop.f32.mrb[0].mxu0
    %1167 = vmatprep.mubr.bf16.mxu0 %v631
    %1168 = vmatmul.mubr.bf16.gmra.mrb[0].mxu0 %v630
    %v1169 = vpop.f32.mrb[0].mxu0
    %v1170 = vadd.f32 %v224, %v1169
    %v1171 = vpop.f32.mrb[0].mxu0
    %v1172 = vpop.f32.mrb[0].mxu0
    %v1173 = vadd.f32 %v224, %v1172
    %v1174 = vpop.f32.mrb[0].mxu0
    %1175 = vmatprep.mubr.bf16.mxu0 %v634
    %1176 = vmatmul.mubr.bf16.gmra.mrb[0].mxu0 %v633
    %v1177 = vpop.f32.mrb[0].mxu0
    %v1178 = vadd.f32 %v224, %v1177
    %v1179 = vpop.f32.mrb[0].mxu0
    %v1180 = vpop.f32.mrb[0].mxu0
    %v1181 = vadd.f32 %v224, %v1180
    %v1182 = vpop.f32.mrb[0].mxu0
    %1183 = vmatprep.mubr.bf16.mxu0 %v637
    %1184 = vmatmul.mubr.bf16.gmra.mrb[0].mxu0 %v636
    %v1185 = vpop.f32.mrb[0].mxu0
    %v1186 = vadd.f32 %v224, %v1185
    %v1187 = vpop.f32.mrb[0].mxu0
    %v1188 = vpop.f32.mrb[0].mxu0
    %v1189 = vadd.f32 %v224, %v1188
    %v1190 = vpop.f32.mrb[0].mxu0
    %1191 = vmatprep.mubr.bf16.mxu0 %v640
    %1192 = vmatmul.mubr.bf16.gmra.mrb[0].mxu0 %v639
    %v1193 = vpop.f32.mrb[0].mxu0
    %v1194 = vadd.f32 %v224, %v1193
    %v1195 = vpop.f32.mrb[0].mxu0
    %v1196 = vpop.f32.mrb[0].mxu0
    %v1197 = vadd.f32 %v224, %v1196
    %v1198 = vpop.f32.mrb[0].mxu0
    %1199 = vdwg.mxu0
    %1200 = vmatprep.subr.bf16.mxu0 0
    %1201 = vmatpush1.bf16.msra.mxu0 %v794
    %1202 = vmatprep.subr.bf16.mxu0 0
    %1203 = vmatpush1.bf16.msra.mxu0 %v795
    %1204 = vmatprep.subr.bf16.mxu0 0
    %1205 = vmatpush1.bf16.msra.mxu0 0
    %1206 = vmatprep.subr.bf16.mxu0 0
    %1207 = vmatpush1.bf16.msra.mxu0 0
    %1208 = vmatprep.subr.bf16.mxu0 0
    %1209 = vmatpush1.bf16.msra.mxu0 0
    %1210 = vmatprep.subr.bf16.mxu0 0
    %1211 = vmatpush1.bf16.msra.mxu0 0
    %1212 = vmatprep.subr.bf16.mxu0 0
    %1213 = vmatpush1.bf16.msra.mxu0 0
    %1214 = vmatprep.subr.bf16.mxu0 0
    %1215 = vmatpush1.bf16.msra.mxu0 0
    %1216 = vmatprep.subr.bf16.mxu0 0
    %1217 = vmatpush1.bf16.msra.mxu0 0
    %1218 = vmatprep.subr.bf16.mxu0 0
    %1219 = vmatpush1.bf16.msra.mxu0 0
    %1220 = vmatprep.subr.bf16.mxu0 0
    %1221 = vmatpush1.bf16.msra.mxu0 0
    %1222 = vmatprep.subr.bf16.mxu0 0
    %1223 = vmatpush1.bf16.msra.mxu0 0
    %1224 = vmatprep.subr.bf16.mxu0 0
    %1225 = vmatpush1.bf16.msra.mxu0 0
    %1226 = vmatprep.subr.bf16.mxu0 0
    %1227 = vmatpush1.bf16.msra.mxu0 0
    %1228 = vmatprep.subr.bf16.mxu0 0
    %1229 = vmatpush1.bf16.msra.mxu0 0
    %1230 = vmatprep.subr.bf16.mxu0 0
    %1231 = vmatpush1.bf16.msra.mxu0 0
    %1232 = vmatprep.mubr.bf16.mxu0 0
    %1233 = vmatmul.mubr.bf16.gmra.mrb[0].mxu0 %v816
    %v1234 = vpop.f32.mrb[0].mxu0
    %v1235 = vadd.f32 %v946, %v1234
    %v1236 = vpop.f32.mrb[0].mxu0
    %v1237 = vpop.f32.mrb[0].mxu0
    %v1238 = vadd.f32 %v949, %v1237
    %v1239 = vpop.f32.mrb[0].mxu0
    %1240 = vmatprep.mubr.bf16.mxu0 0
    %1241 = vmatmul.mubr.bf16.gmra.mrb[0].mxu0 %v819
    %v1242 = vpop.f32.mrb[0].mxu0
    %v1243 = vadd.f32 %v954, %v1242
    %v1244 = vpop.f32.mrb[0].mxu0
    %v1245 = vpop.f32.mrb[0].mxu0
    %v1246 = vadd.f32 %v957, %v1245
    %v1247 = vpop.f32.mrb[0].mxu0
    %1248 = vmatprep.mubr.bf16.mxu0 0
    %1249 = vmatmul.mubr.bf16.gmra.mrb[0].mxu0 %v822
    %v1250 = vpop.f32.mrb[0].mxu0
    %v1251 = vadd.f32 %v962, %v1250
    %v1252 = vpop.f32.mrb[0].mxu0
    %v1253 = vpop.f32.mrb[0].mxu0
    %v1254 = vadd.f32 %v965, %v1253
    %v1255 = vpop.f32.mrb[0].mxu0
    %1256 = vmatprep.mubr.bf16.mxu0 0
    %1257 = vmatmul.mubr.bf16.gmra.mrb[0].mxu0 %v825
    %v1258 = vpop.f32.mrb[0].mxu0
    %v1259 = vadd.f32 %v970, %v1258
    %v1260 = vpop.f32.mrb[0].mxu0
    %v1261 = vpop.f32.mrb[0].mxu0
    %v1262 = vadd.f32 %v973, %v1261
    %v1263 = vpop.f32.mrb[0].mxu0
    %1264 = vmatprep.mubr.bf16.mxu0 0
    %1265 = vmatmul.mubr.bf16.gmra.mrb[0].mxu0 %v828
    %v1266 = vpop.f32.mrb[0].mxu0
    %v1267 = vadd.f32 %v978, %v1266
    %v1268 = vpop.f32.mrb[0].mxu0
    %v1269 = vpop.f32.mrb[0].mxu0
    %v1270 = vadd.f32 %v981, %v1269
    %v1271 = vpop.f32.mrb[0].mxu0
    %1272 = vmatprep.mubr.bf16.mxu0 0
    %1273 = vmatmul.mubr.bf16.gmra.mrb[0].mxu0 %v831
    %v1274 = vpop.f32.mrb[0].mxu0
    %v1275 = vadd.f32 %v986, %v1274
    %v1276 = vpop.f32.mrb[0].mxu0
    %v1277 = vpop.f32.mrb[0].mxu0
    %v1278 = vadd.f32 %v989, %v1277
    %v1279 = vpop.f32.mrb[0].mxu0
    %1280 = vmatprep.mubr.bf16.mxu0 0
    %1281 = vmatmul.mubr.bf16.gmra.mrb[0].mxu0 %v834
    %v1282 = vpop.f32.mrb[0].mxu0
    %v1283 = vadd.f32 %v994, %v1282
    %v1284 = vpop.f32.mrb[0].mxu0
    %v1285 = vpop.f32.mrb[0].mxu0
    %v1286 = vadd.f32 %v997, %v1285
    %v1287 = vpop.f32.mrb[0].mxu0
    %1288 = vmatprep.mubr.bf16.mxu0 0
    %1289 = vmatmul.mubr.bf16.gmra.mrb[0].mxu0 %v837
    %v1290 = vpop.f32.mrb[0].mxu0
    %v1291 = vadd.f32 %v1002, %v1290
    %v1292 = vpop.f32.mrb[0].mxu0
    %v1293 = vpop.f32.mrb[0].mxu0
    %v1294 = vadd.f32 %v1005, %v1293
    %v1295 = vpop.f32.mrb[0].mxu0
    %1296 = vmatprep.mubr.bf16.mxu0 0
    %1297 = vmatmul.mubr.bf16.gmra.mrb[0].mxu0 %v840
    %v1298 = vpop.f32.mrb[0].mxu0
    %v1299 = vadd.f32 %v1010, %v1298
    %v1300 = vpop.f32.mrb[0].mxu0
    %v1301 = vpop.f32.mrb[0].mxu0
    %v1302 = vadd.f32 %v1013, %v1301
    %v1303 = vpop.f32.mrb[0].mxu0
    %1304 = vmatprep.mubr.bf16.mxu0 0
    %1305 = vmatmul.mubr.bf16.gmra.mrb[0].mxu0 %v843
    %v1306 = vpop.f32.mrb[0].mxu0
    %v1307 = vadd.f32 %v1018, %v1306
    %v1308 = vpop.f32.mrb[0].mxu0
    %v1309 = vpop.f32.mrb[0].mxu0
    %v1310 = vadd.f32 %v1021, %v1309
    %v1311 = vpop.f32.mrb[0].mxu0
    %1312 = vmatprep.mubr.bf16.mxu0 0
    %1313 = vmatmul.mubr.bf16.gmra.mrb[0].mxu0 %v846
    %v1314 = vpop.f32.mrb[0].mxu0
    %v1315 = vadd.f32 %v1026, %v1314
    %v1316 = vpop.f32.mrb[0].mxu0
    %v1317 = vpop.f32.mrb[0].mxu0
    %v1318 = vadd.f32 %v1029, %v1317
    %v1319 = vpop.f32.mrb[0].mxu0
    %1320 = vmatprep.mubr.bf16.mxu0 0
    %1321 = vmatmul.mubr.bf16.gmra.mrb[0].mxu0 %v849
    %v1322 = vpop.f32.mrb[0].mxu0
    %v1323 = vadd.f32 %v1034, %v1322
    %v1324 = vpop.f32.mrb[0].mxu0
    %v1325 = vpop.f32.mrb[0].mxu0
    %v1326 = vadd.f32 %v1037, %v1325
    %v1327 = vpop.f32.mrb[0].mxu0
    %1328 = vmatprep.mubr.bf16.mxu0 0
    %1329 = vmatmul.mubr.bf16.gmra.mrb[0].mxu0 %v852
    %v1330 = vpop.f32.mrb[0].mxu0
    %v1331 = vadd.f32 %v1042, %v1330
    %v1332 = vpop.f32.mrb[0].mxu0
    %v1333 = vpop.f32.mrb[0].mxu0
    %v1334 = vadd.f32 %v1045, %v1333
    %v1335 = vpop.f32.mrb[0].mxu0
    %1336 = vmatprep.mubr.bf16.mxu0 0
    %1337 = vmatmul.mubr.bf16.gmra.mrb[0].mxu0 %v855
    %v1338 = vpop.f32.mrb[0].mxu0
    %v1339 = vadd.f32 %v1050, %v1338
    %v1340 = vpop.f32.mrb[0].mxu0
    %v1341 = vpop.f32.mrb[0].mxu0
    %v1342 = vadd.f32 %v1053, %v1341
    %v1343 = vpop.f32.mrb[0].mxu0
    %1344 = vmatprep.mubr.bf16.mxu0 0
    %1345 = vmatmul.mubr.bf16.gmra.mrb[0].mxu0 %v858
    %v1346 = vpop.f32.mrb[0].mxu0
    %v1347 = vadd.f32 %v1058, %v1346
    %v1348 = vpop.f32.mrb[0].mxu0
    %v1349 = vpop.f32.mrb[0].mxu0
    %v1350 = vadd.f32 %v1061, %v1349
    %v1351 = vpop.f32.mrb[0].mxu0
    %1352 = vmatprep.mubr.bf16.mxu0 0
    %1353 = vmatmul.mubr.bf16.gmra.mrb[0].mxu0 %v861
    %v1354 = vpop.f32.mrb[0].mxu0
    %v1355 = vadd.f32 %v1066, %v1354
    %v1356 = vpop.f32.mrb[0].mxu0
    %v1357 = vpop.f32.mrb[0].mxu0
    %v1358 = vadd.f32 %v1069, %v1357
    %v1359 = vpop.f32.mrb[0].mxu0
    %1360 = vmatprep.mubr.bf16.mxu0 0
    %1361 = vmatmul.mubr.bf16.gmra.mrb[0].mxu0 %v864
    %v1362 = vpop.f32.mrb[0].mxu0
    %v1363 = vadd.f32 %v1074, %v1362
    %v1364 = vpop.f32.mrb[0].mxu0
    %v1365 = vpop.f32.mrb[0].mxu0
    %v1366 = vadd.f32 %v1077, %v1365
    %v1367 = vpop.f32.mrb[0].mxu0
    %1368 = vmatprep.mubr.bf16.mxu0 0
    %1369 = vmatmul.mubr.bf16.gmra.mrb[0].mxu0 %v867
    %v1370 = vpop.f32.mrb[0].mxu0
    %v1371 = vadd.f32 %v1082, %v1370
    %v1372 = vpop.f32.mrb[0].mxu0
    %v1373 = vpop.f32.mrb[0].mxu0
    %v1374 = vadd.f32 %v1085, %v1373
    %v1375 = vpop.f32.mrb[0].mxu0
    %1376 = vmatprep.mubr.bf16.mxu0 0
    %1377 = vmatmul.mubr.bf16.gmra.mrb[0].mxu0 %v870
    %v1378 = vpop.f32.mrb[0].mxu0
    %v1379 = vadd.f32 %v1090, %v1378
    %v1380 = vpop.f32.mrb[0].mxu0
    %v1381 = vpop.f32.mrb[0].mxu0
    %v1382 = vadd.f32 %v1093, %v1381
    %v1383 = vpop.f32.mrb[0].mxu0
    %1384 = vmatprep.mubr.bf16.mxu0 0
    %1385 = vmatmul.mubr.bf16.gmra.mrb[0].mxu0 %v873
    %v1386 = vpop.f32.mrb[0].mxu0
    %v1387 = vadd.f32 %v1098, %v1386
    %v1388 = vpop.f32.mrb[0].mxu0
    %v1389 = vpop.f32.mrb[0].mxu0
    %v1390 = vadd.f32 %v1101, %v1389
    %v1391 = vpop.f32.mrb[0].mxu0
    %1392 = vmatprep.mubr.bf16.mxu0 0
    %1393 = vmatmul.mubr.bf16.gmra.mrb[0].mxu0 %v876
    %v1394 = vpop.f32.mrb[0].mxu0
    %v1395 = vadd.f32 %v1106, %v1394
    %v1396 = vpop.f32.mrb[0].mxu0
    %v1397 = vpop.f32.mrb[0].mxu0
    %v1398 = vadd.f32 %v1109, %v1397
    %v1399 = vpop.f32.mrb[0].mxu0
    %1400 = vmatprep.mubr.bf16.mxu0 0
    %1401 = vmatmul.mubr.bf16.gmra.mrb[0].mxu0 %v879
    %v1402 = vpop.f32.mrb[0].mxu0
    %v1403 = vadd.f32 %v1114, %v1402
    %v1404 = vpop.f32.mrb[0].mxu0
    %v1405 = vpop.f32.mrb[0].mxu0
    %v1406 = vadd.f32 %v1117, %v1405
    %v1407 = vpop.f32.mrb[0].mxu0
    %1408 = vmatprep.mubr.bf16.mxu0 0
    %1409 = vmatmul.mubr.bf16.gmra.mrb[0].mxu0 %v882
    %v1410 = vpop.f32.mrb[0].mxu0
    %v1411 = vadd.f32 %v1122, %v1410
    %v1412 = vpop.f32.mrb[0].mxu0
    %v1413 = vpop.f32.mrb[0].mxu0
    %v1414 = vadd.f32 %v1125, %v1413
    %v1415 = vpop.f32.mrb[0].mxu0
    %1416 = vmatprep.mubr.bf16.mxu0 0
    %1417 = vmatmul.mubr.bf16.gmra.mrb[0].mxu0 %v885
    %v1418 = vpop.f32.mrb[0].mxu0
    %v1419 = vadd.f32 %v1130, %v1418
    %v1420 = vpop.f32.mrb[0].mxu0
    %v1421 = vpop.f32.mrb[0].mxu0
    %v1422 = vadd.f32 %v1133, %v1421
    %v1423 = vpop.f32.mrb[0].mxu0
    %1424 = vmatprep.mubr.bf16.mxu0 0
    %1425 = vmatmul.mubr.bf16.gmra.mrb[0].mxu0 %v888
    %v1426 = vpop.f32.mrb[0].mxu0
    %v1427 = vadd.f32 %v1138, %v1426
    %v1428 = vpop.f32.mrb[0].mxu0
    %v1429 = vpop.f32.mrb[0].mxu0
    %v1430 = vadd.f32 %v1141, %v1429
    %v1431 = vpop.f32.mrb[0].mxu0
    %1432 = vmatprep.mubr.bf16.mxu0 0
    %1433 = vmatmul.mubr.bf16.gmra.mrb[0].mxu0 %v891
    %v1434 = vpop.f32.mrb[0].mxu0
    %v1435 = vadd.f32 %v1146, %v1434
    %v1436 = vpop.f32.mrb[0].mxu0
    %v1437 = vpop.f32.mrb[0].mxu0
    %v1438 = vadd.f32 %v1149, %v1437
    %v1439 = vpop.f32.mrb[0].mxu0
    %1440 = vmatprep.mubr.bf16.mxu0 0
    %1441 = vmatmul.mubr.bf16.gmra.mrb[0].mxu0 %v894
    %v1442 = vpop.f32.mrb[0].mxu0
    %v1443 = vadd.f32 %v1154, %v1442
    %v1444 = vpop.f32.mrb[0].mxu0
    %v1445 = vpop.f32.mrb[0].mxu0
    %v1446 = vadd.f32 %v1157, %v1445
    %v1447 = vpop.f32.mrb[0].mxu0
    %1448 = vmatprep.mubr.bf16.mxu0 0
    %1449 = vmatmul.mubr.bf16.gmra.mrb[0].mxu0 %v897
    %v1450 = vpop.f32.mrb[0].mxu0
    %v1451 = vadd.f32 %v1162, %v1450
    %v1452 = vpop.f32.mrb[0].mxu0
    %v1453 = vpop.f32.mrb[0].mxu0
    %v1454 = vadd.f32 %v1165, %v1453
    %v1455 = vpop.f32.mrb[0].mxu0
    %1456 = vmatprep.mubr.bf16.mxu0 0
    %1457 = vmatmul.mubr.bf16.gmra.mrb[0].mxu0 %v900
    %v1458 = vpop.f32.mrb[0].mxu0
    %v1459 = vadd.f32 %v1170, %v1458
    %v1460 = vpop.f32.mrb[0].mxu0
    %v1461 = vpop.f32.mrb[0].mxu0
    %v1462 = vadd.f32 %v1173, %v1461
    %v1463 = vpop.f32.mrb[0].mxu0
    %1464 = vmatprep.mubr.bf16.mxu0 0
    %1465 = vmatmul.mubr.bf16.gmra.mrb[0].mxu0 %v903
    %v1466 = vpop.f32.mrb[0].mxu0
    %v1467 = vadd.f32 %v1178, %v1466
    %v1468 = vpop.f32.mrb[0].mxu0
    %v1469 = vpop.f32.mrb[0].mxu0
    %v1470 = vadd.f32 %v1181, %v1469
    %v1471 = vpop.f32.mrb[0].mxu0
    %1472 = vmatprep.mubr.bf16.mxu0 0
    %1473 = vmatmul.mubr.bf16.gmra.mrb[0].mxu0 %v906
    %v1474 = vpop.f32.mrb[0].mxu0
    %v1475 = vadd.f32 %v1186, %v1474
    %v1476 = vpop.f32.mrb[0].mxu0
    %v1477 = vpop.f32.mrb[0].mxu0
    %v1478 = vadd.f32 %v1189, %v1477
    %v1479 = vpop.f32.mrb[0].mxu0
    %1480 = vmatprep.mubr.bf16.mxu0 0
    %1481 = vmatmul.mubr.bf16.gmra.mrb[0].mxu0 %v909
    %v1482 = vpop.f32.mrb[0].mxu0
    %v1483 = vadd.f32 %v1194, %v1482
    %v1484 = vpop.f32.mrb[0].mxu0
    %v1485 = vpop.f32.mrb[0].mxu0
    %v1486 = vadd.f32 %v1197, %v1485
    %v1487 = vpop.f32.mrb[0].mxu0
    %1488 = vdwg.mxu0
    %v1489 = vxor.u32 %v1235, 2147483648
    %v1490 = vxor.u32 %v1238, 2147483648
    %v1491 = vxor.u32 %v1243, 2147483648
    %v1492 = vxor.u32 %v1246, 2147483648
    %v1493 = vxor.u32 %v1251, 2147483648
    %v1494 = vxor.u32 %v1254, 2147483648
    %v1495 = vxor.u32 %v1259, 2147483648
    %v1496 = vxor.u32 %v1262, 2147483648
    %v1497 = vxor.u32 %v1267, 2147483648
    %v1498 = vxor.u32 %v1270, 2147483648
    %v1499 = vxor.u32 %v1275, 2147483648
    %v1500 = vxor.u32 %v1278, 2147483648
    %v1501 = vxor.u32 %v1283, 2147483648
    %v1502 = vxor.u32 %v1286, 2147483648
    %v1503 = vxor.u32 %v1291, 2147483648
    %v1504 = vxor.u32 %v1294, 2147483648
    %v1505 = vxor.u32 %v1299, 2147483648
    %v1506 = vxor.u32 %v1302, 2147483648
    %v1507 = vxor.u32 %v1307, 2147483648
    %v1508 = vxor.u32 %v1310, 2147483648
    %v1509 = vxor.u32 %v1315, 2147483648
    %v1510 = vxor.u32 %v1318, 2147483648
    %v1511 = vxor.u32 %v1323, 2147483648
    %v1512 = vxor.u32 %v1326, 2147483648
    %v1513 = vxor.u32 %v1331, 2147483648
    %v1514 = vxor.u32 %v1334, 2147483648
    %v1515 = vxor.u32 %v1339, 2147483648
    %v1516 = vxor.u32 %v1342, 2147483648
    %v1517 = vxor.u32 %v1347, 2147483648
    %v1518 = vxor.u32 %v1350, 2147483648
    %v1519 = vxor.u32 %v1355, 2147483648
    %v1520 = vxor.u32 %v1358, 2147483648
    %v1521 = vxor.u32 %v1363, 2147483648
    %v1522 = vxor.u32 %v1366, 2147483648
    %v1523 = vxor.u32 %v1371, 2147483648
    %v1524 = vxor.u32 %v1374, 2147483648
    %v1525 = vxor.u32 %v1379, 2147483648
    %v1526 = vxor.u32 %v1382, 2147483648
    %v1527 = vxor.u32 %v1387, 2147483648
    %v1528 = vxor.u32 %v1390, 2147483648
    %v1529 = vxor.u32 %v1395, 2147483648
    %v1530 = vxor.u32 %v1398, 2147483648
    %v1531 = vxor.u32 %v1403, 2147483648
    %v1532 = vxor.u32 %v1406, 2147483648
    %v1533 = vxor.u32 %v1411, 2147483648
    %v1534 = vxor.u32 %v1414, 2147483648
    %v1535 = vxor.u32 %v1419, 2147483648
    %v1536 = vxor.u32 %v1422, 2147483648
    %v1537 = vxor.u32 %v1427, 2147483648
    %v1538 = vxor.u32 %v1430, 2147483648
    %v1539 = vxor.u32 %v1435, 2147483648
    %v1540 = vxor.u32 %v1438, 2147483648
    %v1541 = vxor.u32 %v1443, 2147483648
    %v1542 = vxor.u32 %v1446, 2147483648
    %v1543 = vxor.u32 %v1451, 2147483648
    %v1544 = vxor.u32 %v1454, 2147483648
    %v1545 = vxor.u32 %v1459, 2147483648
    %v1546 = vxor.u32 %v1462, 2147483648
    %v1547 = vxor.u32 %v1467, 2147483648
    %v1548 = vxor.u32 %v1470, 2147483648
    %v1549 = vxor.u32 %v1475, 2147483648
    %v1550 = vxor.u32 %v1478, 2147483648
    %v1551 = vxor.u32 %v1483, 2147483648
    %v1552 = vxor.u32 %v1486, 2147483648
    %v1553 = vmul.f32 %v1489, 1.442695
    %v1554 = vpow.pop %v1553
    %v1555 = vmul.f32 %v1490, 1.442695
    %v1556 = vpow.pop %v1555
    %v1557 = vmul.f32 %v1491, 1.442695
    %v1558 = vpow.pop %v1557
    %v1559 = vmul.f32 %v1492, 1.442695
    %v1560 = vpow.pop %v1559
    %v1561 = vmul.f32 %v1493, 1.442695
    %v1562 = vpow.pop %v1561
    %v1563 = vmul.f32 %v1494, 1.442695
    %v1564 = vpow.pop %v1563
    %v1565 = vmul.f32 %v1495, 1.442695
    %v1566 = vpow.pop %v1565
    %v1567 = vmul.f32 %v1496, 1.442695
    %v1568 = vpow.pop %v1567
    %v1569 = vmul.f32 %v1497, 1.442695
    %v1570 = vpow.pop %v1569
    %v1571 = vmul.f32 %v1498, 1.442695
    %v1572 = vpow.pop %v1571
    %v1573 = vmul.f32 %v1499, 1.442695
    %v1574 = vpow.pop %v1573
    %v1575 = vmul.f32 %v1500, 1.442695
    %v1576 = vpow.pop %v1575
    %v1577 = vmul.f32 %v1501, 1.442695
    %v1578 = vpow.pop %v1577
    %v1579 = vmul.f32 %v1502, 1.442695
    %v1580 = vpow.pop %v1579
    %v1581 = vmul.f32 %v1503, 1.442695
    %v1582 = vpow.pop %v1581
    %v1583 = vmul.f32 %v1504, 1.442695
    %v1584 = vpow.pop %v1583
    %v1585 = vmul.f32 %v1505, 1.442695
    %v1586 = vpow.pop %v1585
    %v1587 = vmul.f32 %v1506, 1.442695
    %v1588 = vpow.pop %v1587
    %v1589 = vmul.f32 %v1507, 1.442695
    %v1590 = vpow.pop %v1589
    %v1591 = vmul.f32 %v1508, 1.442695
    %v1592 = vpow.pop %v1591
    %v1593 = vmul.f32 %v1509, 1.442695
    %v1594 = vpow.pop %v1593
    %v1595 = vmul.f32 %v1510, 1.442695
    %v1596 = vpow.pop %v1595
    %v1597 = vmul.f32 %v1511, 1.442695
    %v1598 = vpow.pop %v1597
    %v1599 = vmul.f32 %v1512, 1.442695
    %v1600 = vpow.pop %v1599
    %v1601 = vmul.f32 %v1513, 1.442695
    %v1602 = vpow.pop %v1601
    %v1603 = vmul.f32 %v1514, 1.442695
    %v1604 = vpow.pop %v1603
    %v1605 = vmul.f32 %v1515, 1.442695
    %v1606 = vpow.pop %v1605
    %v1607 = vmul.f32 %v1516, 1.442695
    %v1608 = vpow.pop %v1607
    %v1609 = vmul.f32 %v1517, 1.442695
    %v1610 = vpow.pop %v1609
    %v1611 = vmul.f32 %v1518, 1.442695
    %v1612 = vpow.pop %v1611
    %v1613 = vmul.f32 %v1519, 1.442695
    %v1614 = vpow.pop %v1613
    %v1615 = vmul.f32 %v1520, 1.442695
    %v1616 = vpow.pop %v1615
    %v1617 = vmul.f32 %v1521, 1.442695
    %v1618 = vpow.pop %v1617
    %v1619 = vmul.f32 %v1522, 1.442695
    %v1620 = vpow.pop %v1619
    %v1621 = vmul.f32 %v1523, 1.442695
    %v1622 = vpow.pop %v1621
    %v1623 = vmul.f32 %v1524, 1.442695
    %v1624 = vpow.pop %v1623
    %v1625 = vmul.f32 %v1525, 1.442695
    %v1626 = vpow.pop %v1625
    %v1627 = vmul.f32 %v1526, 1.442695
    %v1628 = vpow.pop %v1627
    %v1629 = vmul.f32 %v1527, 1.442695
    %v1630 = vpow.pop %v1629
    %v1631 = vmul.f32 %v1528, 1.442695
    %v1632 = vpow.pop %v1631
    %v1633 = vmul.f32 %v1529, 1.442695
    %v1634 = vpow.pop %v1633
    %v1635 = vmul.f32 %v1530, 1.442695
    %v1636 = vpow.pop %v1635
    %v1637 = vmul.f32 %v1531, 1.442695
    %v1638 = vpow.pop %v1637
    %v1639 = vmul.f32 %v1532, 1.442695
    %v1640 = vpow.pop %v1639
    %v1641 = vmul.f32 %v1533, 1.442695
    %v1642 = vpow.pop %v1641
    %v1643 = vmul.f32 %v1534, 1.442695
    %v1644 = vpow.pop %v1643
    %v1645 = vmul.f32 %v1535, 1.442695
    %v1646 = vpow.pop %v1645
    %v1647 = vmul.f32 %v1536, 1.442695
    %v1648 = vpow.pop %v1647
    %v1649 = vmul.f32 %v1537, 1.442695
    %v1650 = vpow.pop %v1649
    %v1651 = vmul.f32 %v1538, 1.442695
    %v1652 = vpow.pop %v1651
    %v1653 = vmul.f32 %v1539, 1.442695
    %v1654 = vpow.pop %v1653
    %v1655 = vmul.f32 %v1540, 1.442695
    %v1656 = vpow.pop %v1655
    %v1657 = vmul.f32 %v1541, 1.442695
    %v1658 = vpow.pop %v1657
    %v1659 = vmul.f32 %v1542, 1.442695
    %v1660 = vpow.pop %v1659
    %v1661 = vmul.f32 %v1543, 1.442695
    %v1662 = vpow.pop %v1661
    %v1663 = vmul.f32 %v1544, 1.442695
    %v1664 = vpow.pop %v1663
    %v1665 = vmul.f32 %v1545, 1.442695
    %v1666 = vpow.pop %v1665
    %v1667 = vmul.f32 %v1546, 1.442695
    %v1668 = vpow.pop %v1667
    %v1669 = vmul.f32 %v1547, 1.442695
    %v1670 = vpow.pop %v1669
    %v1671 = vmul.f32 %v1548, 1.442695
    %v1672 = vpow.pop %v1671
    %v1673 = vmul.f32 %v1549, 1.442695
    %v1674 = vpow.pop %v1673
    %v1675 = vmul.f32 %v1550, 1.442695
    %v1676 = vpow.pop %v1675
    %v1677 = vmul.f32 %v1551, 1.442695
    %v1678 = vpow.pop %v1677
    %v1679 = vmul.f32 %v1552, 1.442695
    %v1680 = vpow.pop %v1679
    %v1681 = vadd.f32 %v1554, 1.0
    %v1682 = vadd.f32 %v1556, 1.0
    %v1683 = vadd.f32 %v1558, 1.0
    %v1684 = vadd.f32 %v1560, 1.0
    %v1685 = vadd.f32 %v1562, 1.0
    %v1686 = vadd.f32 %v1564, 1.0
    %v1687 = vadd.f32 %v1566, 1.0
    %v1688 = vadd.f32 %v1568, 1.0
    %v1689 = vadd.f32 %v1570, 1.0
    %v1690 = vadd.f32 %v1572, 1.0
    %v1691 = vadd.f32 %v1574, 1.0
    %v1692 = vadd.f32 %v1576, 1.0
    %v1693 = vadd.f32 %v1578, 1.0
    %v1694 = vadd.f32 %v1580, 1.0
    %v1695 = vadd.f32 %v1582, 1.0
    %v1696 = vadd.f32 %v1584, 1.0
    %v1697 = vadd.f32 %v1586, 1.0
    %v1698 = vadd.f32 %v1588, 1.0
    %v1699 = vadd.f32 %v1590, 1.0
    %v1700 = vadd.f32 %v1592, 1.0
    %v1701 = vadd.f32 %v1594, 1.0
    %v1702 = vadd.f32 %v1596, 1.0
    %v1703 = vadd.f32 %v1598, 1.0
    %v1704 = vadd.f32 %v1600, 1.0
    %v1705 = vadd.f32 %v1602, 1.0
    %v1706 = vadd.f32 %v1604, 1.0
    %v1707 = vadd.f32 %v1606, 1.0
    %v1708 = vadd.f32 %v1608, 1.0
    %v1709 = vadd.f32 %v1610, 1.0
    %v1710 = vadd.f32 %v1612, 1.0
    %v1711 = vadd.f32 %v1614, 1.0
    %v1712 = vadd.f32 %v1616, 1.0
    %v1713 = vadd.f32 %v1618, 1.0
    %v1714 = vadd.f32 %v1620, 1.0
    %v1715 = vadd.f32 %v1622, 1.0
    %v1716 = vadd.f32 %v1624, 1.0
    %v1717 = vadd.f32 %v1626, 1.0
    %v1718 = vadd.f32 %v1628, 1.0
    %v1719 = vadd.f32 %v1630, 1.0
    %v1720 = vadd.f32 %v1632, 1.0
    %v1721 = vadd.f32 %v1634, 1.0
    %v1722 = vadd.f32 %v1636, 1.0
    %v1723 = vadd.f32 %v1638, 1.0
    %v1724 = vadd.f32 %v1640, 1.0
    %v1725 = vadd.f32 %v1642, 1.0
    %v1726 = vadd.f32 %v1644, 1.0
    %v1727 = vadd.f32 %v1646, 1.0
    %v1728 = vadd.f32 %v1648, 1.0
    %v1729 = vadd.f32 %v1650, 1.0
    %v1730 = vadd.f32 %v1652, 1.0
    %v1731 = vadd.f32 %v1654, 1.0
    %v1732 = vadd.f32 %v1656, 1.0
    %v1733 = vadd.f32 %v1658, 1.0
    %v1734 = vadd.f32 %v1660, 1.0
    %v1735 = vadd.f32 %v1662, 1.0
    %v1736 = vadd.f32 %v1664, 1.0
    %v1737 = vadd.f32 %v1666, 1.0
    %v1738 = vadd.f32 %v1668, 1.0
    %v1739 = vadd.f32 %v1670, 1.0
    %v1740 = vadd.f32 %v1672, 1.0
    %v1741 = vadd.f32 %v1674, 1.0
    %v1742 = vadd.f32 %v1676, 1.0
    %v1743 = vadd.f32 %v1678, 1.0
    %v1744 = vadd.f32 %v1680, 1.0
    %v1745 = vrcp.pop %v1681
    %v1746 = vmul.f32 1.0, %v1745
    %v1747 = vrcp.pop %v1682
    %v1748 = vmul.f32 1.0, %v1747
    %v1749 = vrcp.pop %v1683
    %v1750 = vmul.f32 1.0, %v1749
    %v1751 = vrcp.pop %v1684
    %v1752 = vmul.f32 1.0, %v1751
    %v1753 = vrcp.pop %v1685
    %v1754 = vmul.f32 1.0, %v1753
    %v1755 = vrcp.pop %v1686
    %v1756 = vmul.f32 1.0, %v1755
    %v1757 = vrcp.pop %v1687
    %v1758 = vmul.f32 1.0, %v1757
    %v1759 = vrcp.pop %v1688
    %v1760 = vmul.f32 1.0, %v1759
    %v1761 = vrcp.pop %v1689
    %v1762 = vmul.f32 1.0, %v1761
    %v1763 = vrcp.pop %v1690
    %v1764 = vmul.f32 1.0, %v1763
    %v1765 = vrcp.pop %v1691
    %v1766 = vmul.f32 1.0, %v1765
    %v1767 = vrcp.pop %v1692
    %v1768 = vmul.f32 1.0, %v1767
    %v1769 = vrcp.pop %v1693
    %v1770 = vmul.f32 1.0, %v1769
    %v1771 = vrcp.pop %v1694
    %v1772 = vmul.f32 1.0, %v1771
    %v1773 = vrcp.pop %v1695
    %v1774 = vmul.f32 1.0, %v1773
    %v1775 = vrcp.pop %v1696
    %v1776 = vmul.f32 1.0, %v1775
    %v1777 = vrcp.pop %v1697
    %v1778 = vmul.f32 1.0, %v1777
    %v1779 = vrcp.pop %v1698
    %v1780 = vmul.f32 1.0, %v1779
    %v1781 = vrcp.pop %v1699
    %v1782 = vmul.f32 1.0, %v1781
    %v1783 = vrcp.pop %v1700
    %v1784 = vmul.f32 1.0, %v1783
    %v1785 = vrcp.pop %v1701
    %v1786 = vmul.f32 1.0, %v1785
    %v1787 = vrcp.pop %v1702
    %v1788 = vmul.f32 1.0, %v1787
    %v1789 = vrcp.pop %v1703
    %v1790 = vmul.f32 1.0, %v1789
    %v1791 = vrcp.pop %v1704
    %v1792 = vmul.f32 1.0, %v1791
    %v1793 = vrcp.pop %v1705
    %v1794 = vmul.f32 1.0, %v1793
    %v1795 = vrcp.pop %v1706
    %v1796 = vmul.f32 1.0, %v1795
    %v1797 = vrcp.pop %v1707
    %v1798 = vmul.f32 1.0, %v1797
    %v1799 = vrcp.pop %v1708
    %v1800 = vmul.f32 1.0, %v1799
    %v1801 = vrcp.pop %v1709
    %v1802 = vmul.f32 1.0, %v1801
    %v1803 = vrcp.pop %v1710
    %v1804 = vmul.f32 1.0, %v1803
    %v1805 = vrcp.pop %v1711
    %v1806 = vmul.f32 1.0, %v1805
    %v1807 = vrcp.pop %v1712
    %v1808 = vmul.f32 1.0, %v1807
    %v1809 = vrcp.pop %v1713
    %v1810 = vmul.f32 1.0, %v1809
    %v1811 = vrcp.pop %v1714
    %v1812 = vmul.f32 1.0, %v1811
    %v1813 = vrcp.pop %v1715
    %v1814 = vmul.f32 1.0, %v1813
    %v1815 = vrcp.pop %v1716
    %v1816 = vmul.f32 1.0, %v1815
    %v1817 = vrcp.pop %v1717
    %v1818 = vmul.f32 1.0, %v1817
    %v1819 = vrcp.pop %v1718
    %v1820 = vmul.f32 1.0, %v1819
    %v1821 = vrcp.pop %v1719
    %v1822 = vmul.f32 1.0, %v1821
    %v1823 = vrcp.pop %v1720
    %v1824 = vmul.f32 1.0, %v1823
    %v1825 = vrcp.pop %v1721
    %v1826 = vmul.f32 1.0, %v1825
    %v1827 = vrcp.pop %v1722
    %v1828 = vmul.f32 1.0, %v1827
    %v1829 = vrcp.pop %v1723
    %v1830 = vmul.f32 1.0, %v1829
    %v1831 = vrcp.pop %v1724
    %v1832 = vmul.f32 1.0, %v1831
    %v1833 = vrcp.pop %v1725
    %v1834 = vmul.f32 1.0, %v1833
    %v1835 = vrcp.pop %v1726
    %v1836 = vmul.f32 1.0, %v1835
    %v1837 = vrcp.pop %v1727
    %v1838 = vmul.f32 1.0, %v1837
    %v1839 = vrcp.pop %v1728
    %v1840 = vmul.f32 1.0, %v1839
    %v1841 = vrcp.pop %v1729
    %v1842 = vmul.f32 1.0, %v1841
    %v1843 = vrcp.pop %v1730
    %v1844 = vmul.f32 1.0, %v1843
    %v1845 = vrcp.pop %v1731
    %v1846 = vmul.f32 1.0, %v1845
    %v1847 = vrcp.pop %v1732
    %v1848 = vmul.f32 1.0, %v1847
    %v1849 = vrcp.pop %v1733
    %v1850 = vmul.f32 1.0, %v1849
    %v1851 = vrcp.pop %v1734
    %v1852 = vmul.f32 1.0, %v1851
    %v1853 = vrcp.pop %v1735
    %v1854 = vmul.f32 1.0, %v1853
    %v1855 = vrcp.pop %v1736
    %v1856 = vmul.f32 1.0, %v1855
    %v1857 = vrcp.pop %v1737
    %v1858 = vmul.f32 1.0, %v1857
    %v1859 = vrcp.pop %v1738
    %v1860 = vmul.f32 1.0, %v1859
    %v1861 = vrcp.pop %v1739
    %v1862 = vmul.f32 1.0, %v1861
    %v1863 = vrcp.pop %v1740
    %v1864 = vmul.f32 1.0, %v1863
    %v1865 = vrcp.pop %v1741
    %v1866 = vmul.f32 1.0, %v1865
    %v1867 = vrcp.pop %v1742
    %v1868 = vmul.f32 1.0, %v1867
    %v1869 = vrcp.pop %v1743
    %v1870 = vmul.f32 1.0, %v1869
    %v1871 = vrcp.pop %v1744
    %v1872 = vmul.f32 1.0, %v1871
    %v1873 = vmul.f32 %v1235, %v1746
    %v1874 = vmul.f32 %v1238, %v1748
    %v1875 = vmul.f32 %v1243, %v1750
    %v1876 = vmul.f32 %v1246, %v1752
    %v1877 = vmul.f32 %v1251, %v1754
    %v1878 = vmul.f32 %v1254, %v1756
    %v1879 = vmul.f32 %v1259, %v1758
    %v1880 = vmul.f32 %v1262, %v1760
    %v1881 = vmul.f32 %v1267, %v1762
    %v1882 = vmul.f32 %v1270, %v1764
    %v1883 = vmul.f32 %v1275, %v1766
    %v1884 = vmul.f32 %v1278, %v1768
    %v1885 = vmul.f32 %v1283, %v1770
    %v1886 = vmul.f32 %v1286, %v1772
    %v1887 = vmul.f32 %v1291, %v1774
    %v1888 = vmul.f32 %v1294, %v1776
    %v1889 = vmul.f32 %v1299, %v1778
    %v1890 = vmul.f32 %v1302, %v1780
    %v1891 = vmul.f32 %v1307, %v1782
    %v1892 = vmul.f32 %v1310, %v1784
    %v1893 = vmul.f32 %v1315, %v1786
    %v1894 = vmul.f32 %v1318, %v1788
    %v1895 = vmul.f32 %v1323, %v1790
    %v1896 = vmul.f32 %v1326, %v1792
    %v1897 = vmul.f32 %v1331, %v1794
    %v1898 = vmul.f32 %v1334, %v1796
    %v1899 = vmul.f32 %v1339, %v1798
    %v1900 = vmul.f32 %v1342, %v1800
    %v1901 = vmul.f32 %v1347, %v1802
    %v1902 = vmul.f32 %v1350, %v1804
    %v1903 = vmul.f32 %v1355, %v1806
    %v1904 = vmul.f32 %v1358, %v1808
    %v1905 = vmul.f32 %v1363, %v1810
    %v1906 = vmul.f32 %v1366, %v1812
    %v1907 = vmul.f32 %v1371, %v1814
    %v1908 = vmul.f32 %v1374, %v1816
    %v1909 = vmul.f32 %v1379, %v1818
    %v1910 = vmul.f32 %v1382, %v1820
    %v1911 = vmul.f32 %v1387, %v1822
    %v1912 = vmul.f32 %v1390, %v1824
    %v1913 = vmul.f32 %v1395, %v1826
    %v1914 = vmul.f32 %v1398, %v1828
    %v1915 = vmul.f32 %v1403, %v1830
    %v1916 = vmul.f32 %v1406, %v1832
    %v1917 = vmul.f32 %v1411, %v1834
    %v1918 = vmul.f32 %v1414, %v1836
    %v1919 = vmul.f32 %v1419, %v1838
    %v1920 = vmul.f32 %v1422, %v1840
    %v1921 = vmul.f32 %v1427, %v1842
    %v1922 = vmul.f32 %v1430, %v1844
    %v1923 = vmul.f32 %v1435, %v1846
    %v1924 = vmul.f32 %v1438, %v1848
    %v1925 = vmul.f32 %v1443, %v1850
    %v1926 = vmul.f32 %v1446, %v1852
    %v1927 = vmul.f32 %v1451, %v1854
    %v1928 = vmul.f32 %v1454, %v1856
    %v1929 = vmul.f32 %v1459, %v1858
    %v1930 = vmul.f32 %v1462, %v1860
    %v1931 = vmul.f32 %v1467, %v1862
    %v1932 = vmul.f32 %v1470, %v1864
    %v1933 = vmul.f32 %v1475, %v1866
    %v1934 = vmul.f32 %v1478, %v1868
    %v1935 = vmul.f32 %v1483, %v1870
    %v1936 = vmul.f32 %v1486, %v1872
    %1937 = vst.msk [vmem:[#allocation8] sm:$0xff] %vm814, %v1873
    %1938 = vst.msk [vmem:[#allocation8 + $0x8] sm:$0xff] %vm814, %v1874
    %1939 = vst.msk [vmem:[#allocation8 + $0x10] sm:$0xff] %vm814, %v1875
    %1940 = vst.msk [vmem:[#allocation8 + $0x18] sm:$0xff] %vm814, %v1876
    %1941 = vst.msk [vmem:[#allocation8 + $0x20] sm:$0xff] %vm814, %v1877
    %1942 = vst.msk [vmem:[#allocation8 + $0x28] sm:$0xff] %vm814, %v1878
    %1943 = vst.msk [vmem:[#allocation8 + $0x30] sm:$0xff] %vm814, %v1879
    %1944 = vst.msk [vmem:[#allocation8 + $0x38] sm:$0xff] %vm814, %v1880
    %1945 = vst.msk [vmem:[#allocation8 + $0x40] sm:$0xff] %vm814, %v1881
    %1946 = vst.msk [vmem:[#allocation8 + $0x48] sm:$0xff] %vm814, %v1882
    %1947 = vst.msk [vmem:[#allocation8 + $0x50] sm:$0xff] %vm814, %v1883
    %1948 = vst.msk [vmem:[#allocation8 + $0x58] sm:$0xff] %vm814, %v1884
    %1949 = vst.msk [vmem:[#allocation8 + $0x60] sm:$0xff] %vm814, %v1885
    %1950 = vst.msk [vmem:[#allocation8 + $0x68] sm:$0xff] %vm814, %v1886
    %1951 = vst.msk [vmem:[#allocation8 + $0x70] sm:$0xff] %vm814, %v1887
    %1952 = vst.msk [vmem:[#allocation8 + $0x78] sm:$0xff] %vm814, %v1888
    %1953 = vst.msk [vmem:[#allocation8 + $0x80] sm:$0xff] %vm814, %v1889
    %1954 = vst.msk [vmem:[#allocation8 + $0x88] sm:$0xff] %vm814, %v1890
    %1955 = vst.msk [vmem:[#allocation8 + $0x90] sm:$0xff] %vm814, %v1891
    %1956 = vst.msk [vmem:[#allocation8 + $0x98] sm:$0xff] %vm814, %v1892
    %1957 = vst.msk [vmem:[#allocation8 + $0xa0] sm:$0xff] %vm814, %v1893
    %1958 = vst.msk [vmem:[#allocation8 + $0xa8] sm:$0xff] %vm814, %v1894
    %1959 = vst.msk [vmem:[#allocation8 + $0xb0] sm:$0xff] %vm814, %v1895
    %1960 = vst.msk [vmem:[#allocation8 + $0xb8] sm:$0xff] %vm814, %v1896
    %1961 = vst.msk [vmem:[#allocation8 + $0xc0] sm:$0xff] %vm814, %v1897
    %1962 = vst.msk [vmem:[#allocation8 + $0xc8] sm:$0xff] %vm814, %v1898
    %1963 = vst.msk [vmem:[#allocation8 + $0xd0] sm:$0xff] %vm814, %v1899
    %1964 = vst.msk [vmem:[#allocation8 + $0xd8] sm:$0xff] %vm814, %v1900
    %1965 = vst.msk [vmem:[#allocation8 + $0xe0] sm:$0xff] %vm814, %v1901
    %1966 = vst.msk [vmem:[#allocation8 + $0xe8] sm:$0xff] %vm814, %v1902
    %1967 = vst.msk [vmem:[#allocation8 + $0xf0] sm:$0xff] %vm814, %v1903
    %1968 = vst.msk [vmem:[#allocation8 + $0xf8] sm:$0xff] %vm814, %v1904
    %1969 = vst.msk [vmem:[#allocation8 + $0x100] sm:$0xff] %vm814, %v1905
    %1970 = vst.msk [vmem:[#allocation8 + $0x108] sm:$0xff] %vm814, %v1906
    %1971 = vst.msk [vmem:[#allocation8 + $0x110] sm:$0xff] %vm814, %v1907
    %1972 = vst.msk [vmem:[#allocation8 + $0x118] sm:$0xff] %vm814, %v1908
    %1973 = vst.msk [vmem:[#allocation8 + $0x120] sm:$0xff] %vm814, %v1909
    %1974 = vst.msk [vmem:[#allocation8 + $0x128] sm:$0xff] %vm814, %v1910
    %1975 = vst.msk [vmem:[#allocation8 + $0x130] sm:$0xff] %vm814, %v1911
    %1976 = vst.msk [vmem:[#allocation8 + $0x138] sm:$0xff] %vm814, %v1912
    %1977 = vst.msk [vmem:[#allocation8 + $0x140] sm:$0xff] %vm814, %v1913
    %1978 = vst.msk [vmem:[#allocation8 + $0x148] sm:$0xff] %vm814, %v1914
    %1979 = vst.msk [vmem:[#allocation8 + $0x150] sm:$0xff] %vm814, %v1915
    %1980 = vst.msk [vmem:[#allocation8 + $0x158] sm:$0xff] %vm814, %v1916
    %1981 = vst.msk [vmem:[#allocation8 + $0x160] sm:$0xff] %vm814, %v1917
    %1982 = vst.msk [vmem:[#allocation8 + $0x168] sm:$0xff] %vm814, %v1918
    %1983 = vst.msk [vmem:[#allocation8 + $0x170] sm:$0xff] %vm814, %v1919
    %1984 = vst.msk [vmem:[#allocation8 + $0x178] sm:$0xff] %vm814, %v1920
    %1985 = vst.msk [vmem:[#allocation8 + $0x180] sm:$0xff] %vm814, %v1921
    %1986 = vst.msk [vmem:[#allocation8 + $0x188] sm:$0xff] %vm814, %v1922
    %1987 = vst.msk [vmem:[#allocation8 + $0x190] sm:$0xff] %vm814, %v1923
    %1988 = vst.msk [vmem:[#allocation8 + $0x198] sm:$0xff] %vm814, %v1924
    %1989 = vst.msk [vmem:[#allocation8 + $0x1a0] sm:$0xff] %vm814, %v1925
    %1990 = vst.msk [vmem:[#allocation8 + $0x1a8] sm:$0xff] %vm814, %v1926
    %1991 = vst.msk [vmem:[#allocation8 + $0x1b0] sm:$0xff] %vm814, %v1927
    %1992 = vst.msk [vmem:[#allocation8 + $0x1b8] sm:$0xff] %vm814, %v1928
    %1993 = vst.msk [vmem:[#allocation8 + $0x1c0] sm:$0xff] %vm814, %v1929
    %1994 = vst.msk [vmem:[#allocation8 + $0x1c8] sm:$0xff] %vm814, %v1930
    %1995 = vst.msk [vmem:[#allocation8 + $0x1d0] sm:$0xff] %vm814, %v1931
    %1996 = vst.msk [vmem:[#allocation8 + $0x1d8] sm:$0xff] %vm814, %v1932
    %1997 = vst.msk [vmem:[#allocation8 + $0x1e0] sm:$0xff] %vm814, %v1933
    %1998 = vst.msk [vmem:[#allocation8 + $0x1e8] sm:$0xff] %vm814, %v1934
    %1999 = vst.msk [vmem:[#allocation8 + $0x1f0] sm:$0xff] %vm814, %v1935
    %2000 = vst.msk [vmem:[#allocation8 + $0x1f8] sm:$0xff] %vm814, %v1936
    // Predicated region
    $region26: #{csp_layer_fwd.8} parent=1 // pred_check
      _
    $region27: #{csp_layer_fwd.8} parent=1 // pred_check_branch
      %2002 = sbr.rel (0) target = $region29
    $region28: #{csp_layer_fwd.8} parent=1 // pred_region
      %s2004 = ssub.s32 8192, 8192
      %2005 = vsyncadd [#allocation4], %s2004
      %s2006 = sshll.u32 [#allocation8], 4
      %s2007 = int_to_ptr.vmem [resolvable:$true] %s2006
      %2012 = dma.vmem_to_hbm [thread:$0]  %s2007, 8192, %s3, [#allocation4], 128, 128, 8
    $region29: #{csp_layer_fwd.8} parent=1 // pred_fallthru
      _
    // Predicated region
    $region30: #{csp_layer_fwd.8} parent=1 // pred_check
      _
    $region31: #{csp_layer_fwd.8} parent=1 // pred_check_branch
      %2014 = sbr.rel (0) target = $region33
    $region32: #{csp_layer_fwd.8} parent=1 // pred_region
      %2015 = dma.done [#allocation4], 8192
    $region33: #{csp_layer_fwd.8} parent=1 // pred_fallthru
      _
    %2016 = vsyncpa [#allocation3], 1
    %2017 = vsyncpa [#allocation6], 1
    %2018 = vsyncpa [#allocation4], 1

// kernel: csp_layer_fwd.11
$region0: #{csp_layer_fwd.11}
  #allocation0 [shape = 'u32[]', space=smem, size = 0x4, offset = 0x4, fixed_abs, tag = 'smem constant byte address 0x4 - core index']
  #allocation1 [shape = 'u32[144,128]{1,0:T(1,128)}', space=vmem, size = 0x12000, scoped, tag = 'internal scratch']
  %s0 = inlined_call_operand.hbm [shape: bf16[512,32], index: 0, kind: input, shape index: {}]
  %s1 = inlined_call_operand.hbm [shape: bf16[512,32], index: 1, kind: input, shape index: {}]
  %s2 = inlined_call_operand.hbm [shape: bf16[32,64], index: 2, kind: input, shape index: {}]
  %s3 = inlined_call_operand.hbm [shape: bf16[32,64], index: 3, kind: input, shape index: {}]
  %s4 = inlined_call_operand.hbm [shape: f32[1,64], index: 4, kind: input, shape index: {}]
  %s5 = inlined_call_operand.hbm [shape: f32[512,64], index: 5, kind: output, shape index: {}]
  %s6 = sld [smem:[#allocation0]]
  $region50: #{csp_layer_fwd.11} parent=0
    _
  %s8 = ssub.s32 1, %s6
  %s9 = scalar_select 0, %s8, %s6
  $region1: #{csp_layer_fwd.11} parent=0
    #allocation2 [shape = 'u8[131072]{0}', space=vmem, size = 0x20000, scoped, tag = 'input window, operand 0, single buffered']
    #allocation3 [shape = 's32[1]{0}', space=sflag, size = 0x4, scoped, tag = 'scoped memory for csp_layer_fwd.11']
    #allocation4 [shape = 's32[1]{0}', space=sflag, size = 0x4, scoped, tag = 'scoped memory for csp_layer_fwd.11']
    #allocation5 [shape = 'u8[131072]{0}', space=vmem, size = 0x20000, scoped, tag = 'input window, operand 1, single buffered']
    #allocation6 [shape = 's32[1]{0}', space=sflag, size = 0x4, scoped, tag = 'scoped memory for csp_layer_fwd.11']
    #allocation7 [shape = 'u8[8192]{0}', space=vmem, size = 0x2000, scoped, tag = 'input window, operand 2, single buffered']
    #allocation8 [shape = 'u8[8192]{0}', space=vmem, size = 0x2000, scoped, tag = 'input window, operand 3, single buffered']
    #allocation9 [shape = 's32[1]{0}', space=sflag, size = 0x4, scoped, tag = 'scoped memory for csp_layer_fwd.11']
    #allocation10 [shape = 'u8[512]{0}', space=vmem, size = 0x400, scoped, tag = 'input window, operand 4, single buffered']
    #allocation11 [shape = 'u8[262144]{0}', space=vmem, size = 0x40000, scoped, tag = 'output window, operand 0, single buffered']
    %10 = vsyncpa [#allocation3], 0
    %11 = vsyncpa [#allocation6], 0
    %12 = vsyncpa [#allocation9], 0
    %13 = vsyncpa [#allocation4], 0
    // Predicated region
    $region2: #{csp_layer_fwd.11} parent=1 // pred_check
      _
    $region3: #{csp_layer_fwd.11} parent=1 // pred_check_branch
      %15 = sbr.rel (0) target = $region5
    $region4: #{csp_layer_fwd.11} parent=1 // pred_region
      %s17 = ssub.s32 4096, 4096
      %18 = vsyncadd [#allocation3], %s17
      %s19 = sshll.u32 [#allocation2], 4
      %s20 = int_to_ptr.vmem [resolvable:$true] %s19
      %25 = dma.hbm_to_vmem [thread:$0]  %s0, 4096, %s20, [#allocation3], 64, 64, 4
    $region5: #{csp_layer_fwd.11} parent=1 // pred_fallthru
      _
    // Predicated region
    $region6: #{csp_layer_fwd.11} parent=1 // pred_check
      _
    $region7: #{csp_layer_fwd.11} parent=1 // pred_check_branch
      %27 = sbr.rel (0) target = $region9
    $region8: #{csp_layer_fwd.11} parent=1 // pred_region
      %s29 = ssub.s32 4096, 4096
      %30 = vsyncadd [#allocation6], %s29
      %s31 = sshll.u32 [#allocation5], 4
      %s32 = int_to_ptr.vmem [resolvable:$true] %s31
      %37 = dma.hbm_to_vmem [thread:$0]  %s1, 4096, %s32, [#allocation6], 64, 64, 4
    $region9: #{csp_layer_fwd.11} parent=1 // pred_fallthru
      _
    // Predicated region
    $region10: #{csp_layer_fwd.11} parent=1 // pred_check
      _
    $region11: #{csp_layer_fwd.11} parent=1 // pred_check_branch
      %39 = sbr.rel (0) target = $region13
    $region12: #{csp_layer_fwd.11} parent=1 // pred_region
      %s41 = ssub.s32 256, 256
      %42 = vsyncadd [#allocation6], %s41
      %s43 = sshll.u32 [#allocation7], 4
      %s44 = int_to_ptr.vmem [resolvable:$true] %s43
      %49 = dma.hbm_to_vmem [thread:$0]  %s2, 256, %s44, [#allocation6], 64, 64, 4
    $region13: #{csp_layer_fwd.11} parent=1 // pred_fallthru
      _
    // Predicated region
    $region14: #{csp_layer_fwd.11} parent=1 // pred_check
      _
    $region15: #{csp_layer_fwd.11} parent=1 // pred_check_branch
      %51 = sbr.rel (0) target = $region17
    $region16: #{csp_layer_fwd.11} parent=1 // pred_region
      %s53 = ssub.s32 256, 256
      %54 = vsyncadd [#allocation9], %s53
      %s55 = sshll.u32 [#allocation8], 4
      %s56 = int_to_ptr.vmem [resolvable:$true] %s55
      %61 = dma.hbm_to_vmem [thread:$0]  %s3, 256, %s56, [#allocation9], 64, 64, 4
    $region17: #{csp_layer_fwd.11} parent=1 // pred_fallthru
      _
    // Predicated region
    $region18: #{csp_layer_fwd.11} parent=1 // pred_check
      _
    $region19: #{csp_layer_fwd.11} parent=1 // pred_check_branch
      %63 = sbr.rel (0) target = $region21
    $region20: #{csp_layer_fwd.11} parent=1 // pred_region
      %s65 = ssub.s32 16, 16
      %66 = vsyncadd [#allocation9], %s65
      %s68 = sshll.u32 [#allocation10], 4
      %s69 = int_to_ptr.vmem [resolvable:$true] %s68
      %71 = dma.hbm_to_vmem [thread:$0]  %s4, 16, %s69, [#allocation9]
    $region21: #{csp_layer_fwd.11} parent=1 // pred_fallthru
      _
    // Predicated region
    $region22: #{csp_layer_fwd.11} parent=1 // pred_check
      _
    $region23: #{csp_layer_fwd.11} parent=1 // pred_check_branch
      %73 = sbr.rel (0) target = $region25
    $region24: #{csp_layer_fwd.11} parent=1 // pred_region
      %74 = dma.done [#allocation3], 4096
    $region25: #{csp_layer_fwd.11} parent=1 // pred_fallthru
      _
    // Predicated region
    $region26: #{csp_layer_fwd.11} parent=1 // pred_check
      _
    $region27: #{csp_layer_fwd.11} parent=1 // pred_check_branch
      %76 = sbr.rel (0) target = $region29
    $region28: #{csp_layer_fwd.11} parent=1 // pred_region
      %77 = dma.done [#allocation6], 4096
    $region29: #{csp_layer_fwd.11} parent=1 // pred_fallthru
      _
    // Predicated region
    $region30: #{csp_layer_fwd.11} parent=1 // pred_check
      _
    $region31: #{csp_layer_fwd.11} parent=1 // pred_check_branch
      %79 = sbr.rel (0) target = $region33
    $region32: #{csp_layer_fwd.11} parent=1 // pred_region
      %80 = dma.done [#allocation6], 256
    $region33: #{csp_layer_fwd.11} parent=1 // pred_fallthru
      _
    // Predicated region
    $region34: #{csp_layer_fwd.11} parent=1 // pred_check
      _
    $region35: #{csp_layer_fwd.11} parent=1 // pred_check_branch
      %82 = sbr.rel (0) target = $region37
    $region36: #{csp_layer_fwd.11} parent=1 // pred_region
      %83 = dma.done [#allocation9], 256
    $region37: #{csp_layer_fwd.11} parent=1 // pred_fallthru
      _
    // Predicated region
    $region38: #{csp_layer_fwd.11} parent=1 // pred_check
      _
    $region39: #{csp_layer_fwd.11} parent=1 // pred_check_branch
      %85 = sbr.rel (0) target = $region41
    $region40: #{csp_layer_fwd.11} parent=1 // pred_region
      %86 = dma.done [#allocation9], 16
    $region41: #{csp_layer_fwd.11} parent=1 // pred_fallthru
      _
    %v88 = vld [vmem:[#allocation2] sm:$0xf]
    %v89 = vld [vmem:[#allocation2 + $0x4] sm:$0xf]
    %v90 = vld [vmem:[#allocation2 + $0x8] sm:$0xf]
    %v91 = vld [vmem:[#allocation2 + $0xc] sm:$0xf]
    %v92 = vld [vmem:[#allocation2 + $0x10] sm:$0xf]
    %v93 = vld [vmem:[#allocation2 + $0x14] sm:$0xf]
    %v94 = vld [vmem:[#allocation2 + $0x18] sm:$0xf]
    %v95 = vld [vmem:[#allocation2 + $0x1c] sm:$0xf]
    %v96 = vld [vmem:[#allocation2 + $0x20] sm:$0xf]
    %v97 = vld [vmem:[#allocation2 + $0x24] sm:$0xf]
    %v98 = vld [vmem:[#allocation2 + $0x28] sm:$0xf]
    %v99 = vld [vmem:[#allocation2 + $0x2c] sm:$0xf]
    %v100 = vld [vmem:[#allocation2 + $0x30] sm:$0xf]
    %v101 = vld [vmem:[#allocation2 + $0x34] sm:$0xf]
    %v102 = vld [vmem:[#allocation2 + $0x38] sm:$0xf]
    %v103 = vld [vmem:[#allocation2 + $0x3c] sm:$0xf]
    %v104 = vld [vmem:[#allocation2 + $0x40] sm:$0xf]
    %v105 = vld [vmem:[#allocation2 + $0x44] sm:$0xf]
    %v106 = vld [vmem:[#allocation2 + $0x48] sm:$0xf]
    %v107 = vld [vmem:[#allocation2 + $0x4c] sm:$0xf]
    %v108 = vld [vmem:[#allocation2 + $0x50] sm:$0xf]
    %v109 = vld [vmem:[#allocation2 + $0x54] sm:$0xf]
    %v110 = vld [vmem:[#allocation2 + $0x58] sm:$0xf]
    %v111 = vld [vmem:[#allocation2 + $0x5c] sm:$0xf]
    %v112 = vld [vmem:[#allocation2 + $0x60] sm:$0xf]
    %v113 = vld [vmem:[#allocation2 + $0x64] sm:$0xf]
    %v114 = vld [vmem:[#allocation2 + $0x68] sm:$0xf]
    %v115 = vld [vmem:[#allocation2 + $0x6c] sm:$0xf]
    %v116 = vld [vmem:[#allocation2 + $0x70] sm:$0xf]
    %v117 = vld [vmem:[#allocation2 + $0x74] sm:$0xf]
    %v118 = vld [vmem:[#allocation2 + $0x78] sm:$0xf]
    %v119 = vld [vmem:[#allocation2 + $0x7c] sm:$0xf]
    %v120 = vld [vmem:[#allocation2 + $0x80] sm:$0xf]
    %v121 = vld [vmem:[#allocation2 + $0x84] sm:$0xf]
    %v122 = vld [vmem:[#allocation2 + $0x88] sm:$0xf]
    %v123 = vld [vmem:[#allocation2 + $0x8c] sm:$0xf]
    %v124 = vld [vmem:[#allocation2 + $0x90] sm:$0xf]
    %v125 = vld [vmem:[#allocation2 + $0x94] sm:$0xf]
    %v126 = vld [vmem:[#allocation2 + $0x98] sm:$0xf]
    %v127 = vld [vmem:[#allocation2 + $0x9c] sm:$0xf]
    %v128 = vld [vmem:[#allocation2 + $0xa0] sm:$0xf]
    %v129 = vld [vmem:[#allocation2 + $0xa4] sm:$0xf]
    %v130 = vld [vmem:[#allocation2 + $0xa8] sm:$0xf]
    %v131 = vld [vmem:[#allocation2 + $0xac] sm:$0xf]
    %v132 = vld [vmem:[#allocation2 + $0xb0] sm:$0xf]
    %v133 = vld [vmem:[#allocation2 + $0xb4] sm:$0xf]
    %v134 = vld [vmem:[#allocation2 + $0xb8] sm:$0xf]
    %v135 = vld [vmem:[#allocation2 + $0xbc] sm:$0xf]
    %v136 = vld [vmem:[#allocation2 + $0xc0] sm:$0xf]
    %v137 = vld [vmem:[#allocation2 + $0xc4] sm:$0xf]
    %v138 = vld [vmem:[#allocation2 + $0xc8] sm:$0xf]
    %v139 = vld [vmem:[#allocation2 + $0xcc] sm:$0xf]
    %v140 = vld [vmem:[#allocation2 + $0xd0] sm:$0xf]
    %v141 = vld [vmem:[#allocation2 + $0xd4] sm:$0xf]
    %v142 = vld [vmem:[#allocation2 + $0xd8] sm:$0xf]
    %v143 = vld [vmem:[#allocation2 + $0xdc] sm:$0xf]
    %v144 = vld [vmem:[#allocation2 + $0xe0] sm:$0xf]
    %v145 = vld [vmem:[#allocation2 + $0xe4] sm:$0xf]
    %v146 = vld [vmem:[#allocation2 + $0xe8] sm:$0xf]
    %v147 = vld [vmem:[#allocation2 + $0xec] sm:$0xf]
    %v148 = vld [vmem:[#allocation2 + $0xf0] sm:$0xf]
    %v149 = vld [vmem:[#allocation2 + $0xf4] sm:$0xf]
    %v150 = vld [vmem:[#allocation2 + $0xf8] sm:$0xf]
    %v151 = vld [vmem:[#allocation2 + $0xfc] sm:$0xf]
    %v152 = vld [vmem:[#allocation7] sm:$0xf]
    %v153 = vld [vmem:[#allocation7 + $0x4] sm:$0xf]
    %v154 = vld [vmem:[#allocation7 + $0x8] sm:$0xf]
    %v155 = vld [vmem:[#allocation7 + $0xc] sm:$0xf]
    %v156 = vld [vmem:[#allocation5] sm:$0xf]
    %v157 = vld [vmem:[#allocation5 + $0x4] sm:$0xf]
    %v158 = vld [vmem:[#allocation5 + $0x8] sm:$0xf]
    %v159 = vld [vmem:[#allocation5 + $0xc] sm:$0xf]
    %v160 = vld [vmem:[#allocation5 + $0x10] sm:$0xf]
    %v161 = vld [vmem:[#allocation5 + $0x14] sm:$0xf]
    %v162 = vld [vmem:[#allocation5 + $0x18] sm:$0xf]
    %v163 = vld [vmem:[#allocation5 + $0x1c] sm:$0xf]
    %v164 = vld [vmem:[#allocation5 + $0x20] sm:$0xf]
    %v165 = vld [vmem:[#allocation5 + $0x24] sm:$0xf]
    %v166 = vld [vmem:[#allocation5 + $0x28] sm:$0xf]
    %v167 = vld [vmem:[#allocation5 + $0x2c] sm:$0xf]
    %v168 = vld [vmem:[#allocation5 + $0x30] sm:$0xf]
    %v169 = vld [vmem:[#allocation5 + $0x34] sm:$0xf]
    %v170 = vld [vmem:[#allocation5 + $0x38] sm:$0xf]
    %v171 = vld [vmem:[#allocation5 + $0x3c] sm:$0xf]
    %v172 = vld [vmem:[#allocation5 + $0x40] sm:$0xf]
    %v173 = vld [vmem:[#allocation5 + $0x44] sm:$0xf]
    %v174 = vld [vmem:[#allocation5 + $0x48] sm:$0xf]
    %v175 = vld [vmem:[#allocation5 + $0x4c] sm:$0xf]
    %v176 = vld [vmem:[#allocation5 + $0x50] sm:$0xf]
    %v177 = vld [vmem:[#allocation5 + $0x54] sm:$0xf]
    %v178 = vld [vmem:[#allocation5 + $0x58] sm:$0xf]
    %v179 = vld [vmem:[#allocation5 + $0x5c] sm:$0xf]
    %v180 = vld [vmem:[#allocation5 + $0x60] sm:$0xf]
    %v181 = vld [vmem:[#allocation5 + $0x64] sm:$0xf]
    %v182 = vld [vmem:[#allocation5 + $0x68] sm:$0xf]
    %v183 = vld [vmem:[#allocation5 + $0x6c] sm:$0xf]
    %v184 = vld [vmem:[#allocation5 + $0x70] sm:$0xf]
    %v185 = vld [vmem:[#allocation5 + $0x74] sm:$0xf]
    %v186 = vld [vmem:[#allocation5 + $0x78] sm:$0xf]
    %v187 = vld [vmem:[#allocation5 + $0x7c] sm:$0xf]
    %v188 = vld [vmem:[#allocation5 + $0x80] sm:$0xf]
    %v189 = vld [vmem:[#allocation5 + $0x84] sm:$0xf]
    %v190 = vld [vmem:[#allocation5 + $0x88] sm:$0xf]
    %v191 = vld [vmem:[#allocation5 + $0x8c] sm:$0xf]
    %v192 = vld [vmem:[#allocation5 + $0x90] sm:$0xf]
    %v193 = vld [vmem:[#allocation5 + $0x94] sm:$0xf]
    %v194 = vld [vmem:[#allocation5 + $0x98] sm:$0xf]
    %v195 = vld [vmem:[#allocation5 + $0x9c] sm:$0xf]
    %v196 = vld [vmem:[#allocation5 + $0xa0] sm:$0xf]
    %v197 = vld [vmem:[#allocation5 + $0xa4] sm:$0xf]
    %v198 = vld [vmem:[#allocation5 + $0xa8] sm:$0xf]
    %v199 = vld [vmem:[#allocation5 + $0xac] sm:$0xf]
    %v200 = vld [vmem:[#allocation5 + $0xb0] sm:$0xf]
    %v201 = vld [vmem:[#allocation5 + $0xb4] sm:$0xf]
    %v202 = vld [vmem:[#allocation5 + $0xb8] sm:$0xf]
    %v203 = vld [vmem:[#allocation5 + $0xbc] sm:$0xf]
    %v204 = vld [vmem:[#allocation5 + $0xc0] sm:$0xf]
    %v205 = vld [vmem:[#allocation5 + $0xc4] sm:$0xf]
    %v206 = vld [vmem:[#allocation5 + $0xc8] sm:$0xf]
    %v207 = vld [vmem:[#allocation5 + $0xcc] sm:$0xf]
    %v208 = vld [vmem:[#allocation5 + $0xd0] sm:$0xf]
    %v209 = vld [vmem:[#allocation5 + $0xd4] sm:$0xf]
    %v210 = vld [vmem:[#allocation5 + $0xd8] sm:$0xf]
    %v211 = vld [vmem:[#allocation5 + $0xdc] sm:$0xf]
    %v212 = vld [vmem:[#allocation5 + $0xe0] sm:$0xf]
    %v213 = vld [vmem:[#allocation5 + $0xe4] sm:$0xf]
    %v214 = vld [vmem:[#allocation5 + $0xe8] sm:$0xf]
    %v215 = vld [vmem:[#allocation5 + $0xec] sm:$0xf]
    %v216 = vld [vmem:[#allocation5 + $0xf0] sm:$0xf]
    %v217 = vld [vmem:[#allocation5 + $0xf4] sm:$0xf]
    %v218 = vld [vmem:[#allocation5 + $0xf8] sm:$0xf]
    %v219 = vld [vmem:[#allocation5 + $0xfc] sm:$0xf]
    %v220 = vld [vmem:[#allocation8] sm:$0xf]
    %v221 = vld [vmem:[#allocation8 + $0x4] sm:$0xf]
    %v222 = vld [vmem:[#allocation8 + $0x8] sm:$0xf]
    %v223 = vld [vmem:[#allocation8 + $0xc] sm:$0xf]
    %v288 = vunpack.c.l.b16 %v156
    %v289 = vunpack.c.l.b16 %v157
    %v290 = vunpack.c.l.b16 %v158
    %v291 = vunpack.c.l.b16 %v159
    %v292 = vunpack.c.l.b16 %v160
    %v293 = vunpack.c.l.b16 %v161
    %v294 = vunpack.c.l.b16 %v162
    %v295 = vunpack.c.l.b16 %v163
    %v296 = vunpack.c.l.b16 %v164
    %v297 = vunpack.c.l.b16 %v165
    %v298 = vunpack.c.l.b16 %v166
    %v299 = vunpack.c.l.b16 %v167
    %v300 = vunpack.c.l.b16 %v168
    %v301 = vunpack.c.l.b16 %v169
    %v302 = vunpack.c.l.b16 %v170
    %v303 = vunpack.c.l.b16 %v171
    %v304 = vunpack.c.l.b16 %v172
    %v305 = vunpack.c.l.b16 %v173
    %v306 = vunpack.c.l.b16 %v174
    %v307 = vunpack.c.l.b16 %v175
    %v308 = vunpack.c.l.b16 %v176
    %v309 = vunpack.c.l.b16 %v177
    %v310 = vunpack.c.l.b16 %v178
    %v311 = vunpack.c.l.b16 %v179
    %v312 = vunpack.c.l.b16 %v180
    %v313 = vunpack.c.l.b16 %v181
    %v314 = vunpack.c.l.b16 %v182
    %v315 = vunpack.c.l.b16 %v183
    %v316 = vunpack.c.l.b16 %v184
    %v317 = vunpack.c.l.b16 %v185
    %v318 = vunpack.c.l.b16 %v186
    %v319 = vunpack.c.l.b16 %v187
    %v320 = vunpack.c.l.b16 %v188
    %v321 = vunpack.c.l.b16 %v189
    %v322 = vunpack.c.l.b16 %v190
    %v323 = vunpack.c.l.b16 %v191
    %v324 = vunpack.c.l.b16 %v192
    %v325 = vunpack.c.l.b16 %v193
    %v326 = vunpack.c.l.b16 %v194
    %v327 = vunpack.c.l.b16 %v195
    %v328 = vunpack.c.l.b16 %v196
    %v329 = vunpack.c.l.b16 %v197
    %v330 = vunpack.c.l.b16 %v198
    %v331 = vunpack.c.l.b16 %v199
    %v332 = vunpack.c.l.b16 %v200
    %v333 = vunpack.c.l.b16 %v201
    %v334 = vunpack.c.l.b16 %v202
    %v335 = vunpack.c.l.b16 %v203
    %v336 = vunpack.c.l.b16 %v204
    %v337 = vunpack.c.l.b16 %v205
    %v338 = vunpack.c.l.b16 %v206
    %v339 = vunpack.c.l.b16 %v207
    %v340 = vunpack.c.l.b16 %v208
    %v341 = vunpack.c.l.b16 %v209
    %v342 = vunpack.c.l.b16 %v210
    %v343 = vunpack.c.l.b16 %v211
    %v344 = vunpack.c.l.b16 %v212
    %v345 = vunpack.c.l.b16 %v213
    %v346 = vunpack.c.l.b16 %v214
    %v347 = vunpack.c.l.b16 %v215
    %v348 = vunpack.c.l.b16 %v216
    %v349 = vunpack.c.l.b16 %v217
    %v350 = vunpack.c.l.b16 %v218
    %v351 = vunpack.c.l.b16 %v219
    %v352 = vpack.c.b16 %v289, %v288
    %v353 = vpack.c.b16 %v291, %v290
    %v354 = vpack.c.b16 %v293, %v292
    %v355 = vpack.c.b16 %v295, %v294
    %v356 = vpack.c.b16 %v297, %v296
    %v357 = vpack.c.b16 %v299, %v298
    %v358 = vpack.c.b16 %v301, %v300
    %v359 = vpack.c.b16 %v303, %v302
    %v360 = vpack.c.b16 %v305, %v304
    %v361 = vpack.c.b16 %v307, %v306
    %v362 = vpack.c.b16 %v309, %v308
    %v363 = vpack.c.b16 %v311, %v310
    %v364 = vpack.c.b16 %v313, %v312
    %v365 = vpack.c.b16 %v315, %v314
    %v366 = vpack.c.b16 %v317, %v316
    %v367 = vpack.c.b16 %v319, %v318
    %v368 = vpack.c.b16 %v321, %v320
    %v369 = vpack.c.b16 %v323, %v322
    %v370 = vpack.c.b16 %v325, %v324
    %v371 = vpack.c.b16 %v327, %v326
    %v372 = vpack.c.b16 %v329, %v328
    %v373 = vpack.c.b16 %v331, %v330
    %v374 = vpack.c.b16 %v333, %v332
    %v375 = vpack.c.b16 %v335, %v334
    %v376 = vpack.c.b16 %v337, %v336
    %v377 = vpack.c.b16 %v339, %v338
    %v378 = vpack.c.b16 %v341, %v340
    %v379 = vpack.c.b16 %v343, %v342
    %v380 = vpack.c.b16 %v345, %v344
    %v381 = vpack.c.b16 %v347, %v346
    %v382 = vpack.c.b16 %v349, %v348
    %v383 = vpack.c.b16 %v351, %v350
    %v388 = vunpack.c.l.b16 %v220
    %v389 = vunpack.c.l.b16 %v221
    %v390 = vunpack.c.l.b16 %v222
    %v391 = vunpack.c.l.b16 %v223
    %v392 = vpack.c.b16 %v389, %v388
    %v393 = vpack.c.b16 %v391, %v390
    %vm396 = vcmask 261120
    %v398 = vsel %vm396, %v352, 0
    %v401 = vsel %vm396, %v353, 0
    %v404 = vsel %vm396, %v354, 0
    %v407 = vsel %vm396, %v355, 0
    %v410 = vsel %vm396, %v356, 0
    %v413 = vsel %vm396, %v357, 0
    %v416 = vsel %vm396, %v358, 0
    %v419 = vsel %vm396, %v359, 0
    %v422 = vsel %vm396, %v360, 0
    %v425 = vsel %vm396, %v361, 0
    %v428 = vsel %vm396, %v362, 0
    %v431 = vsel %vm396, %v363, 0
    %v434 = vsel %vm396, %v364, 0
    %v437 = vsel %vm396, %v365, 0
    %v440 = vsel %vm396, %v366, 0
    %v443 = vsel %vm396, %v367, 0
    %v446 = vsel %vm396, %v368, 0
    %v449 = vsel %vm396, %v369, 0
    %v452 = vsel %vm396, %v370, 0
    %v455 = vsel %vm396, %v371, 0
    %v458 = vsel %vm396, %v372, 0
    %v461 = vsel %vm396, %v373, 0
    %v464 = vsel %vm396, %v374, 0
    %v467 = vsel %vm396, %v375, 0
    %v470 = vsel %vm396, %v376, 0
    %v473 = vsel %vm396, %v377, 0
    %v476 = vsel %vm396, %v378, 0
    %v479 = vsel %vm396, %v379, 0
    %v482 = vsel %vm396, %v380, 0
    %v485 = vsel %vm396, %v381, 0
    %v488 = vsel %vm396, %v382, 0
    %v491 = vsel %vm396, %v383, 0
    %493 = vmatprep.subr.bf16.mxu0 0
    %494 = vmatpush1.bf16.msra.mxu0 %v392
    %495 = vmatprep.subr.bf16.mxu0 0
    %496 = vmatpush1.bf16.msra.mxu0 %v393
    %497 = vmatprep.subr.bf16.mxu0 0
    %498 = vmatpush1.bf16.msra.mxu0 0
    %499 = vmatprep.subr.bf16.mxu0 0
    %500 = vmatpush1.bf16.msra.mxu0 0
    %501 = vmatprep.subr.bf16.mxu0 0
    %502 = vmatpush1.bf16.msra.mxu0 0
    %503 = vmatprep.subr.bf16.mxu0 0
    %504 = vmatpush1.bf16.msra.mxu0 0
    %505 = vmatprep.subr.bf16.mxu0 0
    %506 = vmatpush1.bf16.msra.mxu0 0
    %507 = vmatprep.subr.bf16.mxu0 0
    %508 = vmatpush1.bf16.msra.mxu0 0
    %509 = vmatprep.subr.bf16.mxu0 0
    %510 = vmatpush1.bf16.msra.mxu0 0
    %511 = vmatprep.subr.bf16.mxu0 0
    %512 = vmatpush1.bf16.msra.mxu0 0
    %513 = vmatprep.subr.bf16.mxu0 0
    %514 = vmatpush1.bf16.msra.mxu0 0
    %515 = vmatprep.subr.bf16.mxu0 0
    %516 = vmatpush1.bf16.msra.mxu0 0
    %517 = vmatprep.subr.bf16.mxu0 0
    %518 = vmatpush1.bf16.msra.mxu0 0
    %519 = vmatprep.subr.bf16.mxu0 0
    %520 = vmatpush1.bf16.msra.mxu0 0
    %521 = vmatprep.subr.bf16.mxu0 0
    %522 = vmatpush1.bf16.msra.mxu0 0
    %523 = vmatprep.subr.bf16.mxu0 0
    %524 = vmatpush1.bf16.msra.mxu0 0
    %525 = vmatprep.mubr.bf16.mxu0 0
    %526 = vmatmul.mubr.bf16.gmra.mrb[0].mxu0 %v398
    %v527 = vpop.f32.mrb[0].mxu0
    %v528 = vadd.f32 0.0, %v527
    %v529 = vpop.f32.mrb[0].mxu0
    %v530 = vpop.f32.mrb[0].mxu0
    %v531 = vadd.f32 0.0, %v530
    %v532 = vpop.f32.mrb[0].mxu0
    %533 = vmatprep.mubr.bf16.mxu0 0
    %534 = vmatmul.mubr.bf16.gmra.mrb[0].mxu0 %v401
    %v535 = vpop.f32.mrb[0].mxu0
    %v536 = vadd.f32 0.0, %v535
    %v537 = vpop.f32.mrb[0].mxu0
    %v538 = vpop.f32.mrb[0].mxu0
    %v539 = vadd.f32 0.0, %v538
    %v540 = vpop.f32.mrb[0].mxu0
    %541 = vmatprep.mubr.bf16.mxu0 0
    %542 = vmatmul.mubr.bf16.gmra.mrb[0].mxu0 %v404
    %v543 = vpop.f32.mrb[0].mxu0
    %v544 = vadd.f32 0.0, %v543
    %v545 = vpop.f32.mrb[0].mxu0
    %v546 = vpop.f32.mrb[0].mxu0
    %v547 = vadd.f32 0.0, %v546
    %v548 = vpop.f32.mrb[0].mxu0
    %549 = vmatprep.mubr.bf16.mxu0 0
    %550 = vmatmul.mubr.bf16.gmra.mrb[0].mxu0 %v407
    %v551 = vpop.f32.mrb[0].mxu0
    %v552 = vadd.f32 0.0, %v551
    %v553 = vpop.f32.mrb[0].mxu0
    %v554 = vpop.f32.mrb[0].mxu0
    %v555 = vadd.f32 0.0, %v554
    %v556 = vpop.f32.mrb[0].mxu0
    %557 = vmatprep.mubr.bf16.mxu0 0
    %558 = vmatmul.mubr.bf16.gmra.mrb[0].mxu0 %v410
    %v559 = vpop.f32.mrb[0].mxu0
    %v560 = vadd.f32 0.0, %v559
    %v561 = vpop.f32.mrb[0].mxu0
    %v562 = vpop.f32.mrb[0].mxu0
    %v563 = vadd.f32 0.0, %v562
    %v564 = vpop.f32.mrb[0].mxu0
    %565 = vmatprep.mubr.bf16.mxu0 0
    %566 = vmatmul.mubr.bf16.gmra.mrb[0].mxu0 %v413
    %v567 = vpop.f32.mrb[0].mxu0
    %v568 = vadd.f32 0.0, %v567
    %v569 = vpop.f32.mrb[0].mxu0
    %v570 = vpop.f32.mrb[0].mxu0
    %v571 = vadd.f32 0.0, %v570
    %v572 = vpop.f32.mrb[0].mxu0
    %573 = vmatprep.mubr.bf16.mxu0 0
    %574 = vmatmul.mubr.bf16.gmra.mrb[0].mxu0 %v416
    %v575 = vpop.f32.mrb[0].mxu0
    %v576 = vadd.f32 0.0, %v575
    %v577 = vpop.f32.mrb[0].mxu0
    %v578 = vpop.f32.mrb[0].mxu0
    %v579 = vadd.f32 0.0, %v578
    %v580 = vpop.f32.mrb[0].mxu0
    %581 = vmatprep.mubr.bf16.mxu0 0
    %582 = vmatmul.mubr.bf16.gmra.mrb[0].mxu0 %v419
    %v583 = vpop.f32.mrb[0].mxu0
    %v584 = vadd.f32 0.0, %v583
    %v585 = vpop.f32.mrb[0].mxu0
    %v586 = vpop.f32.mrb[0].mxu0
    %v587 = vadd.f32 0.0, %v586
    %v588 = vpop.f32.mrb[0].mxu0
    %589 = vmatprep.mubr.bf16.mxu0 0
    %590 = vmatmul.mubr.bf16.gmra.mrb[0].mxu0 %v422
    %v591 = vpop.f32.mrb[0].mxu0
    %v592 = vadd.f32 0.0, %v591
    %v593 = vpop.f32.mrb[0].mxu0
    %v594 = vpop.f32.mrb[0].mxu0
    %v595 = vadd.f32 0.0, %v594
    %v596 = vpop.f32.mrb[0].mxu0
    %597 = vmatprep.mubr.bf16.mxu0 0
    %598 = vmatmul.mubr.bf16.gmra.mrb[0].mxu0 %v425
    %v599 = vpop.f32.mrb[0].mxu0
    %v600 = vadd.f32 0.0, %v599
    %v601 = vpop.f32.mrb[0].mxu0
    %v602 = vpop.f32.mrb[0].mxu0
    %v603 = vadd.f32 0.0, %v602
    %v604 = vpop.f32.mrb[0].mxu0
    %605 = vmatprep.mubr.bf16.mxu0 0
    %606 = vmatmul.mubr.bf16.gmra.mrb[0].mxu0 %v428
    %v607 = vpop.f32.mrb[0].mxu0
    %v608 = vadd.f32 0.0, %v607
    %v609 = vpop.f32.mrb[0].mxu0
    %v610 = vpop.f32.mrb[0].mxu0
    %v611 = vadd.f32 0.0, %v610
    %v612 = vpop.f32.mrb[0].mxu0
    %613 = vmatprep.mubr.bf16.mxu0 0
    %614 = vmatmul.mubr.bf16.gmra.mrb[0].mxu0 %v431
    %v615 = vpop.f32.mrb[0].mxu0
    %v616 = vadd.f32 0.0, %v615
    %v617 = vpop.f32.mrb[0].mxu0
    %v618 = vpop.f32.mrb[0].mxu0
    %v619 = vadd.f32 0.0, %v618
    %v620 = vpop.f32.mrb[0].mxu0
    %621 = vmatprep.mubr.bf16.mxu0 0
    %622 = vmatmul.mubr.bf16.gmra.mrb[0].mxu0 %v434
    %v623 = vpop.f32.mrb[0].mxu0
    %v624 = vadd.f32 0.0, %v623
    %v625 = vpop.f32.mrb[0].mxu0
    %v626 = vpop.f32.mrb[0].mxu0
    %v627 = vadd.f32 0.0, %v626
    %v628 = vpop.f32.mrb[0].mxu0
    %629 = vmatprep.mubr.bf16.mxu0 0
    %630 = vmatmul.mubr.bf16.gmra.mrb[0].mxu0 %v437
    %v631 = vpop.f32.mrb[0].mxu0
    %v632 = vadd.f32 0.0, %v631
    %v633 = vpop.f32.mrb[0].mxu0
    %v634 = vpop.f32.mrb[0].mxu0
    %v635 = vadd.f32 0.0, %v634
    %v636 = vpop.f32.mrb[0].mxu0
    %637 = vmatprep.mubr.bf16.mxu0 0
    %638 = vmatmul.mubr.bf16.gmra.mrb[0].mxu0 %v440
    %v639 = vpop.f32.mrb[0].mxu0
    %v640 = vadd.f32 0.0, %v639
    %v641 = vpop.f32.mrb[0].mxu0
    %v642 = vpop.f32.mrb[0].mxu0
    %v643 = vadd.f32 0.0, %v642
    %v644 = vpop.f32.mrb[0].mxu0
    %645 = vmatprep.mubr.bf16.mxu0 0
    %646 = vmatmul.mubr.bf16.gmra.mrb[0].mxu0 %v443
    %v647 = vpop.f32.mrb[0].mxu0
    %v648 = vadd.f32 0.0, %v647
    %v649 = vpop.f32.mrb[0].mxu0
    %v650 = vpop.f32.mrb[0].mxu0
    %v651 = vadd.f32 0.0, %v650
    %v652 = vpop.f32.mrb[0].mxu0
    %653 = vmatprep.mubr.bf16.mxu0 0
    %654 = vmatmul.mubr.bf16.gmra.mrb[0].mxu0 %v446
    %v655 = vpop.f32.mrb[0].mxu0
    %v656 = vadd.f32 0.0, %v655
    %v657 = vpop.f32.mrb[0].mxu0
    %v658 = vpop.f32.mrb[0].mxu0
    %v659 = vadd.f32 0.0, %v658
    %v660 = vpop.f32.mrb[0].mxu0
    %661 = vmatprep.mubr.bf16.mxu0 0
    %662 = vmatmul.mubr.bf16.gmra.mrb[0].mxu0 %v449
    %v663 = vpop.f32.mrb[0].mxu0
    %v664 = vadd.f32 0.0, %v663
    %v665 = vpop.f32.mrb[0].mxu0
    %v666 = vpop.f32.mrb[0].mxu0
    %v667 = vadd.f32 0.0, %v666
    %v668 = vpop.f32.mrb[0].mxu0
    %669 = vmatprep.mubr.bf16.mxu0 0
    %670 = vmatmul.mubr.bf16.gmra.mrb[0].mxu0 %v452
    %v671 = vpop.f32.mrb[0].mxu0
    %v672 = vadd.f32 0.0, %v671
    %v673 = vpop.f32.mrb[0].mxu0
    %v674 = vpop.f32.mrb[0].mxu0
    %v675 = vadd.f32 0.0, %v674
    %v676 = vpop.f32.mrb[0].mxu0
    %677 = vmatprep.mubr.bf16.mxu0 0
    %678 = vmatmul.mubr.bf16.gmra.mrb[0].mxu0 %v455
    %v679 = vpop.f32.mrb[0].mxu0
    %v680 = vadd.f32 0.0, %v679
    %v681 = vpop.f32.mrb[0].mxu0
    %v682 = vpop.f32.mrb[0].mxu0
    %v683 = vadd.f32 0.0, %v682
    %v684 = vpop.f32.mrb[0].mxu0
    %685 = vmatprep.mubr.bf16.mxu0 0
    %686 = vmatmul.mubr.bf16.gmra.mrb[0].mxu0 %v458
    %v687 = vpop.f32.mrb[0].mxu0
    %v688 = vadd.f32 0.0, %v687
    %v689 = vpop.f32.mrb[0].mxu0
    %v690 = vpop.f32.mrb[0].mxu0
    %v691 = vadd.f32 0.0, %v690
    %v692 = vpop.f32.mrb[0].mxu0
    %693 = vmatprep.mubr.bf16.mxu0 0
    %694 = vmatmul.mubr.bf16.gmra.mrb[0].mxu0 %v461
    %v695 = vpop.f32.mrb[0].mxu0
    %v696 = vadd.f32 0.0, %v695
    %v697 = vpop.f32.mrb[0].mxu0
    %v698 = vpop.f32.mrb[0].mxu0
    %v699 = vadd.f32 0.0, %v698
    %v700 = vpop.f32.mrb[0].mxu0
    %701 = vmatprep.mubr.bf16.mxu0 0
    %702 = vmatmul.mubr.bf16.gmra.mrb[0].mxu0 %v464
    %v703 = vpop.f32.mrb[0].mxu0
    %v704 = vadd.f32 0.0, %v703
    %v705 = vpop.f32.mrb[0].mxu0
    %v706 = vpop.f32.mrb[0].mxu0
    %v707 = vadd.f32 0.0, %v706
    %v708 = vpop.f32.mrb[0].mxu0
    %709 = vmatprep.mubr.bf16.mxu0 0
    %710 = vmatmul.mubr.bf16.gmra.mrb[0].mxu0 %v467
    %v711 = vpop.f32.mrb[0].mxu0
    %v712 = vadd.f32 0.0, %v711
    %v713 = vpop.f32.mrb[0].mxu0
    %v714 = vpop.f32.mrb[0].mxu0
    %v715 = vadd.f32 0.0, %v714
    %v716 = vpop.f32.mrb[0].mxu0
    %717 = vmatprep.mubr.bf16.mxu0 0
    %718 = vmatmul.mubr.bf16.gmra.mrb[0].mxu0 %v470
    %v719 = vpop.f32.mrb[0].mxu0
    %v720 = vadd.f32 0.0, %v719
    %v721 = vpop.f32.mrb[0].mxu0
    %v722 = vpop.f32.mrb[0].mxu0
    %v723 = vadd.f32 0.0, %v722
    %v724 = vpop.f32.mrb[0].mxu0
    %725 = vmatprep.mubr.bf16.mxu0 0
    %726 = vmatmul.mubr.bf16.gmra.mrb[0].mxu0 %v473
    %v727 = vpop.f32.mrb[0].mxu0
    %v728 = vadd.f32 0.0, %v727
    %v729 = vpop.f32.mrb[0].mxu0
    %v730 = vpop.f32.mrb[0].mxu0
    %v731 = vadd.f32 0.0, %v730
    %v732 = vpop.f32.mrb[0].mxu0
    %733 = vmatprep.mubr.bf16.mxu0 0
    %734 = vmatmul.mubr.bf16.gmra.mrb[0].mxu0 %v476
    %v735 = vpop.f32.mrb[0].mxu0
    %v736 = vadd.f32 0.0, %v735
    %v737 = vpop.f32.mrb[0].mxu0
    %v738 = vpop.f32.mrb[0].mxu0
    %v739 = vadd.f32 0.0, %v738
    %v740 = vpop.f32.mrb[0].mxu0
    %741 = vmatprep.mubr.bf16.mxu0 0
    %742 = vmatmul.mubr.bf16.gmra.mrb[0].mxu0 %v479
    %v743 = vpop.f32.mrb[0].mxu0
    %v744 = vadd.f32 0.0, %v743
    %v745 = vpop.f32.mrb[0].mxu0
    %v746 = vpop.f32.mrb[0].mxu0
    %v747 = vadd.f32 0.0, %v746
    %v748 = vpop.f32.mrb[0].mxu0
    %749 = vmatprep.mubr.bf16.mxu0 0
    %750 = vmatmul.mubr.bf16.gmra.mrb[0].mxu0 %v482
    %v751 = vpop.f32.mrb[0].mxu0
    %v752 = vadd.f32 0.0, %v751
    %v753 = vpop.f32.mrb[0].mxu0
    %v754 = vpop.f32.mrb[0].mxu0
    %v755 = vadd.f32 0.0, %v754
    %v756 = vpop.f32.mrb[0].mxu0
    %757 = vmatprep.mubr.bf16.mxu0 0
    %758 = vmatmul.mubr.bf16.gmra.mrb[0].mxu0 %v485
    %v759 = vpop.f32.mrb[0].mxu0
    %v760 = vadd.f32 0.0, %v759
    %v761 = vpop.f32.mrb[0].mxu0
    %v762 = vpop.f32.mrb[0].mxu0
    %v763 = vadd.f32 0.0, %v762
    %v764 = vpop.f32.mrb[0].mxu0
    %765 = vmatprep.mubr.bf16.mxu0 0
    %766 = vmatmul.mubr.bf16.gmra.mrb[0].mxu0 %v488
    %v767 = vpop.f32.mrb[0].mxu0
    %v768 = vadd.f32 0.0, %v767
    %v769 = vpop.f32.mrb[0].mxu0
    %v770 = vpop.f32.mrb[0].mxu0
    %v771 = vadd.f32 0.0, %v770
    %v772 = vpop.f32.mrb[0].mxu0
    %773 = vmatprep.mubr.bf16.mxu0 0
    %774 = vmatmul.mubr.bf16.gmra.mrb[0].mxu0 %v491
    %v775 = vpop.f32.mrb[0].mxu0
    %v776 = vadd.f32 0.0, %v775
    %v777 = vpop.f32.mrb[0].mxu0
    %v778 = vpop.f32.mrb[0].mxu0
    %v779 = vadd.f32 0.0, %v778
    %v780 = vpop.f32.mrb[0].mxu0
    %781 = vdwg.mxu0
    %v846 = vunpack.c.l.b16 %v88
    %v847 = vunpack.c.l.b16 %v89
    %v848 = vunpack.c.l.b16 %v90
    %v849 = vunpack.c.l.b16 %v91
    %v850 = vunpack.c.l.b16 %v92
    %v851 = vunpack.c.l.b16 %v93
    %v852 = vunpack.c.l.b16 %v94
    %v853 = vunpack.c.l.b16 %v95
    %v854 = vunpack.c.l.b16 %v96
    %v855 = vunpack.c.l.b16 %v97
    %v856 = vunpack.c.l.b16 %v98
    %v857 = vunpack.c.l.b16 %v99
    %v858 = vunpack.c.l.b16 %v100
    %v859 = vunpack.c.l.b16 %v101
    %v860 = vunpack.c.l.b16 %v102
    %v861 = vunpack.c.l.b16 %v103
    %v862 = vunpack.c.l.b16 %v104
    %v863 = vunpack.c.l.b16 %v105
    %v864 = vunpack.c.l.b16 %v106
    %v865 = vunpack.c.l.b16 %v107
    %v866 = vunpack.c.l.b16 %v108
    %v867 = vunpack.c.l.b16 %v109
    %v868 = vunpack.c.l.b16 %v110
    %v869 = vunpack.c.l.b16 %v111
    %v870 = vunpack.c.l.b16 %v112
    %v871 = vunpack.c.l.b16 %v113
    %v872 = vunpack.c.l.b16 %v114
    %v873 = vunpack.c.l.b16 %v115
    %v874 = vunpack.c.l.b16 %v116
    %v875 = vunpack.c.l.b16 %v117
    %v876 = vunpack.c.l.b16 %v118
    %v877 = vunpack.c.l.b16 %v119
    %v878 = vunpack.c.l.b16 %v120
    %v879 = vunpack.c.l.b16 %v121
    %v880 = vunpack.c.l.b16 %v122
    %v881 = vunpack.c.l.b16 %v123
    %v882 = vunpack.c.l.b16 %v124
    %v883 = vunpack.c.l.b16 %v125
    %v884 = vunpack.c.l.b16 %v126
    %v885 = vunpack.c.l.b16 %v127
    %v886 = vunpack.c.l.b16 %v128
    %v887 = vunpack.c.l.b16 %v129
    %v888 = vunpack.c.l.b16 %v130
    %v889 = vunpack.c.l.b16 %v131
    %v890 = vunpack.c.l.b16 %v132
    %v891 = vunpack.c.l.b16 %v133
    %v892 = vunpack.c.l.b16 %v134
    %v893 = vunpack.c.l.b16 %v135
    %v894 = vunpack.c.l.b16 %v136
    %v895 = vunpack.c.l.b16 %v137
    %v896 = vunpack.c.l.b16 %v138
    %v897 = vunpack.c.l.b16 %v139
    %v898 = vunpack.c.l.b16 %v140
    %v899 = vunpack.c.l.b16 %v141
    %v900 = vunpack.c.l.b16 %v142
    %v901 = vunpack.c.l.b16 %v143
    %v902 = vunpack.c.l.b16 %v144
    %v903 = vunpack.c.l.b16 %v145
    %v904 = vunpack.c.l.b16 %v146
    %v905 = vunpack.c.l.b16 %v147
    %v906 = vunpack.c.l.b16 %v148
    %v907 = vunpack.c.l.b16 %v149
    %v908 = vunpack.c.l.b16 %v150
    %v909 = vunpack.c.l.b16 %v151
    %v910 = vpack.c.b16 %v847, %v846
    %v911 = vpack.c.b16 %v849, %v848
    %v912 = vpack.c.b16 %v851, %v850
    %v913 = vpack.c.b16 %v853, %v852
    %v914 = vpack.c.b16 %v855, %v854
    %v915 = vpack.c.b16 %v857, %v856
    %v916 = vpack.c.b16 %v859, %v858
    %v917 = vpack.c.b16 %v861, %v860
    %v918 = vpack.c.b16 %v863, %v862
    %v919 = vpack.c.b16 %v865, %v864
    %v920 = vpack.c.b16 %v867, %v866
    %v921 = vpack.c.b16 %v869, %v868
    %v922 = vpack.c.b16 %v871, %v870
    %v923 = vpack.c.b16 %v873, %v872
    %v924 = vpack.c.b16 %v875, %v874
    %v925 = vpack.c.b16 %v877, %v876
    %v926 = vpack.c.b16 %v879, %v878
    %v927 = vpack.c.b16 %v881, %v880
    %v928 = vpack.c.b16 %v883, %v882
    %v929 = vpack.c.b16 %v885, %v884
    %v930 = vpack.c.b16 %v887, %v886
    %v931 = vpack.c.b16 %v889, %v888
    %v932 = vpack.c.b16 %v891, %v890
    %v933 = vpack.c.b16 %v893, %v892
    %v934 = vpack.c.b16 %v895, %v894
    %v935 = vpack.c.b16 %v897, %v896
    %v936 = vpack.c.b16 %v899, %v898
    %v937 = vpack.c.b16 %v901, %v900
    %v938 = vpack.c.b16 %v903, %v902
    %v939 = vpack.c.b16 %v905, %v904
    %v940 = vpack.c.b16 %v907, %v906
    %v941 = vpack.c.b16 %v909, %v908
    %v946 = vunpack.c.l.b16 %v152
    %v947 = vunpack.c.l.b16 %v153
    %v948 = vunpack.c.l.b16 %v154
    %v949 = vunpack.c.l.b16 %v155
    %v950 = vpack.c.b16 %v947, %v946
    %v951 = vpack.c.b16 %v949, %v948
    %v955 = vsel %vm396, %v910, 0
    %v958 = vsel %vm396, %v911, 0
    %v961 = vsel %vm396, %v912, 0
    %v964 = vsel %vm396, %v913, 0
    %v967 = vsel %vm396, %v914, 0
    %v970 = vsel %vm396, %v915, 0
    %v973 = vsel %vm396, %v916, 0
    %v976 = vsel %vm396, %v917, 0
    %v979 = vsel %vm396, %v918, 0
    %v982 = vsel %vm396, %v919, 0
    %v985 = vsel %vm396, %v920, 0
    %v988 = vsel %vm396, %v921, 0
    %v991 = vsel %vm396, %v922, 0
    %v994 = vsel %vm396, %v923, 0
    %v997 = vsel %vm396, %v924, 0
    %v1000 = vsel %vm396, %v925, 0
    %v1003 = vsel %vm396, %v926, 0
    %v1006 = vsel %vm396, %v927, 0
    %v1009 = vsel %vm396, %v928, 0
    %v1012 = vsel %vm396, %v929, 0
    %v1015 = vsel %vm396, %v930, 0
    %v1018 = vsel %vm396, %v931, 0
    %v1021 = vsel %vm396, %v932, 0
    %v1024 = vsel %vm396, %v933, 0
    %v1027 = vsel %vm396, %v934, 0
    %v1030 = vsel %vm396, %v935, 0
    %v1033 = vsel %vm396, %v936, 0
    %v1036 = vsel %vm396, %v937, 0
    %v1039 = vsel %vm396, %v938, 0
    %v1042 = vsel %vm396, %v939, 0
    %v1045 = vsel %vm396, %v940, 0
    %v1048 = vsel %vm396, %v941, 0
    %1050 = vmatprep.subr.bf16.mxu0 0
    %1051 = vmatpush1.bf16.msra.mxu0 %v950
    %1052 = vmatprep.subr.bf16.mxu0 0
    %1053 = vmatpush1.bf16.msra.mxu0 %v951
    %1054 = vmatprep.subr.bf16.mxu0 0
    %1055 = vmatpush1.bf16.msra.mxu0 0
    %1056 = vmatprep.subr.bf16.mxu0 0
    %1057 = vmatpush1.bf16.msra.mxu0 0
    %1058 = vmatprep.subr.bf16.mxu0 0
    %1059 = vmatpush1.bf16.msra.mxu0 0
    %1060 = vmatprep.subr.bf16.mxu0 0
    %1061 = vmatpush1.bf16.msra.mxu0 0
    %1062 = vmatprep.subr.bf16.mxu0 0
    %1063 = vmatpush1.bf16.msra.mxu0 0
    %1064 = vmatprep.subr.bf16.mxu0 0
    %1065 = vmatpush1.bf16.msra.mxu0 0
    %1066 = vmatprep.subr.bf16.mxu0 0
    %1067 = vmatpush1.bf16.msra.mxu0 0
    %1068 = vmatprep.subr.bf16.mxu0 0
    %1069 = vmatpush1.bf16.msra.mxu0 0
    %1070 = vmatprep.subr.bf16.mxu0 0
    %1071 = vmatpush1.bf16.msra.mxu0 0
    %1072 = vmatprep.subr.bf16.mxu0 0
    %1073 = vmatpush1.bf16.msra.mxu0 0
    %1074 = vmatprep.subr.bf16.mxu0 0
    %1075 = vmatpush1.bf16.msra.mxu0 0
    %1076 = vmatprep.subr.bf16.mxu0 0
    %1077 = vmatpush1.bf16.msra.mxu0 0
    %1078 = vmatprep.subr.bf16.mxu0 0
    %1079 = vmatpush1.bf16.msra.mxu0 0
    %1080 = vmatprep.subr.bf16.mxu0 0
    %1081 = vmatpush1.bf16.msra.mxu0 0
    %1082 = vmatprep.mubr.bf16.mxu0 0
    %1083 = vmatmul.mubr.bf16.gmra.mrb[0].mxu0 %v955
    %v1084 = vpop.f32.mrb[0].mxu0
    %v1085 = vadd.f32 %v528, %v1084
    %v1086 = vpop.f32.mrb[0].mxu0
    %v1087 = vpop.f32.mrb[0].mxu0
    %v1088 = vadd.f32 %v531, %v1087
    %v1089 = vpop.f32.mrb[0].mxu0
    %1090 = vmatprep.mubr.bf16.mxu0 0
    %1091 = vmatmul.mubr.bf16.gmra.mrb[0].mxu0 %v958
    %v1092 = vpop.f32.mrb[0].mxu0
    %v1093 = vadd.f32 %v536, %v1092
    %v1094 = vpop.f32.mrb[0].mxu0
    %v1095 = vpop.f32.mrb[0].mxu0
    %v1096 = vadd.f32 %v539, %v1095
    %v1097 = vpop.f32.mrb[0].mxu0
    %1098 = vmatprep.mubr.bf16.mxu0 0
    %1099 = vmatmul.mubr.bf16.gmra.mrb[0].mxu0 %v961
    %v1100 = vpop.f32.mrb[0].mxu0
    %v1101 = vadd.f32 %v544, %v1100
    %v1102 = vpop.f32.mrb[0].mxu0
    %v1103 = vpop.f32.mrb[0].mxu0
    %v1104 = vadd.f32 %v547, %v1103
    %v1105 = vpop.f32.mrb[0].mxu0
    %1106 = vmatprep.mubr.bf16.mxu0 0
    %1107 = vmatmul.mubr.bf16.gmra.mrb[0].mxu0 %v964
    %v1108 = vpop.f32.mrb[0].mxu0
    %v1109 = vadd.f32 %v552, %v1108
    %v1110 = vpop.f32.mrb[0].mxu0
    %v1111 = vpop.f32.mrb[0].mxu0
    %v1112 = vadd.f32 %v555, %v1111
    %v1113 = vpop.f32.mrb[0].mxu0
    %1114 = vmatprep.mubr.bf16.mxu0 0
    %1115 = vmatmul.mubr.bf16.gmra.mrb[0].mxu0 %v967
    %v1116 = vpop.f32.mrb[0].mxu0
    %v1117 = vadd.f32 %v560, %v1116
    %v1118 = vpop.f32.mrb[0].mxu0
    %v1119 = vpop.f32.mrb[0].mxu0
    %v1120 = vadd.f32 %v563, %v1119
    %v1121 = vpop.f32.mrb[0].mxu0
    %1122 = vmatprep.mubr.bf16.mxu0 0
    %1123 = vmatmul.mubr.bf16.gmra.mrb[0].mxu0 %v970
    %v1124 = vpop.f32.mrb[0].mxu0
    %v1125 = vadd.f32 %v568, %v1124
    %v1126 = vpop.f32.mrb[0].mxu0
    %v1127 = vpop.f32.mrb[0].mxu0
    %v1128 = vadd.f32 %v571, %v1127
    %v1129 = vpop.f32.mrb[0].mxu0
    %1130 = vmatprep.mubr.bf16.mxu0 0
    %1131 = vmatmul.mubr.bf16.gmra.mrb[0].mxu0 %v973
    %v1132 = vpop.f32.mrb[0].mxu0
    %v1133 = vadd.f32 %v576, %v1132
    %v1134 = vpop.f32.mrb[0].mxu0
    %v1135 = vpop.f32.mrb[0].mxu0
    %v1136 = vadd.f32 %v579, %v1135
    %v1137 = vpop.f32.mrb[0].mxu0
    %1138 = vmatprep.mubr.bf16.mxu0 0
    %1139 = vmatmul.mubr.bf16.gmra.mrb[0].mxu0 %v976
    %v1140 = vpop.f32.mrb[0].mxu0
    %v1141 = vadd.f32 %v584, %v1140
    %v1142 = vpop.f32.mrb[0].mxu0
    %v1143 = vpop.f32.mrb[0].mxu0
    %v1144 = vadd.f32 %v587, %v1143
    %v1145 = vpop.f32.mrb[0].mxu0
    %1146 = vmatprep.mubr.bf16.mxu0 0
    %1147 = vmatmul.mubr.bf16.gmra.mrb[0].mxu0 %v979
    %v1148 = vpop.f32.mrb[0].mxu0
    %v1149 = vadd.f32 %v592, %v1148
    %v1150 = vpop.f32.mrb[0].mxu0
    %v1151 = vpop.f32.mrb[0].mxu0
    %v1152 = vadd.f32 %v595, %v1151
    %v1153 = vpop.f32.mrb[0].mxu0
    %1154 = vmatprep.mubr.bf16.mxu0 0
    %1155 = vmatmul.mubr.bf16.gmra.mrb[0].mxu0 %v982
    %v1156 = vpop.f32.mrb[0].mxu0
    %v1157 = vadd.f32 %v600, %v1156
    %v1158 = vpop.f32.mrb[0].mxu0
    %v1159 = vpop.f32.mrb[0].mxu0
    %v1160 = vadd.f32 %v603, %v1159
    %v1161 = vpop.f32.mrb[0].mxu0
    %1162 = vmatprep.mubr.bf16.mxu0 0
    %1163 = vmatmul.mubr.bf16.gmra.mrb[0].mxu0 %v985
    %v1164 = vpop.f32.mrb[0].mxu0
    %v1165 = vadd.f32 %v608, %v1164
    %v1166 = vpop.f32.mrb[0].mxu0
    %v1167 = vpop.f32.mrb[0].mxu0
    %v1168 = vadd.f32 %v611, %v1167
    %v1169 = vpop.f32.mrb[0].mxu0
    %1170 = vmatprep.mubr.bf16.mxu0 0
    %1171 = vmatmul.mubr.bf16.gmra.mrb[0].mxu0 %v988
    %v1172 = vpop.f32.mrb[0].mxu0
    %v1173 = vadd.f32 %v616, %v1172
    %v1174 = vpop.f32.mrb[0].mxu0
    %v1175 = vpop.f32.mrb[0].mxu0
    %v1176 = vadd.f32 %v619, %v1175
    %v1177 = vpop.f32.mrb[0].mxu0
    %1178 = vmatprep.mubr.bf16.mxu0 0
    %1179 = vmatmul.mubr.bf16.gmra.mrb[0].mxu0 %v991
    %v1180 = vpop.f32.mrb[0].mxu0
    %v1181 = vadd.f32 %v624, %v1180
    %v1182 = vpop.f32.mrb[0].mxu0
    %v1183 = vpop.f32.mrb[0].mxu0
    %v1184 = vadd.f32 %v627, %v1183
    %v1185 = vpop.f32.mrb[0].mxu0
    %1186 = vmatprep.mubr.bf16.mxu0 0
    %1187 = vmatmul.mubr.bf16.gmra.mrb[0].mxu0 %v994
    %v1188 = vpop.f32.mrb[0].mxu0
    %v1189 = vadd.f32 %v632, %v1188
    %v1190 = vpop.f32.mrb[0].mxu0
    %v1191 = vpop.f32.mrb[0].mxu0
    %v1192 = vadd.f32 %v635, %v1191
    %v1193 = vpop.f32.mrb[0].mxu0
    %1194 = vmatprep.mubr.bf16.mxu0 0
    %1195 = vmatmul.mubr.bf16.gmra.mrb[0].mxu0 %v997
    %v1196 = vpop.f32.mrb[0].mxu0
    %v1197 = vadd.f32 %v640, %v1196
    %v1198 = vpop.f32.mrb[0].mxu0
    %v1199 = vpop.f32.mrb[0].mxu0
    %v1200 = vadd.f32 %v643, %v1199
    %v1201 = vpop.f32.mrb[0].mxu0
    %1202 = vmatprep.mubr.bf16.mxu0 0
    %1203 = vmatmul.mubr.bf16.gmra.mrb[0].mxu0 %v1000
    %v1204 = vpop.f32.mrb[0].mxu0
    %v1205 = vadd.f32 %v648, %v1204
    %v1206 = vpop.f32.mrb[0].mxu0
    %v1207 = vpop.f32.mrb[0].mxu0
    %v1208 = vadd.f32 %v651, %v1207
    %v1209 = vpop.f32.mrb[0].mxu0
    %1210 = vmatprep.mubr.bf16.mxu0 0
    %1211 = vmatmul.mubr.bf16.gmra.mrb[0].mxu0 %v1003
    %v1212 = vpop.f32.mrb[0].mxu0
    %v1213 = vadd.f32 %v656, %v1212
    %v1214 = vpop.f32.mrb[0].mxu0
    %v1215 = vpop.f32.mrb[0].mxu0
    %v1216 = vadd.f32 %v659, %v1215
    %v1217 = vpop.f32.mrb[0].mxu0
    %1218 = vmatprep.mubr.bf16.mxu0 0
    %1219 = vmatmul.mubr.bf16.gmra.mrb[0].mxu0 %v1006
    %v1220 = vpop.f32.mrb[0].mxu0
    %v1221 = vadd.f32 %v664, %v1220
    %v1222 = vpop.f32.mrb[0].mxu0
    %v1223 = vpop.f32.mrb[0].mxu0
    %v1224 = vadd.f32 %v667, %v1223
    %v1225 = vpop.f32.mrb[0].mxu0
    %1226 = vmatprep.mubr.bf16.mxu0 0
    %1227 = vmatmul.mubr.bf16.gmra.mrb[0].mxu0 %v1009
    %v1228 = vpop.f32.mrb[0].mxu0
    %v1229 = vadd.f32 %v672, %v1228
    %v1230 = vpop.f32.mrb[0].mxu0
    %v1231 = vpop.f32.mrb[0].mxu0
    %v1232 = vadd.f32 %v675, %v1231
    %v1233 = vpop.f32.mrb[0].mxu0
    %1234 = vmatprep.mubr.bf16.mxu0 0
    %1235 = vmatmul.mubr.bf16.gmra.mrb[0].mxu0 %v1012
    %v1236 = vpop.f32.mrb[0].mxu0
    %v1237 = vadd.f32 %v680, %v1236
    %v1238 = vpop.f32.mrb[0].mxu0
    %v1239 = vpop.f32.mrb[0].mxu0
    %v1240 = vadd.f32 %v683, %v1239
    %v1241 = vpop.f32.mrb[0].mxu0
    %1242 = vmatprep.mubr.bf16.mxu0 0
    %1243 = vmatmul.mubr.bf16.gmra.mrb[0].mxu0 %v1015
    %v1244 = vpop.f32.mrb[0].mxu0
    %v1245 = vadd.f32 %v688, %v1244
    %v1246 = vpop.f32.mrb[0].mxu0
    %v1247 = vpop.f32.mrb[0].mxu0
    %v1248 = vadd.f32 %v691, %v1247
    %v1249 = vpop.f32.mrb[0].mxu0
    %1250 = vmatprep.mubr.bf16.mxu0 0
    %1251 = vmatmul.mubr.bf16.gmra.mrb[0].mxu0 %v1018
    %v1252 = vpop.f32.mrb[0].mxu0
    %v1253 = vadd.f32 %v696, %v1252
    %v1254 = vpop.f32.mrb[0].mxu0
    %v1255 = vpop.f32.mrb[0].mxu0
    %v1256 = vadd.f32 %v699, %v1255
    %v1257 = vpop.f32.mrb[0].mxu0
    %1258 = vmatprep.mubr.bf16.mxu0 0
    %1259 = vmatmul.mubr.bf16.gmra.mrb[0].mxu0 %v1021
    %v1260 = vpop.f32.mrb[0].mxu0
    %v1261 = vadd.f32 %v704, %v1260
    %v1262 = vpop.f32.mrb[0].mxu0
    %v1263 = vpop.f32.mrb[0].mxu0
    %v1264 = vadd.f32 %v707, %v1263
    %v1265 = vpop.f32.mrb[0].mxu0
    %1266 = vmatprep.mubr.bf16.mxu0 0
    %1267 = vmatmul.mubr.bf16.gmra.mrb[0].mxu0 %v1024
    %v1268 = vpop.f32.mrb[0].mxu0
    %v1269 = vadd.f32 %v712, %v1268
    %v1270 = vpop.f32.mrb[0].mxu0
    %v1271 = vpop.f32.mrb[0].mxu0
    %v1272 = vadd.f32 %v715, %v1271
    %v1273 = vpop.f32.mrb[0].mxu0
    %1274 = vmatprep.mubr.bf16.mxu0 0
    %1275 = vmatmul.mubr.bf16.gmra.mrb[0].mxu0 %v1027
    %v1276 = vpop.f32.mrb[0].mxu0
    %v1277 = vadd.f32 %v720, %v1276
    %v1278 = vpop.f32.mrb[0].mxu0
    %v1279 = vpop.f32.mrb[0].mxu0
    %v1280 = vadd.f32 %v723, %v1279
    %v1281 = vpop.f32.mrb[0].mxu0
    %1282 = vmatprep.mubr.bf16.mxu0 0
    %1283 = vmatmul.mubr.bf16.gmra.mrb[0].mxu0 %v1030
    %v1284 = vpop.f32.mrb[0].mxu0
    %v1285 = vadd.f32 %v728, %v1284
    %v1286 = vpop.f32.mrb[0].mxu0
    %v1287 = vpop.f32.mrb[0].mxu0
    %v1288 = vadd.f32 %v731, %v1287
    %v1289 = vpop.f32.mrb[0].mxu0
    %1290 = vmatprep.mubr.bf16.mxu0 0
    %1291 = vmatmul.mubr.bf16.gmra.mrb[0].mxu0 %v1033
    %v1292 = vpop.f32.mrb[0].mxu0
    %v1293 = vadd.f32 %v736, %v1292
    %v1294 = vpop.f32.mrb[0].mxu0
    %v1295 = vpop.f32.mrb[0].mxu0
    %v1296 = vadd.f32 %v739, %v1295
    %v1297 = vpop.f32.mrb[0].mxu0
    %1298 = vmatprep.mubr.bf16.mxu0 0
    %1299 = vmatmul.mubr.bf16.gmra.mrb[0].mxu0 %v1036
    %v1300 = vpop.f32.mrb[0].mxu0
    %v1301 = vadd.f32 %v744, %v1300
    %v1302 = vpop.f32.mrb[0].mxu0
    %v1303 = vpop.f32.mrb[0].mxu0
    %v1304 = vadd.f32 %v747, %v1303
    %v1305 = vpop.f32.mrb[0].mxu0
    %1306 = vmatprep.mubr.bf16.mxu0 0
    %1307 = vmatmul.mubr.bf16.gmra.mrb[0].mxu0 %v1039
    %v1308 = vpop.f32.mrb[0].mxu0
    %v1309 = vadd.f32 %v752, %v1308
    %v1310 = vpop.f32.mrb[0].mxu0
    %v1311 = vpop.f32.mrb[0].mxu0
    %v1312 = vadd.f32 %v755, %v1311
    %v1313 = vpop.f32.mrb[0].mxu0
    %1314 = vmatprep.mubr.bf16.mxu0 0
    %1315 = vmatmul.mubr.bf16.gmra.mrb[0].mxu0 %v1042
    %v1316 = vpop.f32.mrb[0].mxu0
    %v1317 = vadd.f32 %v760, %v1316
    %v1318 = vpop.f32.mrb[0].mxu0
    %v1319 = vpop.f32.mrb[0].mxu0
    %v1320 = vadd.f32 %v763, %v1319
    %v1321 = vpop.f32.mrb[0].mxu0
    %1322 = vmatprep.mubr.bf16.mxu0 0
    %1323 = vmatmul.mubr.bf16.gmra.mrb[0].mxu0 %v1045
    %v1324 = vpop.f32.mrb[0].mxu0
    %v1325 = vadd.f32 %v768, %v1324
    %v1326 = vpop.f32.mrb[0].mxu0
    %v1327 = vpop.f32.mrb[0].mxu0
    %v1328 = vadd.f32 %v771, %v1327
    %v1329 = vpop.f32.mrb[0].mxu0
    %1330 = vmatprep.mubr.bf16.mxu0 0
    %1331 = vmatmul.mubr.bf16.gmra.mrb[0].mxu0 %v1048
    %v1332 = vpop.f32.mrb[0].mxu0
    %v1333 = vadd.f32 %v776, %v1332
    %v1334 = vpop.f32.mrb[0].mxu0
    %v1335 = vpop.f32.mrb[0].mxu0
    %v1336 = vadd.f32 %v779, %v1335
    %v1337 = vpop.f32.mrb[0].mxu0
    %1338 = vdwg.mxu0
    %v1339 = vld [vmem:[#allocation10] sm:$0x1]
    %v1341 = vlaneseq
    %v1342 = vshrl.u32 %v1341, 7
    %v1343 = vsub.s32 0, %v1342
    %v1344 = vrot.slane %v1339, %v1343
    %v1346 = vadd.f32 %v1085, %v1344
    %v1347 = vadd.f32 %v1088, %v1344
    %v1348 = vadd.f32 %v1093, %v1344
    %v1349 = vadd.f32 %v1096, %v1344
    %v1350 = vadd.f32 %v1101, %v1344
    %v1351 = vadd.f32 %v1104, %v1344
    %v1352 = vadd.f32 %v1109, %v1344
    %v1353 = vadd.f32 %v1112, %v1344
    %v1354 = vadd.f32 %v1117, %v1344
    %v1355 = vadd.f32 %v1120, %v1344
    %v1356 = vadd.f32 %v1125, %v1344
    %v1357 = vadd.f32 %v1128, %v1344
    %v1358 = vadd.f32 %v1133, %v1344
    %v1359 = vadd.f32 %v1136, %v1344
    %v1360 = vadd.f32 %v1141, %v1344
    %v1361 = vadd.f32 %v1144, %v1344
    %v1362 = vadd.f32 %v1149, %v1344
    %v1363 = vadd.f32 %v1152, %v1344
    %v1364 = vadd.f32 %v1157, %v1344
    %v1365 = vadd.f32 %v1160, %v1344
    %v1366 = vadd.f32 %v1165, %v1344
    %v1367 = vadd.f32 %v1168, %v1344
    %v1368 = vadd.f32 %v1173, %v1344
    %v1369 = vadd.f32 %v1176, %v1344
    %v1370 = vadd.f32 %v1181, %v1344
    %v1371 = vadd.f32 %v1184, %v1344
    %v1372 = vadd.f32 %v1189, %v1344
    %v1373 = vadd.f32 %v1192, %v1344
    %v1374 = vadd.f32 %v1197, %v1344
    %v1375 = vadd.f32 %v1200, %v1344
    %v1376 = vadd.f32 %v1205, %v1344
    %v1377 = vadd.f32 %v1208, %v1344
    %v1378 = vadd.f32 %v1213, %v1344
    %v1379 = vadd.f32 %v1216, %v1344
    %v1380 = vadd.f32 %v1221, %v1344
    %v1381 = vadd.f32 %v1224, %v1344
    %v1382 = vadd.f32 %v1229, %v1344
    %v1383 = vadd.f32 %v1232, %v1344
    %v1384 = vadd.f32 %v1237, %v1344
    %v1385 = vadd.f32 %v1240, %v1344
    %v1386 = vadd.f32 %v1245, %v1344
    %v1387 = vadd.f32 %v1248, %v1344
    %v1388 = vadd.f32 %v1253, %v1344
    %v1389 = vadd.f32 %v1256, %v1344
    %v1390 = vadd.f32 %v1261, %v1344
    %v1391 = vadd.f32 %v1264, %v1344
    %v1392 = vadd.f32 %v1269, %v1344
    %v1393 = vadd.f32 %v1272, %v1344
    %v1394 = vadd.f32 %v1277, %v1344
    %v1395 = vadd.f32 %v1280, %v1344
    %v1396 = vadd.f32 %v1285, %v1344
    %v1397 = vadd.f32 %v1288, %v1344
    %v1398 = vadd.f32 %v1293, %v1344
    %v1399 = vadd.f32 %v1296, %v1344
    %v1400 = vadd.f32 %v1301, %v1344
    %v1401 = vadd.f32 %v1304, %v1344
    %v1402 = vadd.f32 %v1309, %v1344
    %v1403 = vadd.f32 %v1312, %v1344
    %v1404 = vadd.f32 %v1317, %v1344
    %v1405 = vadd.f32 %v1320, %v1344
    %v1406 = vadd.f32 %v1325, %v1344
    %v1407 = vadd.f32 %v1328, %v1344
    %v1408 = vadd.f32 %v1333, %v1344
    %v1409 = vadd.f32 %v1336, %v1344
    %v1410 = vxor.u32 %v1346, 2147483648
    %v1411 = vxor.u32 %v1347, 2147483648
    %v1412 = vxor.u32 %v1348, 2147483648
    %v1413 = vxor.u32 %v1349, 2147483648
    %v1414 = vxor.u32 %v1350, 2147483648
    %v1415 = vxor.u32 %v1351, 2147483648
    %v1416 = vxor.u32 %v1352, 2147483648
    %v1417 = vxor.u32 %v1353, 2147483648
    %v1418 = vxor.u32 %v1354, 2147483648
    %v1419 = vxor.u32 %v1355, 2147483648
    %v1420 = vxor.u32 %v1356, 2147483648
    %v1421 = vxor.u32 %v1357, 2147483648
    %v1422 = vxor.u32 %v1358, 2147483648
    %v1423 = vxor.u32 %v1359, 2147483648
    %v1424 = vxor.u32 %v1360, 2147483648
    %v1425 = vxor.u32 %v1361, 2147483648
    %v1426 = vxor.u32 %v1362, 2147483648
    %v1427 = vxor.u32 %v1363, 2147483648
    %v1428 = vxor.u32 %v1364, 2147483648
    %v1429 = vxor.u32 %v1365, 2147483648
    %v1430 = vxor.u32 %v1366, 2147483648
    %v1431 = vxor.u32 %v1367, 2147483648
    %v1432 = vxor.u32 %v1368, 2147483648
    %v1433 = vxor.u32 %v1369, 2147483648
    %v1434 = vxor.u32 %v1370, 2147483648
    %v1435 = vxor.u32 %v1371, 2147483648
    %v1436 = vxor.u32 %v1372, 2147483648
    %v1437 = vxor.u32 %v1373, 2147483648
    %v1438 = vxor.u32 %v1374, 2147483648
    %v1439 = vxor.u32 %v1375, 2147483648
    %v1440 = vxor.u32 %v1376, 2147483648
    %v1441 = vxor.u32 %v1377, 2147483648
    %v1442 = vxor.u32 %v1378, 2147483648
    %v1443 = vxor.u32 %v1379, 2147483648
    %v1444 = vxor.u32 %v1380, 2147483648
    %v1445 = vxor.u32 %v1381, 2147483648
    %v1446 = vxor.u32 %v1382, 2147483648
    %v1447 = vxor.u32 %v1383, 2147483648
    %v1448 = vxor.u32 %v1384, 2147483648
    %v1449 = vxor.u32 %v1385, 2147483648
    %v1450 = vxor.u32 %v1386, 2147483648
    %v1451 = vxor.u32 %v1387, 2147483648
    %v1452 = vxor.u32 %v1388, 2147483648
    %v1453 = vxor.u32 %v1389, 2147483648
    %v1454 = vxor.u32 %v1390, 2147483648
    %v1455 = vxor.u32 %v1391, 2147483648
    %v1456 = vxor.u32 %v1392, 2147483648
    %v1457 = vxor.u32 %v1393, 2147483648
    %v1458 = vxor.u32 %v1394, 2147483648
    %v1459 = vxor.u32 %v1395, 2147483648
    %v1460 = vxor.u32 %v1396, 2147483648
    %v1461 = vxor.u32 %v1397, 2147483648
    %v1462 = vxor.u32 %v1398, 2147483648
    %v1463 = vxor.u32 %v1399, 2147483648
    %v1464 = vxor.u32 %v1400, 2147483648
    %v1465 = vxor.u32 %v1401, 2147483648
    %v1466 = vxor.u32 %v1402, 2147483648
    %v1467 = vxor.u32 %v1403, 2147483648
    %v1468 = vxor.u32 %v1404, 2147483648
    %v1469 = vxor.u32 %v1405, 2147483648
    %v1470 = vxor.u32 %v1406, 2147483648
    %v1471 = vxor.u32 %v1407, 2147483648
    %v1472 = vxor.u32 %v1408, 2147483648
    %v1473 = vxor.u32 %v1409, 2147483648
    %v1474 = vmul.f32 %v1410, 1.442695
    %v1475 = vpow.pop %v1474
    %v1476 = vmul.f32 %v1411, 1.442695
    %v1477 = vpow.pop %v1476
    %v1478 = vmul.f32 %v1412, 1.442695
    %v1479 = vpow.pop %v1478
    %v1480 = vmul.f32 %v1413, 1.442695
    %v1481 = vpow.pop %v1480
    %v1482 = vmul.f32 %v1414, 1.442695
    %v1483 = vpow.pop %v1482
    %v1484 = vmul.f32 %v1415, 1.442695
    %v1485 = vpow.pop %v1484
    %v1486 = vmul.f32 %v1416, 1.442695
    %v1487 = vpow.pop %v1486
    %v1488 = vmul.f32 %v1417, 1.442695
    %v1489 = vpow.pop %v1488
    %v1490 = vmul.f32 %v1418, 1.442695
    %v1491 = vpow.pop %v1490
    %v1492 = vmul.f32 %v1419, 1.442695
    %v1493 = vpow.pop %v1492
    %v1494 = vmul.f32 %v1420, 1.442695
    %v1495 = vpow.pop %v1494
    %v1496 = vmul.f32 %v1421, 1.442695
    %v1497 = vpow.pop %v1496
    %v1498 = vmul.f32 %v1422, 1.442695
    %v1499 = vpow.pop %v1498
    %v1500 = vmul.f32 %v1423, 1.442695
    %v1501 = vpow.pop %v1500
    %v1502 = vmul.f32 %v1424, 1.442695
    %v1503 = vpow.pop %v1502
    %v1504 = vmul.f32 %v1425, 1.442695
    %v1505 = vpow.pop %v1504
    %v1506 = vmul.f32 %v1426, 1.442695
    %v1507 = vpow.pop %v1506
    %v1508 = vmul.f32 %v1427, 1.442695
    %v1509 = vpow.pop %v1508
    %v1510 = vmul.f32 %v1428, 1.442695
    %v1511 = vpow.pop %v1510
    %v1512 = vmul.f32 %v1429, 1.442695
    %v1513 = vpow.pop %v1512
    %v1514 = vmul.f32 %v1430, 1.442695
    %v1515 = vpow.pop %v1514
    %v1516 = vmul.f32 %v1431, 1.442695
    %v1517 = vpow.pop %v1516
    %v1518 = vmul.f32 %v1432, 1.442695
    %v1519 = vpow.pop %v1518
    %v1520 = vmul.f32 %v1433, 1.442695
    %v1521 = vpow.pop %v1520
    %v1522 = vmul.f32 %v1434, 1.442695
    %v1523 = vpow.pop %v1522
    %v1524 = vmul.f32 %v1435, 1.442695
    %v1525 = vpow.pop %v1524
    %v1526 = vmul.f32 %v1436, 1.442695
    %v1527 = vpow.pop %v1526
    %v1528 = vmul.f32 %v1437, 1.442695
    %v1529 = vpow.pop %v1528
    %v1530 = vmul.f32 %v1438, 1.442695
    %v1531 = vpow.pop %v1530
    %v1532 = vmul.f32 %v1439, 1.442695
    %v1533 = vpow.pop %v1532
    %v1534 = vmul.f32 %v1440, 1.442695
    %v1535 = vpow.pop %v1534
    %v1536 = vmul.f32 %v1441, 1.442695
    %v1537 = vpow.pop %v1536
    %v1538 = vmul.f32 %v1442, 1.442695
    %v1539 = vpow.pop %v1538
    %v1540 = vmul.f32 %v1443, 1.442695
    %v1541 = vpow.pop %v1540
    %v1542 = vmul.f32 %v1444, 1.442695
    %v1543 = vpow.pop %v1542
    %v1544 = vmul.f32 %v1445, 1.442695
    %v1545 = vpow.pop %v1544
    %v1546 = vmul.f32 %v1446, 1.442695
    %v1547 = vpow.pop %v1546
    %v1548 = vmul.f32 %v1447, 1.442695
    %v1549 = vpow.pop %v1548
    %v1550 = vmul.f32 %v1448, 1.442695
    %v1551 = vpow.pop %v1550
    %v1552 = vmul.f32 %v1449, 1.442695
    %v1553 = vpow.pop %v1552
    %v1554 = vmul.f32 %v1450, 1.442695
    %v1555 = vpow.pop %v1554
    %v1556 = vmul.f32 %v1451, 1.442695
    %v1557 = vpow.pop %v1556
    %v1558 = vmul.f32 %v1452, 1.442695
    %v1559 = vpow.pop %v1558
    %v1560 = vmul.f32 %v1453, 1.442695
    %v1561 = vpow.pop %v1560
    %v1562 = vmul.f32 %v1454, 1.442695
    %v1563 = vpow.pop %v1562
    %v1564 = vmul.f32 %v1455, 1.442695
    %v1565 = vpow.pop %v1564
    %v1566 = vmul.f32 %v1456, 1.442695
    %v1567 = vpow.pop %v1566
    %v1568 = vmul.f32 %v1457, 1.442695
    %v1569 = vpow.pop %v1568
    %v1570 = vmul.f32 %v1458, 1.442695
    %v1571 = vpow.pop %v1570
    %v1572 = vmul.f32 %v1459, 1.442695
    %v1573 = vpow.pop %v1572
    %v1574 = vmul.f32 %v1460, 1.442695
    %v1575 = vpow.pop %v1574
    %v1576 = vmul.f32 %v1461, 1.442695
    %v1577 = vpow.pop %v1576
    %v1578 = vmul.f32 %v1462, 1.442695
    %v1579 = vpow.pop %v1578
    %v1580 = vmul.f32 %v1463, 1.442695
    %v1581 = vpow.pop %v1580
    %v1582 = vmul.f32 %v1464, 1.442695
    %v1583 = vpow.pop %v1582
    %v1584 = vmul.f32 %v1465, 1.442695
    %v1585 = vpow.pop %v1584
    %v1586 = vmul.f32 %v1466, 1.442695
    %v1587 = vpow.pop %v1586
    %v1588 = vmul.f32 %v1467, 1.442695
    %v1589 = vpow.pop %v1588
    %v1590 = vmul.f32 %v1468, 1.442695
    %v1591 = vpow.pop %v1590
    %v1592 = vmul.f32 %v1469, 1.442695
    %v1593 = vpow.pop %v1592
    %v1594 = vmul.f32 %v1470, 1.442695
    %v1595 = vpow.pop %v1594
    %v1596 = vmul.f32 %v1471, 1.442695
    %v1597 = vpow.pop %v1596
    %v1598 = vmul.f32 %v1472, 1.442695
    %v1599 = vpow.pop %v1598
    %v1600 = vmul.f32 %v1473, 1.442695
    %v1601 = vpow.pop %v1600
    %v1602 = vadd.f32 %v1475, 1.0
    %v1603 = vadd.f32 %v1477, 1.0
    %v1604 = vadd.f32 %v1479, 1.0
    %v1605 = vadd.f32 %v1481, 1.0
    %v1606 = vadd.f32 %v1483, 1.0
    %v1607 = vadd.f32 %v1485, 1.0
    %v1608 = vadd.f32 %v1487, 1.0
    %v1609 = vadd.f32 %v1489, 1.0
    %v1610 = vadd.f32 %v1491, 1.0
    %v1611 = vadd.f32 %v1493, 1.0
    %v1612 = vadd.f32 %v1495, 1.0
    %v1613 = vadd.f32 %v1497, 1.0
    %v1614 = vadd.f32 %v1499, 1.0
    %v1615 = vadd.f32 %v1501, 1.0
    %v1616 = vadd.f32 %v1503, 1.0
    %v1617 = vadd.f32 %v1505, 1.0
    %v1618 = vadd.f32 %v1507, 1.0
    %v1619 = vadd.f32 %v1509, 1.0
    %v1620 = vadd.f32 %v1511, 1.0
    %v1621 = vadd.f32 %v1513, 1.0
    %v1622 = vadd.f32 %v1515, 1.0
    %v1623 = vadd.f32 %v1517, 1.0
    %v1624 = vadd.f32 %v1519, 1.0
    %v1625 = vadd.f32 %v1521, 1.0
    %v1626 = vadd.f32 %v1523, 1.0
    %v1627 = vadd.f32 %v1525, 1.0
    %v1628 = vadd.f32 %v1527, 1.0
    %v1629 = vadd.f32 %v1529, 1.0
    %v1630 = vadd.f32 %v1531, 1.0
    %v1631 = vadd.f32 %v1533, 1.0
    %v1632 = vadd.f32 %v1535, 1.0
    %v1633 = vadd.f32 %v1537, 1.0
    %v1634 = vadd.f32 %v1539, 1.0
    %v1635 = vadd.f32 %v1541, 1.0
    %v1636 = vadd.f32 %v1543, 1.0
    %v1637 = vadd.f32 %v1545, 1.0
    %v1638 = vadd.f32 %v1547, 1.0
    %v1639 = vadd.f32 %v1549, 1.0
    %v1640 = vadd.f32 %v1551, 1.0
    %v1641 = vadd.f32 %v1553, 1.0
    %v1642 = vadd.f32 %v1555, 1.0
    %v1643 = vadd.f32 %v1557, 1.0
    %v1644 = vadd.f32 %v1559, 1.0
    %v1645 = vadd.f32 %v1561, 1.0
    %v1646 = vadd.f32 %v1563, 1.0
    %v1647 = vadd.f32 %v1565, 1.0
    %v1648 = vadd.f32 %v1567, 1.0
    %v1649 = vadd.f32 %v1569, 1.0
    %v1650 = vadd.f32 %v1571, 1.0
    %v1651 = vadd.f32 %v1573, 1.0
    %v1652 = vadd.f32 %v1575, 1.0
    %v1653 = vadd.f32 %v1577, 1.0
    %v1654 = vadd.f32 %v1579, 1.0
    %v1655 = vadd.f32 %v1581, 1.0
    %v1656 = vadd.f32 %v1583, 1.0
    %v1657 = vadd.f32 %v1585, 1.0
    %v1658 = vadd.f32 %v1587, 1.0
    %v1659 = vadd.f32 %v1589, 1.0
    %v1660 = vadd.f32 %v1591, 1.0
    %v1661 = vadd.f32 %v1593, 1.0
    %v1662 = vadd.f32 %v1595, 1.0
    %v1663 = vadd.f32 %v1597, 1.0
    %v1664 = vadd.f32 %v1599, 1.0
    %v1665 = vadd.f32 %v1601, 1.0
    %v1666 = vrcp.pop %v1602
    %v1667 = vmul.f32 1.0, %v1666
    %v1668 = vrcp.pop %v1603
    %v1669 = vmul.f32 1.0, %v1668
    %v1670 = vrcp.pop %v1604
    %v1671 = vmul.f32 1.0, %v1670
    %v1672 = vrcp.pop %v1605
    %v1673 = vmul.f32 1.0, %v1672
    %v1674 = vrcp.pop %v1606
    %v1675 = vmul.f32 1.0, %v1674
    %v1676 = vrcp.pop %v1607
    %v1677 = vmul.f32 1.0, %v1676
    %v1678 = vrcp.pop %v1608
    %v1679 = vmul.f32 1.0, %v1678
    %v1680 = vrcp.pop %v1609
    %v1681 = vmul.f32 1.0, %v1680
    %v1682 = vrcp.pop %v1610
    %v1683 = vmul.f32 1.0, %v1682
    %v1684 = vrcp.pop %v1611
    %v1685 = vmul.f32 1.0, %v1684
    %v1686 = vrcp.pop %v1612
    %v1687 = vmul.f32 1.0, %v1686
    %v1688 = vrcp.pop %v1613
    %v1689 = vmul.f32 1.0, %v1688
    %v1690 = vrcp.pop %v1614
    %v1691 = vmul.f32 1.0, %v1690
    %v1692 = vrcp.pop %v1615
    %v1693 = vmul.f32 1.0, %v1692
    %v1694 = vrcp.pop %v1616
    %v1695 = vmul.f32 1.0, %v1694
    %v1696 = vrcp.pop %v1617
    %v1697 = vmul.f32 1.0, %v1696
    %v1698 = vrcp.pop %v1618
    %v1699 = vmul.f32 1.0, %v1698
    %v1700 = vrcp.pop %v1619
    %v1701 = vmul.f32 1.0, %v1700
    %v1702 = vrcp.pop %v1620
    %v1703 = vmul.f32 1.0, %v1702
    %v1704 = vrcp.pop %v1621
    %v1705 = vmul.f32 1.0, %v1704
    %v1706 = vrcp.pop %v1622
    %v1707 = vmul.f32 1.0, %v1706
    %v1708 = vrcp.pop %v1623
    %v1709 = vmul.f32 1.0, %v1708
    %v1710 = vrcp.pop %v1624
    %v1711 = vmul.f32 1.0, %v1710
    %v1712 = vrcp.pop %v1625
    %v1713 = vmul.f32 1.0, %v1712
    %v1714 = vrcp.pop %v1626
    %v1715 = vmul.f32 1.0, %v1714
    %v1716 = vrcp.pop %v1627
    %v1717 = vmul.f32 1.0, %v1716
    %v1718 = vrcp.pop %v1628
    %v1719 = vmul.f32 1.0, %v1718
    %v1720 = vrcp.pop %v1629
    %v1721 = vmul.f32 1.0, %v1720
    %v1722 = vrcp.pop %v1630
    %v1723 = vmul.f32 1.0, %v1722
    %v1724 = vrcp.pop %v1631
    %v1725 = vmul.f32 1.0, %v1724
    %v1726 = vrcp.pop %v1632
    %v1727 = vmul.f32 1.0, %v1726
    %v1728 = vrcp.pop %v1633
    %v1729 = vmul.f32 1.0, %v1728
    %v1730 = vrcp.pop %v1634
    %v1731 = vmul.f32 1.0, %v1730
    %v1732 = vrcp.pop %v1635
    %v1733 = vmul.f32 1.0, %v1732
    %v1734 = vrcp.pop %v1636
    %v1735 = vmul.f32 1.0, %v1734
    %v1736 = vrcp.pop %v1637
    %v1737 = vmul.f32 1.0, %v1736
    %v1738 = vrcp.pop %v1638
    %v1739 = vmul.f32 1.0, %v1738
    %v1740 = vrcp.pop %v1639
    %v1741 = vmul.f32 1.0, %v1740
    %v1742 = vrcp.pop %v1640
    %v1743 = vmul.f32 1.0, %v1742
    %v1744 = vrcp.pop %v1641
    %v1745 = vmul.f32 1.0, %v1744
    %v1746 = vrcp.pop %v1642
    %v1747 = vmul.f32 1.0, %v1746
    %v1748 = vrcp.pop %v1643
    %v1749 = vmul.f32 1.0, %v1748
    %v1750 = vrcp.pop %v1644
    %v1751 = vmul.f32 1.0, %v1750
    %v1752 = vrcp.pop %v1645
    %v1753 = vmul.f32 1.0, %v1752
    %v1754 = vrcp.pop %v1646
    %v1755 = vmul.f32 1.0, %v1754
    %v1756 = vrcp.pop %v1647
    %v1757 = vmul.f32 1.0, %v1756
    %v1758 = vrcp.pop %v1648
    %v1759 = vmul.f32 1.0, %v1758
    %v1760 = vrcp.pop %v1649
    %v1761 = vmul.f32 1.0, %v1760
    %v1762 = vrcp.pop %v1650
    %v1763 = vmul.f32 1.0, %v1762
    %v1764 = vrcp.pop %v1651
    %v1765 = vmul.f32 1.0, %v1764
    %v1766 = vrcp.pop %v1652
    %v1767 = vmul.f32 1.0, %v1766
    %v1768 = vrcp.pop %v1653
    %v1769 = vmul.f32 1.0, %v1768
    %v1770 = vrcp.pop %v1654
    %v1771 = vmul.f32 1.0, %v1770
    %v1772 = vrcp.pop %v1655
    %v1773 = vmul.f32 1.0, %v1772
    %v1774 = vrcp.pop %v1656
    %v1775 = vmul.f32 1.0, %v1774
    %v1776 = vrcp.pop %v1657
    %v1777 = vmul.f32 1.0, %v1776
    %v1778 = vrcp.pop %v1658
    %v1779 = vmul.f32 1.0, %v1778
    %v1780 = vrcp.pop %v1659
    %v1781 = vmul.f32 1.0, %v1780
    %v1782 = vrcp.pop %v1660
    %v1783 = vmul.f32 1.0, %v1782
    %v1784 = vrcp.pop %v1661
    %v1785 = vmul.f32 1.0, %v1784
    %v1786 = vrcp.pop %v1662
    %v1787 = vmul.f32 1.0, %v1786
    %v1788 = vrcp.pop %v1663
    %v1789 = vmul.f32 1.0, %v1788
    %v1790 = vrcp.pop %v1664
    %v1791 = vmul.f32 1.0, %v1790
    %v1792 = vrcp.pop %v1665
    %v1793 = vmul.f32 1.0, %v1792
    %v1794 = vmul.f32 %v1346, %v1667
    %v1795 = vmul.f32 %v1347, %v1669
    %v1796 = vmul.f32 %v1348, %v1671
    %v1797 = vmul.f32 %v1349, %v1673
    %v1798 = vmul.f32 %v1350, %v1675
    %v1799 = vmul.f32 %v1351, %v1677
    %v1800 = vmul.f32 %v1352, %v1679
    %v1801 = vmul.f32 %v1353, %v1681
    %v1802 = vmul.f32 %v1354, %v1683
    %v1803 = vmul.f32 %v1355, %v1685
    %v1804 = vmul.f32 %v1356, %v1687
    %v1805 = vmul.f32 %v1357, %v1689
    %v1806 = vmul.f32 %v1358, %v1691
    %v1807 = vmul.f32 %v1359, %v1693
    %v1808 = vmul.f32 %v1360, %v1695
    %v1809 = vmul.f32 %v1361, %v1697
    %v1810 = vmul.f32 %v1362, %v1699
    %v1811 = vmul.f32 %v1363, %v1701
    %v1812 = vmul.f32 %v1364, %v1703
    %v1813 = vmul.f32 %v1365, %v1705
    %v1814 = vmul.f32 %v1366, %v1707
    %v1815 = vmul.f32 %v1367, %v1709
    %v1816 = vmul.f32 %v1368, %v1711
    %v1817 = vmul.f32 %v1369, %v1713
    %v1818 = vmul.f32 %v1370, %v1715
    %v1819 = vmul.f32 %v1371, %v1717
    %v1820 = vmul.f32 %v1372, %v1719
    %v1821 = vmul.f32 %v1373, %v1721
    %v1822 = vmul.f32 %v1374, %v1723
    %v1823 = vmul.f32 %v1375, %v1725
    %v1824 = vmul.f32 %v1376, %v1727
    %v1825 = vmul.f32 %v1377, %v1729
    %v1826 = vmul.f32 %v1378, %v1731
    %v1827 = vmul.f32 %v1379, %v1733
    %v1828 = vmul.f32 %v1380, %v1735
    %v1829 = vmul.f32 %v1381, %v1737
    %v1830 = vmul.f32 %v1382, %v1739
    %v1831 = vmul.f32 %v1383, %v1741
    %v1832 = vmul.f32 %v1384, %v1743
    %v1833 = vmul.f32 %v1385, %v1745
    %v1834 = vmul.f32 %v1386, %v1747
    %v1835 = vmul.f32 %v1387, %v1749
    %v1836 = vmul.f32 %v1388, %v1751
    %v1837 = vmul.f32 %v1389, %v1753
    %v1838 = vmul.f32 %v1390, %v1755
    %v1839 = vmul.f32 %v1391, %v1757
    %v1840 = vmul.f32 %v1392, %v1759
    %v1841 = vmul.f32 %v1393, %v1761
    %v1842 = vmul.f32 %v1394, %v1763
    %v1843 = vmul.f32 %v1395, %v1765
    %v1844 = vmul.f32 %v1396, %v1767
    %v1845 = vmul.f32 %v1397, %v1769
    %v1846 = vmul.f32 %v1398, %v1771
    %v1847 = vmul.f32 %v1399, %v1773
    %v1848 = vmul.f32 %v1400, %v1775
    %v1849 = vmul.f32 %v1401, %v1777
    %v1850 = vmul.f32 %v1402, %v1779
    %v1851 = vmul.f32 %v1403, %v1781
    %v1852 = vmul.f32 %v1404, %v1783
    %v1853 = vmul.f32 %v1405, %v1785
    %v1854 = vmul.f32 %v1406, %v1787
    %v1855 = vmul.f32 %v1407, %v1789
    %v1856 = vmul.f32 %v1408, %v1791
    %v1857 = vmul.f32 %v1409, %v1793
    %vm1858 = vcmask 523264
    %1859 = vst.msk [vmem:[#allocation11] sm:$0xff] %vm1858, %v1794
    %1860 = vst.msk [vmem:[#allocation11 + $0x8] sm:$0xff] %vm1858, %v1795
    %1861 = vst.msk [vmem:[#allocation11 + $0x10] sm:$0xff] %vm1858, %v1796
    %1862 = vst.msk [vmem:[#allocation11 + $0x18] sm:$0xff] %vm1858, %v1797
    %1863 = vst.msk [vmem:[#allocation11 + $0x20] sm:$0xff] %vm1858, %v1798
    %1864 = vst.msk [vmem:[#allocation11 + $0x28] sm:$0xff] %vm1858, %v1799
    %1865 = vst.msk [vmem:[#allocation11 + $0x30] sm:$0xff] %vm1858, %v1800
    %1866 = vst.msk [vmem:[#allocation11 + $0x38] sm:$0xff] %vm1858, %v1801
    %1867 = vst.msk [vmem:[#allocation11 + $0x40] sm:$0xff] %vm1858, %v1802
    %1868 = vst.msk [vmem:[#allocation11 + $0x48] sm:$0xff] %vm1858, %v1803
    %1869 = vst.msk [vmem:[#allocation11 + $0x50] sm:$0xff] %vm1858, %v1804
    %1870 = vst.msk [vmem:[#allocation11 + $0x58] sm:$0xff] %vm1858, %v1805
    %1871 = vst.msk [vmem:[#allocation11 + $0x60] sm:$0xff] %vm1858, %v1806
    %1872 = vst.msk [vmem:[#allocation11 + $0x68] sm:$0xff] %vm1858, %v1807
    %1873 = vst.msk [vmem:[#allocation11 + $0x70] sm:$0xff] %vm1858, %v1808
    %1874 = vst.msk [vmem:[#allocation11 + $0x78] sm:$0xff] %vm1858, %v1809
    %1875 = vst.msk [vmem:[#allocation11 + $0x80] sm:$0xff] %vm1858, %v1810
    %1876 = vst.msk [vmem:[#allocation11 + $0x88] sm:$0xff] %vm1858, %v1811
    %1877 = vst.msk [vmem:[#allocation11 + $0x90] sm:$0xff] %vm1858, %v1812
    %1878 = vst.msk [vmem:[#allocation11 + $0x98] sm:$0xff] %vm1858, %v1813
    %1879 = vst.msk [vmem:[#allocation11 + $0xa0] sm:$0xff] %vm1858, %v1814
    %1880 = vst.msk [vmem:[#allocation11 + $0xa8] sm:$0xff] %vm1858, %v1815
    %1881 = vst.msk [vmem:[#allocation11 + $0xb0] sm:$0xff] %vm1858, %v1816
    %1882 = vst.msk [vmem:[#allocation11 + $0xb8] sm:$0xff] %vm1858, %v1817
    %1883 = vst.msk [vmem:[#allocation11 + $0xc0] sm:$0xff] %vm1858, %v1818
    %1884 = vst.msk [vmem:[#allocation11 + $0xc8] sm:$0xff] %vm1858, %v1819
    %1885 = vst.msk [vmem:[#allocation11 + $0xd0] sm:$0xff] %vm1858, %v1820
    %1886 = vst.msk [vmem:[#allocation11 + $0xd8] sm:$0xff] %vm1858, %v1821
    %1887 = vst.msk [vmem:[#allocation11 + $0xe0] sm:$0xff] %vm1858, %v1822
    %1888 = vst.msk [vmem:[#allocation11 + $0xe8] sm:$0xff] %vm1858, %v1823
    %1889 = vst.msk [vmem:[#allocation11 + $0xf0] sm:$0xff] %vm1858, %v1824
    %1890 = vst.msk [vmem:[#allocation11 + $0xf8] sm:$0xff] %vm1858, %v1825
    %1891 = vst.msk [vmem:[#allocation11 + $0x100] sm:$0xff] %vm1858, %v1826
    %1892 = vst.msk [vmem:[#allocation11 + $0x108] sm:$0xff] %vm1858, %v1827
    %1893 = vst.msk [vmem:[#allocation11 + $0x110] sm:$0xff] %vm1858, %v1828
    %1894 = vst.msk [vmem:[#allocation11 + $0x118] sm:$0xff] %vm1858, %v1829
    %1895 = vst.msk [vmem:[#allocation11 + $0x120] sm:$0xff] %vm1858, %v1830
    %1896 = vst.msk [vmem:[#allocation11 + $0x128] sm:$0xff] %vm1858, %v1831
    %1897 = vst.msk [vmem:[#allocation11 + $0x130] sm:$0xff] %vm1858, %v1832
    %1898 = vst.msk [vmem:[#allocation11 + $0x138] sm:$0xff] %vm1858, %v1833
    %1899 = vst.msk [vmem:[#allocation11 + $0x140] sm:$0xff] %vm1858, %v1834
    %1900 = vst.msk [vmem:[#allocation11 + $0x148] sm:$0xff] %vm1858, %v1835
    %1901 = vst.msk [vmem:[#allocation11 + $0x150] sm:$0xff] %vm1858, %v1836
    %1902 = vst.msk [vmem:[#allocation11 + $0x158] sm:$0xff] %vm1858, %v1837
    %1903 = vst.msk [vmem:[#allocation11 + $0x160] sm:$0xff] %vm1858, %v1838
    %1904 = vst.msk [vmem:[#allocation11 + $0x168] sm:$0xff] %vm1858, %v1839
    %1905 = vst.msk [vmem:[#allocation11 + $0x170] sm:$0xff] %vm1858, %v1840
    %1906 = vst.msk [vmem:[#allocation11 + $0x178] sm:$0xff] %vm1858, %v1841
    %1907 = vst.msk [vmem:[#allocation11 + $0x180] sm:$0xff] %vm1858, %v1842
    %1908 = vst.msk [vmem:[#allocation11 + $0x188] sm:$0xff] %vm1858, %v1843
    %1909 = vst.msk [vmem:[#allocation11 + $0x190] sm:$0xff] %vm1858, %v1844
    %1910 = vst.msk [vmem:[#allocation11 + $0x198] sm:$0xff] %vm1858, %v1845
    %1911 = vst.msk [vmem:[#allocation11 + $0x1a0] sm:$0xff] %vm1858, %v1846
    %1912 = vst.msk [vmem:[#allocation11 + $0x1a8] sm:$0xff] %vm1858, %v1847
    %1913 = vst.msk [vmem:[#allocation11 + $0x1b0] sm:$0xff] %vm1858, %v1848
    %1914 = vst.msk [vmem:[#allocation11 + $0x1b8] sm:$0xff] %vm1858, %v1849
    %1915 = vst.msk [vmem:[#allocation11 + $0x1c0] sm:$0xff] %vm1858, %v1850
    %1916 = vst.msk [vmem:[#allocation11 + $0x1c8] sm:$0xff] %vm1858, %v1851
    %1917 = vst.msk [vmem:[#allocation11 + $0x1d0] sm:$0xff] %vm1858, %v1852
    %1918 = vst.msk [vmem:[#allocation11 + $0x1d8] sm:$0xff] %vm1858, %v1853
    %1919 = vst.msk [vmem:[#allocation11 + $0x1e0] sm:$0xff] %vm1858, %v1854
    %1920 = vst.msk [vmem:[#allocation11 + $0x1e8] sm:$0xff] %vm1858, %v1855
    %1921 = vst.msk [vmem:[#allocation11 + $0x1f0] sm:$0xff] %vm1858, %v1856
    %1922 = vst.msk [vmem:[#allocation11 + $0x1f8] sm:$0xff] %vm1858, %v1857
    // Predicated region
    $region42: #{csp_layer_fwd.11} parent=1 // pred_check
      _
    $region43: #{csp_layer_fwd.11} parent=1 // pred_check_branch
      %1924 = sbr.rel (0) target = $region45
    $region44: #{csp_layer_fwd.11} parent=1 // pred_region
      %s1926 = ssub.s32 8192, 8192
      %1927 = vsyncadd [#allocation4], %s1926
      %s1928 = sshll.u32 [#allocation11], 4
      %s1929 = int_to_ptr.vmem [resolvable:$true] %s1928
      %1934 = dma.vmem_to_hbm [thread:$0]  %s1929, 8192, %s5, [#allocation4], 128, 128, 8
    $region45: #{csp_layer_fwd.11} parent=1 // pred_fallthru
      _
    // Predicated region
    $region46: #{csp_layer_fwd.11} parent=1 // pred_check
      _
    $region47: #{csp_layer_fwd.11} parent=1 // pred_check_branch
      %1936 = sbr.rel (0) target = $region49
    $region48: #{csp_layer_fwd.11} parent=1 // pred_region
      %1937 = dma.done [#allocation4], 8192
    $region49: #{csp_layer_fwd.11} parent=1 // pred_fallthru
      _
    %1938 = vsyncpa [#allocation3], 1
    %1939 = vsyncpa [#allocation6], 1
    %1940 = vsyncpa [#allocation9], 1
    %1941 = vsyncpa [#allocation4], 1

</llo_original>
